<compile_context>
chip_gen: v7x
topology: tpu7x:2x2x1
jax: 0.10.0
libtpu: 0.0.40
codegen_flags: <defaults>
</compile_context>

<pallas_src>
import functools

import numpy as np
import jax
import jax.numpy as jnp
from jax import lax
from jax.experimental import pallas as pl
from jax.experimental.pallas import tpu as pltpu


# --------------------------------------------------------------------------------------
# Pallas kernel: 3x3 conv, stride 1, pad 1 (zero border built in-kernel), im2col + 1 matmul,
# optional LeakyReLU(0.1)
# --------------------------------------------------------------------------------------
def _conv3x3_kernel(x_ref, w_ref, b_ref, o_ref, *, H, W, Cin, Cout, apply_act):
    # x_ref: (1, H, W, Cin), w_ref: (9*Cin, Cout), b_ref: (1, Cout), o_ref: (1, H, W, Cout)
    x = x_ref[0]
    zc = jnp.zeros((H, 1, Cin), jnp.float32)
    xp = jnp.concatenate([zc, x, zc], axis=1)          # (H, W+2, Cin)
    zr = jnp.zeros((1, W + 2, Cin), jnp.float32)
    xp = jnp.concatenate([zr, xp, zr], axis=0)         # (H+2, W+2, Cin)

    pieces = []
    for kh in range(3):
        for kw in range(3):
            pieces.append(xp[kh:kh + H, kw:kw + W, :].reshape(H * W, Cin))
    slab = jnp.concatenate(pieces, axis=1)             # (H*W, 9*Cin)  im2col

    acc = jnp.dot(slab, w_ref[...],
                  preferred_element_type=jnp.float32,
                  precision=lax.Precision.HIGHEST) + b_ref[0]
    if apply_act:
        acc = jnp.where(acc >= 0.0, acc, 0.1 * acc)    # LeakyReLU(0.1)
    o_ref[0] = acc.reshape(H, W, Cout)


def conv3x3(x_nhwc, w, b, *, apply_act):
    N, H, W, Cin = x_nhwc.shape
    Cout = w.shape[-1]
    w9 = w.reshape(9 * Cin, Cout)                      # (kh*3+kw)*Cin + cin  ordering
    kernel = functools.partial(_conv3x3_kernel, H=H, W=W, Cin=Cin, Cout=Cout,
                               apply_act=apply_act)
    return pl.pallas_call(
        kernel,
        out_shape=jax.ShapeDtypeStruct((N, H, W, Cout), jnp.float32),
        grid_spec=pltpu.PrefetchScalarGridSpec(
            num_scalar_prefetch=0,
            grid=(N,),
            in_specs=[
                pl.BlockSpec((1, H, W, Cin), lambda n: (n, 0, 0, 0)),
                pl.BlockSpec((9 * Cin, Cout), lambda n: (0, 0)),
                pl.BlockSpec((1, Cout), lambda n: (0, 0)),
            ],
            out_specs=pl.BlockSpec((1, H, W, Cout), lambda n: (n, 0, 0, 0)),
        ),
        compiler_params=pltpu.CompilerParams(dimension_semantics=("parallel",)),
    )(x_nhwc, w9, b.reshape(1, Cout))


# --------------------------------------------------------------------------------------
# Pallas kernel: modulated deformable conv 3x3 (pad=1, stride=1), with fused
# offset = M*tanh(.) + flow and mask = sigmoid(.), row-tiled over the output.
# Gather is a one-hot bilinear matrix applied on the MXU in bf16; the 9*G modulated
# samples are stacked into one im2col slab and contracted with one deep matmul.
# --------------------------------------------------------------------------------------
def _deform_kernel(x_ref, y_ref, flow_ref, w_ref, b_ref, o_ref, *,
                   H, W, TH, G, Cin, Cout, max_residue_magnitude):
    # x_ref:    (1, H, W, Cin)   bf16, full frame (sampling targets span the frame)
    # y_ref:    (1, TH, W, 27G)  f32 raw conv_offset output for this row tile
    # flow_ref: (1, TH, W, 2)    f32 (flow_x, flow_y)
    # w_ref:    (9*Cin, Cout)    bf16 DCN weight
    # b_ref:    (1, Cout)        f32
    # o_ref:    (1, TH, W, Cout) f32
    t = pl.program_id(1)
    Cg = Cin // G
    P = H * W
    TP = TH * W

    x_flat = x_ref[0].reshape(P, Cin)                              # bf16
    xg = [x_flat[:, g * Cg:(g + 1) * Cg] for g in range(G)]        # hoisted group slices
    y_flat = y_ref[0].reshape(TP, 27 * G)
    flow = flow_ref[0].reshape(TP, 2)

    off = max_residue_magnitude * jnp.tanh(y_flat[:, :18 * G])     # (TP, 18G) [g, k, (dy,dx)]
    msk = jax.nn.sigmoid(y_flat[:, 18 * G:])                       # (TP, 9G)
    fy = flow[:, 1:2]   # flow.flip(1): dy gets flow channel 1
    fx = flow[:, 0:1]   #               dx gets flow channel 0

    # Global output-pixel coordinates of this row tile.
    r0 = (t * TH).astype(jnp.float32)
    row = r0 + lax.broadcasted_iota(jnp.float32, (TH, W), 0).reshape(TP, 1)
    col = lax.broadcasted_iota(jnp.float32, (TH, W), 1).reshape(TP, 1)
    # Flat source index per lane of the whole frame (built once).
    lane = lax.broadcasted_iota(jnp.int32, (1, P), 1)

    pieces = []
    for k in range(9):
        kh, kw = k // 3, k % 3
        for g in range(G):
            dy = off[:, g * 18 + 2 * k: g * 18 + 2 * k + 1] + fy   # (TP, 1)
            dx = off[:, g * 18 + 2 * k + 1: g * 18 + 2 * k + 2] + fx
            m = msk[:, g * 9 + k: g * 9 + k + 1]                   # modulation, folded into S

            py = row - 1.0 + float(kh) + dy
            px = col - 1.0 + float(kw) + dx
            y0f = jnp.floor(py)
            x0f = jnp.floor(px)
            ly = py - y0f
            lx = px - x0f
            iy0 = y0f.astype(jnp.int32)
            ix0 = x0f.astype(jnp.int32)

            # Sparse bilinear interpolation matrix S (TP, P): per-corner one-hot weighted by
            # bilinear weight * validity * modulation.  Out-of-bound corners get weight 0,
            # which reproduces mmcv's zero-padding bilinear semantics exactly.
            corners = (
                (iy0, ix0, (1.0 - ly) * (1.0 - lx)),
                (iy0, ix0 + 1, (1.0 - ly) * lx),
                (iy0 + 1, ix0, ly * (1.0 - lx)),
                (iy0 + 1, ix0 + 1, ly * lx),
            )
            s = None
            for iy, ix, wgt in corners:
                cv = ((iy >= 0) & (iy <= H - 1) & (ix >= 0) & (ix <= W - 1))
                wc = wgt * m * cv.astype(jnp.float32)              # (TP, 1)
                lin = jnp.clip(iy, 0, H - 1) * W + jnp.clip(ix, 0, W - 1)
                term = jnp.where(lin == lane, wc, 0.0)             # (TP, P)
                s = term if s is None else s + term
            s_bf = s.astype(jnp.bfloat16)

            # Modulated sample for this (tap, group): (TP, Cg), accumulated in f32.
            pieces.append(jnp.dot(s_bf, xg[g], preferred_element_type=jnp.float32))

    # im2col slab over all taps/groups -> one deep matmul against the DCN weight.
    slab = jnp.concatenate(pieces, axis=1).astype(jnp.bfloat16)    # (TP, 9*Cin)
    acc = jnp.dot(slab, w_ref[...], preferred_element_type=jnp.float32) + b_ref[0]
    o_ref[0] = acc.reshape(TH, W, Cout)


def _pick_tile_h(H, W, max_rows=512):
    cands = [th for th in range(1, H + 1) if H % th == 0 and th * W <= max_rows]
    return max(cands) if cands else 1


def deform_align(x_nhwc, y_nhwc, flow_nhwc, w, b, *, deform_groups,
                 max_residue_magnitude, tile_h=None):
    N, H, W, Cin = x_nhwc.shape
    Cout = w.shape[-1]
    Cy = y_nhwc.shape[-1]
    if tile_h is None:
        tile_h = _pick_tile_h(H, W)
    assert H % tile_h == 0
    n_tiles = H // tile_h

    w9 = w.reshape(9 * Cin, Cout).astype(jnp.bfloat16)
    x_bf = x_nhwc.astype(jnp.bfloat16)

    kernel = functools.partial(_deform_kernel, H=H, W=W, TH=tile_h, G=deform_groups,
                               Cin=Cin, Cout=Cout,
                               max_residue_magnitude=float(max_residue_magnitude))
    return pl.pallas_call(
        kernel,
        out_shape=jax.ShapeDtypeStruct((N, H, W, Cout), jnp.float32),
        grid_spec=pltpu.PrefetchScalarGridSpec(
            num_scalar_prefetch=0,
            grid=(N, n_tiles),
            in_specs=[
                pl.BlockSpec((1, H, W, Cin), lambda n, t: (n, 0, 0, 0)),       # full frame
                pl.BlockSpec((1, tile_h, W, Cy), lambda n, t: (n, t, 0, 0)),
                pl.BlockSpec((1, tile_h, W, 2), lambda n, t: (n, t, 0, 0)),
                pl.BlockSpec((9 * Cin, Cout), lambda n, t: (0, 0)),
                pl.BlockSpec((1, Cout), lambda n, t: (0, 0)),
            ],
            out_specs=pl.BlockSpec((1, tile_h, W, Cout), lambda n, t: (n, t, 0, 0)),
        ),
        compiler_params=pltpu.CompilerParams(
            dimension_semantics=("parallel", "parallel"),
            vmem_limit_bytes=48 << 20),
    )(x_bf, y_nhwc, flow_nhwc, w9, b.reshape(1, Cout))


# --------------------------------------------------------------------------------------
# Module-level forward (glue: NCHW<->NHWC transposes, flow=None handling)
# --------------------------------------------------------------------------------------
def second_order_deformable_alignment(x_nchw, cond_nchw, flow_nchw, params,
                                      deform_groups, max_residue_magnitude, tile_h=None):
    x = jnp.transpose(x_nchw, (0, 2, 3, 1)).astype(jnp.float32)
    cond = jnp.transpose(cond_nchw, (0, 2, 3, 1)).astype(jnp.float32)
    if flow_nchw is None:
        flow = jnp.zeros(x.shape[:3] + (2,), jnp.float32)
    else:
        flow = jnp.transpose(flow_nchw, (0, 2, 3, 1)).astype(jnp.float32)

    h = cond
    n_layers = len(params["offset_w"])
    for i in range(n_layers):
        h = conv3x3(h, params["offset_w"][i], params["offset_b"][i],
                    apply_act=(i != n_layers - 1))

    out = deform_align(x, h, flow, params["dcn_w"], params["dcn_b"],
                       deform_groups=deform_groups,
                       max_residue_magnitude=max_residue_magnitude,
                       tile_h=tile_h)
    return jnp.transpose(out, (0, 3, 1, 2))   # back to NCHW


# --------------------------------------------------------------------------------------
# Deterministic parameter construction (shapes follow the PyTorch __init__).
# NOTE: the PyTorch _init_params zero-inits the last offset conv and the DCN bias, which
# would make offsets identically zero; we use small deterministic random values instead
# so that the deformable-sampling path is actually exercised.
# --------------------------------------------------------------------------------------
def init_params(key, x_in_channels, cond_in_channels, out_channels, deform_groups):
    cond_channels = [out_channels, out_channels, out_channels, 27 * deform_groups]
    keys = jax.random.split(key, 2 * len(cond_channels) + 2)
    offset_w, offset_b = [], []
    cin = cond_in_channels
    idx = 0
    for cout in cond_channels:
        bound = 1.0 / np.sqrt(cin * 9)
        offset_w.append(jax.random.uniform(keys[idx], (3, 3, cin, cout), jnp.float32,
                                           -bound, bound)); idx += 1
        offset_b.append(jax.random.uniform(keys[idx], (cout,), jnp.float32,
                                           -bound, bound)); idx += 1
        cin = cout
    stdv = 1.0 / np.sqrt(x_in_channels * 9)
    dcn_w = jax.random.uniform(keys[idx], (3, 3, x_in_channels, out_channels),
                               jnp.float32, -stdv, stdv); idx += 1
    dcn_b = jax.random.uniform(keys[idx], (out_channels,), jnp.float32, -stdv, stdv)
    return {"offset_w": offset_w, "offset_b": offset_b, "dcn_w": dcn_w, "dcn_b": dcn_b}


# --------------------------------------------------------------------------------------
# Pure-JAX reference (for correctness self-check)
# --------------------------------------------------------------------------------------
def _conv3x3_ref(x, w, b, apply_act):
    y = lax.conv_general_dilated(x, w, (1, 1), ((1, 1), (1, 1)),
                                 dimension_numbers=("NHWC", "HWIO", "NHWC"),
                                 precision=lax.Precision.HIGHEST) + b
    if apply_act:
        y = jnp.where(y >= 0.0, y, 0.1 * y)
    return y


def _deform_ref(x, y, flow, w, b, G, M):
    N, H, W, Cin = x.shape
    Cout = w.shape[-1]
    Cg = Cin // G
    P = H * W
    off = M * jnp.tanh(y[..., :18 * G])
    msk = jax.nn.sigmoid(y[..., 18 * G:])
    fy = flow[..., 1]
    fx = flow[..., 0]
    row = jnp.arange(H, dtype=jnp.float32)[None, :, None]
    col = jnp.arange(W, dtype=jnp.float32)[None, None, :]
    out = jnp.zeros((N, H, W, Cout), jnp.float32) + b
    for g in range(G):
        xg = x[..., g * Cg:(g + 1) * Cg].reshape(N, P, Cg)
        for k in range(9):
            kh, kw = k // 3, k % 3
            py = row - 1.0 + kh + off[..., g * 18 + 2 * k] + fy
            px = col - 1.0 + kw + off[..., g * 18 + 2 * k + 1] + fx
            valid = (py > -1.0) & (py < H) & (px > -1.0) & (px < W)
            y0 = jnp.floor(py); x0 = jnp.floor(px)
            ly = py - y0; lx = px - x0
            iy0 = y0.astype(jnp.int32); ix0 = x0.astype(jnp.int32)
            sampled = jnp.zeros((N, P, Cg), jnp.float32)
            for oy, ox, wgt in ((0, 0, (1 - ly) * (1 - lx)), (0, 1, (1 - ly) * lx),
                                (1, 0, ly * (1 - lx)), (1, 1, ly * lx)):
                iy = iy0 + oy; ix = ix0 + ox
                cv = valid & (iy >= 0) & (iy <= H - 1) & (ix >= 0) & (ix <= W - 1)
                lin = jnp.clip(iy, 0, H - 1) * W + jnp.clip(ix, 0, W - 1)
                v = jnp.take_along_axis(xg, lin.reshape(N, P, 1), axis=1)
                sampled += (wgt * cv).reshape(N, P, 1) * v
            sampled = sampled * msk[..., g * 9 + k].reshape(N, P, 1)
            out += jnp.einsum("npc,co->npo", sampled, w[kh, kw, g * Cg:(g + 1) * Cg, :],
                              precision=lax.Precision.HIGHEST).reshape(N, H, W, Cout)
    return out


if __name__ == "__main__":
    key = jax.random.PRNGKey(0)
    N, H, W = 2, 16, 16
    x_in_channels, cond_in_channels, out_channels = 8, 12, 8
    deform_groups, max_residue_magnitude = 2, 10

    k1, k2, k3, kp = jax.random.split(key, 4)
    x = jax.random.normal(k1, (N, x_in_channels, H, W), jnp.float32)
    cond = jax.random.normal(k2, (N, cond_in_channels, H, W), jnp.float32)
    flow = 2.0 * jax.random.normal(k3, (N, 2, H, W), jnp.float32)
    params = init_params(kp, x_in_channels, cond_in_channels, out_channels, deform_groups)

    # tile_h=8 -> two row tiles per frame, exercising the spatial-tiling path.
    out = second_order_deformable_alignment(x, cond, flow, params,
                                            deform_groups, max_residue_magnitude,
                                            tile_h=8)
    out = jax.block_until_ready(out)
    assert out.shape == (N, out_channels, H, W)
    assert np.all(np.isfinite(np.asarray(out)))

    # self-check against a pure-JAX f32 reference (kernel uses bf16 MXU for the
    # gather / tap matmuls, hence the relaxed tolerance).
    x_h = jnp.transpose(x, (0, 2, 3, 1))
    cond_h = jnp.transpose(cond, (0, 2, 3, 1))
    flow_h = jnp.transpose(flow, (0, 2, 3, 1))
    h = cond_h
    for i in range(4):
        h = _conv3x3_ref(h, params["offset_w"][i], params["offset_b"][i],
                         apply_act=(i != 3))
    ref = _deform_ref(x_h, h, flow_h, params["dcn_w"], params["dcn_b"],
                      deform_groups, float(max_residue_magnitude))
    ref = jnp.transpose(ref, (0, 3, 1, 2))
    err = float(np.max(np.abs(np.asarray(out) - np.asarray(ref))))
    assert np.allclose(np.asarray(out), np.asarray(ref), rtol=2e-2, atol=2e-2), err

    print("KERNEL_OK")
</pallas_src>

<mosaic_0001>
module attributes {stable_mosaic.version = 11 : i64} {
  func.func @_conv3x3_kernel(%arg0: i32, %arg1: memref<1x16x16x12xf32, #tpu.memory_space<vmem>>, %arg2: memref<108x8xf32, #tpu.memory_space<vmem>>, %arg3: memref<1x8xf32, #tpu.memory_space<vmem>>, %arg4: memref<1x16x16x8xf32, #tpu.memory_space<vmem>>) attributes {dimension_semantics = [#tpu.dimension_semantics<parallel>], iteration_bounds = array<i64: 2>, scalar_prefetch = 0 : i64, scratch_operands = 0 : i64, tpu.core_type = #tpu.core_type<tc>, window_params = [{transform_indices = @transform_0, window_bounds = array<i64: 1, 16, 16, 12>}, {pipeline_mode = #tpu.pipeline_mode<synchronous>, transform_indices = @transform_1, window_bounds = array<i64: 108, 8>}, {pipeline_mode = #tpu.pipeline_mode<synchronous>, transform_indices = @transform_2, window_bounds = array<i64: 1, 8>}, {transform_indices = @transform_3, window_bounds = array<i64: 1, 16, 16, 8>}]} {
    %c0 = arith.constant 0 : index
    %c0_0 = arith.constant 0 : index
    %c0_1 = arith.constant 0 : index
    %c0_2 = arith.constant 0 : index
    %0 = vector.load %arg1[%c0, %c0_0, %c0_1, %c0_2] : memref<1x16x16x12xf32, #tpu.memory_space<vmem>>, vector<1x16x16x12xf32>
    %1 = vector.shape_cast %0 : vector<1x16x16x12xf32> to vector<16x16x12xf32>
    %cst = arith.constant 0.000000e+00 : f32
    %2 = vector.broadcast %cst : f32 to vector<16x1x12xf32>
    %3 = tpu.concatenate %2, %1, %2 in 1 : vector<16x1x12xf32>, vector<16x16x12xf32>, vector<16x1x12xf32> -> vector<16x18x12xf32>
    %cst_3 = arith.constant 0.000000e+00 : f32
    %4 = vector.broadcast %cst_3 : f32 to vector<1x18x12xf32>
    %5 = tpu.concatenate %4, %3, %4 in 0 : vector<1x18x12xf32>, vector<16x18x12xf32>, vector<1x18x12xf32> -> vector<18x18x12xf32>
    %6 = vector.extract_strided_slice %5 {offsets = [0, 0, 0], sizes = [16, 16, 12], strides = [1, 1, 1]} : vector<18x18x12xf32> to vector<16x16x12xf32>
    %7 = vector.shape_cast %6 : vector<16x16x12xf32> to vector<256x12xf32>
    %8 = vector.extract_strided_slice %5 {offsets = [0, 1, 0], sizes = [16, 16, 12], strides = [1, 1, 1]} : vector<18x18x12xf32> to vector<16x16x12xf32>
    %9 = vector.shape_cast %8 : vector<16x16x12xf32> to vector<256x12xf32>
    %10 = vector.extract_strided_slice %5 {offsets = [0, 2, 0], sizes = [16, 16, 12], strides = [1, 1, 1]} : vector<18x18x12xf32> to vector<16x16x12xf32>
    %11 = vector.shape_cast %10 : vector<16x16x12xf32> to vector<256x12xf32>
    %12 = vector.extract_strided_slice %5 {offsets = [1, 0, 0], sizes = [16, 16, 12], strides = [1, 1, 1]} : vector<18x18x12xf32> to vector<16x16x12xf32>
    %13 = vector.shape_cast %12 : vector<16x16x12xf32> to vector<256x12xf32>
    %14 = vector.extract_strided_slice %5 {offsets = [1, 1, 0], sizes = [16, 16, 12], strides = [1, 1, 1]} : vector<18x18x12xf32> to vector<16x16x12xf32>
    %15 = vector.shape_cast %14 : vector<16x16x12xf32> to vector<256x12xf32>
    %16 = vector.extract_strided_slice %5 {offsets = [1, 2, 0], sizes = [16, 16, 12], strides = [1, 1, 1]} : vector<18x18x12xf32> to vector<16x16x12xf32>
    %17 = vector.shape_cast %16 : vector<16x16x12xf32> to vector<256x12xf32>
    %18 = vector.extract_strided_slice %5 {offsets = [2, 0, 0], sizes = [16, 16, 12], strides = [1, 1, 1]} : vector<18x18x12xf32> to vector<16x16x12xf32>
    %19 = vector.shape_cast %18 : vector<16x16x12xf32> to vector<256x12xf32>
    %20 = vector.extract_strided_slice %5 {offsets = [2, 1, 0], sizes = [16, 16, 12], strides = [1, 1, 1]} : vector<18x18x12xf32> to vector<16x16x12xf32>
    %21 = vector.shape_cast %20 : vector<16x16x12xf32> to vector<256x12xf32>
    %22 = vector.extract_strided_slice %5 {offsets = [2, 2, 0], sizes = [16, 16, 12], strides = [1, 1, 1]} : vector<18x18x12xf32> to vector<16x16x12xf32>
    %23 = vector.shape_cast %22 : vector<16x16x12xf32> to vector<256x12xf32>
    %24 = tpu.concatenate %7, %9, %11, %13, %15, %17, %19, %21, %23 in 1 : vector<256x12xf32>, vector<256x12xf32>, vector<256x12xf32>, vector<256x12xf32>, vector<256x12xf32>, vector<256x12xf32>, vector<256x12xf32>, vector<256x12xf32>, vector<256x12xf32> -> vector<256x108xf32>
    %c0_4 = arith.constant 0 : index
    %c0_5 = arith.constant 0 : index
    %25 = vector.load %arg2[%c0_4, %c0_5] : memref<108x8xf32, #tpu.memory_space<vmem>>, vector<108x8xf32>
    %cst_6 = arith.constant dense<0.000000e+00> : vector<256x8xf32>
    %26 = tpu.matmul %24, %25, %cst_6 {dimension_numbers = #tpu.dot_dimension_numbers<[1], [0], [0], [1], [0, 0, 1, 1], [], []>, precision = #tpu.contract_precision<fp32>} : vector<256x108xf32>, vector<108x8xf32>, vector<256x8xf32> -> vector<256x8xf32>
    %c0_7 = arith.constant 0 : index
    %c0_8 = arith.constant 0 : index
    %27 = vector.load %arg3[%c0_7, %c0_8] : memref<1x8xf32, #tpu.memory_space<vmem>>, vector<1x8xf32>
    %28 = vector.shape_cast %27 : vector<1x8xf32> to vector<8xf32>
    %29 = vector.shape_cast %28 : vector<8xf32> to vector<1x8xf32>
    %30 = vector.broadcast %29 : vector<1x8xf32> to vector<256x8xf32>
    %31 = arith.addf %26, %30 : vector<256x8xf32>
    %cst_9 = arith.constant 0.000000e+00 : f32
    %32 = vector.broadcast %cst_9 : f32 to vector<256x8xf32>
    %33 = arith.cmpf oge, %31, %32 : vector<256x8xf32>
    %cst_10 = arith.constant 1.000000e-01 : f32
    %34 = vector.broadcast %cst_10 : f32 to vector<256x8xf32>
    %35 = arith.mulf %34, %31 : vector<256x8xf32>
    %36 = arith.select %33, %31, %35 : vector<256x8xi1>, vector<256x8xf32>
    %37 = vector.shape_cast %36 : vector<256x8xf32> to vector<16x16x8xf32>
    %c0_11 = arith.constant 0 : index
    %c0_12 = arith.constant 0 : index
    %c0_13 = arith.constant 0 : index
    %c0_14 = arith.constant 0 : index
    %38 = vector.load %arg4[%c0_11, %c0_12, %c0_13, %c0_14] : memref<1x16x16x8xf32, #tpu.memory_space<vmem>>, vector<1x16x16x8xf32>
    %39 = vector.shape_cast %38 : vector<1x16x16x8xf32> to vector<16x16x8xf32>
    %40 = vector.shape_cast %37 : vector<16x16x8xf32> to vector<1x16x16x8xf32>
    tpu.vector_store %arg4[%c0_11, %c0_12, %c0_13, %c0_14], %40 {strides = array<i32>} : memref<1x16x16x8xf32, #tpu.memory_space<vmem>>, vector<1x16x16x8xf32>,
    return
  }
  func.func @transform_0(%arg0: i32) -> (i32, i32, i32, i32) {
    %c0_i32 = arith.constant 0 : i32
    %c0_i32_0 = arith.constant 0 : i32
    %c0_i32_1 = arith.constant 0 : i32
    %c0_i32_2 = arith.constant 0 : i32
    return %arg0, %c0_i32, %c0_i32_0, %c0_i32_1 : i32, i32, i32, i32
  }
  func.func @transform_1(%arg0: i32) -> (i32, i32) {
    %c0_i32 = arith.constant 0 : i32
    %c0_i32_0 = arith.constant 0 : i32
    %c0_i32_1 = arith.constant 0 : i32
    return %c0_i32, %c0_i32_0 : i32, i32
  }
  func.func @transform_2(%arg0: i32) -> (i32, i32) {
    %c0_i32 = arith.constant 0 : i32
    %c0_i32_0 = arith.constant 0 : i32
    %c0_i32_1 = arith.constant 0 : i32
    return %c0_i32, %c0_i32_0 : i32, i32
  }
  func.func @transform_3(%arg0: i32) -> (i32, i32, i32, i32) {
    %c0_i32 = arith.constant 0 : i32
    %c0_i32_0 = arith.constant 0 : i32
    %c0_i32_1 = arith.constant 0 : i32
    %c0_i32_2 = arith.constant 0 : i32
    return %arg0, %c0_i32, %c0_i32_0, %c0_i32_1 : i32, i32, i32, i32
  }
}

</mosaic_0001>

<llo_original>
// kernel: tpu_custom_call.1
$region0: #{tpu_custom_call.1}
  #allocation0 [shape = 'u32[]', space=smem, size = 0x4, offset = 0x4, fixed_abs, tag = 'smem constant byte address 0x4 - core index']
  #allocation1 [shape = 'u32[144,128]{1,0:T(1,128)}', space=vmem, size = 0x12000, scoped, tag = 'internal scratch']
  %s0 = inlined_call_operand.vmem [shape: f32[2,16,16,12], index: 0, kind: input, shape index: {}]
  %s1 = inlined_call_operand.vmem [shape: f32[108,8], index: 1, kind: input, shape index: {}]
  %s2 = inlined_call_operand.vmem [shape: f32[1,8], index: 2, kind: input, shape index: {}]
  %s3 = inlined_call_operand.vmem [shape: f32[2,16,16,8], index: 3, kind: output, shape index: {}]
  %s4 = sld [smem:[#allocation0]]
  $region45: #{tpu_custom_call.1} parent=0
    _
  %s6 = ssub.s32 1, %s4
  %s7 = scalar_select 0, %s6, %s4
  loop: start=0, step=1, limit=4
  $region2: #{tpu_custom_call.1} parent=0 // loop_pre_header
    _
  $region3: #{tpu_custom_call.1} parent=0 // loop_header
    %s9 = sphi 0, %s13
    %p10 = scmp.ge.s32.totalorder %s9, 4
    %s19 = sphi 0, %s21
    %s22 = sphi 0, %s19
    %s23 = sphi 0, %s22
    %s39 = sphi 0, %s23
    %s43 = sphi 0, %s43
    %s45 = sphi 0, %s43
    %s46 = sphi 0, %s45
    %s60 = sphi 0, %s46
    %s64 = sphi 0, %s64
    %s66 = sphi 0, %s64
    %s67 = sphi 0, %s66
    %s81 = sphi 0, %s67
    %s87 = sphi 0, %s89
    %s90 = sphi 0, %s87
    %s91 = sphi 0, %s90
    %s107 = sphi 0, %s91
  $region4: #{tpu_custom_call.1} parent=0 // loop_header_branch
    %12 = sbr.rel (%p10) target = $region8
  $region5: #{tpu_custom_call.1} parent=0 // loop_body
    %s14 = ssub.s32 %s9, 1
    %s15 = ssub.s32 %s9, 2
    %s16 = sadd.s32 %s9, 1
    %s17 = ssub.s32 %s9, %s16
    %p18 = scmp.eq.s32.totalorder %s17, 0
    %s20 = sadd.s32 %s19, 1
    %s21 = scalar_select %p18, %s19, %s20
    %p24 = pneg %p18
    %p25 = scmp.eq.s32.totalorder %s9, 1
    %p26 = por %p24, %p25
    %p27 = scmp.ne.s32.totalorder %s19, %s22
    %p28 = scmp.eq.s32.totalorder %s9, 0
    %p29 = por %p27, %p28
    %p30 = scmp.ne.s32.totalorder %s19, %s22
    %p31 = scmp.eq.s32.totalorder %s14, 1
    %p32 = por %p30, %p31
    %p33 = scmp.ne.s32.totalorder %s22, %s23
    %p34 = scmp.eq.s32.totalorder %s14, 0
    %p35 = por %p33, %p34
    %p36 = scmp.ne.s32.totalorder %s22, %s23
    %p37 = scmp.eq.s32.totalorder %s15, 1
    %p38 = por %p36, %p37
    %p40 = scmp.ne.s32.totalorder %s23, %s39
    %p41 = scmp.eq.s32.totalorder %s15, 0
    %p42 = por %p40, %p41
    %s44 = sadd.s32 %s43, 1
    %p47 = scmp.eq.s32.totalorder %s9, 1
    %p48 = scmp.ne.s32.totalorder %s43, %s45
    %p49 = scmp.eq.s32.totalorder %s9, 0
    %p50 = por %p48, %p49
    %p51 = scmp.ne.s32.totalorder %s43, %s45
    %p52 = scmp.eq.s32.totalorder %s14, 1
    %p53 = por %p51, %p52
    %p54 = scmp.ne.s32.totalorder %s45, %s46
    %p55 = scmp.eq.s32.totalorder %s14, 0
    %p56 = por %p54, %p55
    %p57 = scmp.ne.s32.totalorder %s45, %s46
    %p58 = scmp.eq.s32.totalorder %s15, 1
    %p59 = por %p57, %p58
    %p61 = scmp.ne.s32.totalorder %s46, %s60
    %p62 = scmp.eq.s32.totalorder %s15, 0
    %p63 = por %p61, %p62
    %s65 = sadd.s32 %s64, 1
    %p68 = scmp.eq.s32.totalorder %s9, 1
    %p69 = scmp.ne.s32.totalorder %s64, %s66
    %p70 = scmp.eq.s32.totalorder %s9, 0
    %p71 = por %p69, %p70
    %p72 = scmp.ne.s32.totalorder %s64, %s66
    %p73 = scmp.eq.s32.totalorder %s14, 1
    %p74 = por %p72, %p73
    %p75 = scmp.ne.s32.totalorder %s66, %s67
    %p76 = scmp.eq.s32.totalorder %s14, 0
    %p77 = por %p75, %p76
    %p78 = scmp.ne.s32.totalorder %s66, %s67
    %p79 = scmp.eq.s32.totalorder %s15, 1
    %p80 = por %p78, %p79
    %p82 = scmp.ne.s32.totalorder %s67, %s81
    %p83 = scmp.eq.s32.totalorder %s15, 0
    %p84 = por %p82, %p83
    %s85 = ssub.s32 %s9, %s16
    %p86 = scmp.eq.s32.totalorder %s85, 0
    %s88 = sadd.s32 %s87, 1
    %s89 = scalar_select %p86, %s87, %s88
    %p92 = pneg %p86
    %p93 = scmp.eq.s32.totalorder %s9, 1
    %p94 = por %p92, %p93
    %p95 = scmp.ne.s32.totalorder %s87, %s90
    %p96 = scmp.eq.s32.totalorder %s9, 0
    %p97 = por %p95, %p96
    %p98 = scmp.ne.s32.totalorder %s87, %s90
    %p99 = scmp.eq.s32.totalorder %s14, 1
    %p100 = por %p98, %p99
    %p101 = scmp.ne.s32.totalorder %s90, %s91
    %p102 = scmp.eq.s32.totalorder %s14, 0
    %p103 = por %p101, %p102
    %p104 = scmp.ne.s32.totalorder %s90, %s91
    %p105 = scmp.eq.s32.totalorder %s15, 1
    %p106 = por %p104, %p105
    %p108 = scmp.ne.s32.totalorder %s91, %s107
    %p109 = scmp.eq.s32.totalorder %s15, 0
    %p110 = por %p108, %p109
    %p111 = scmp.le.s32.totalorder 1, %s9
    %p112 = scmp.lt.s32.totalorder %s9, 3
    %p113 = pnand %p111, %p112
    %p114 = pneg %p113
    // Predicated region
    $region9: #{tpu_custom_call.1} parent=5 // pred_check
      _
    $region10: #{tpu_custom_call.1} parent=5 // pred_check_branch
      %116 = sbr.rel (%p113) target = $region12
    $region11: #{tpu_custom_call.1} parent=5 // pred_region
      %s117 = ssub.s32 %s9, 1
      // Predicated region
      $region13: #{tpu_custom_call.1} parent=11 // pred_check
        %p118 = pneg %p56
      $region14: #{tpu_custom_call.1} parent=11 // pred_check_branch
        %120 = sbr.rel (%p118) target = $region16
      $region15: #{tpu_custom_call.1} parent=11 // pred_region
        _
      $region16: #{tpu_custom_call.1} parent=11 // pred_fallthru
        _
      // Predicated region
      $region17: #{tpu_custom_call.1} parent=11 // pred_check
        %p121 = pneg %p77
      $region18: #{tpu_custom_call.1} parent=11 // pred_check_branch
        %123 = sbr.rel (%p121) target = $region20
      $region19: #{tpu_custom_call.1} parent=11 // pred_region
        _
      $region20: #{tpu_custom_call.1} parent=11 // pred_fallthru
        _
    $region12: #{tpu_custom_call.1} parent=5 // pred_fallthru
      _
    %p124 = scmp.lt.s32.totalorder %s9, 2
    // Predicated region
    $region21: #{tpu_custom_call.1} parent=5 // pred_check
      %p125 = pneg %p124
    $region22: #{tpu_custom_call.1} parent=5 // pred_check_branch
      %127 = sbr.rel (%p125) target = $region24
    $region23: #{tpu_custom_call.1} parent=5 // pred_region
      // Predicated region
      $region25: #{tpu_custom_call.1} parent=23 // pred_check
        %p128 = pneg %p29
      $region26: #{tpu_custom_call.1} parent=23 // pred_check_branch
        %130 = sbr.rel (%p128) target = $region28
      $region27: #{tpu_custom_call.1} parent=23 // pred_region
        %p131 = scmp.lt.s32.totalorder %s9, 1
        %s132 = scalar_select %p131, %s9, 1
        %s133 = smul.addr %s132, 32
        %s134 = smul.addr %s133, 8
        %s135 = scalar_lea.vmem %s0, %s134
      $region28: #{tpu_custom_call.1} parent=23 // pred_fallthru
        _
    $region24: #{tpu_custom_call.1} parent=5 // pred_fallthru
      _
    %p136 = scmp.le.s32.totalorder 1, %s9
    %p137 = scmp.lt.s32.totalorder %s9, 3
    %p138 = pnand %p136, %p137
    %p139 = pneg %p138
    // Predicated region
    $region29: #{tpu_custom_call.1} parent=5 // pred_check
      _
    $region30: #{tpu_custom_call.1} parent=5 // pred_check_branch
      %141 = sbr.rel (%p138) target = $region32
    $region31: #{tpu_custom_call.1} parent=5 // pred_region
      %s142 = ssub.s32 %s9, 1
      %p143 = scmp.lt.s32.totalorder %s14, 1
      %s144 = scalar_select %p143, %s14, 1
      %s145 = smul.addr %s144, 32
      %s146 = smul.addr %s145, 8
      %s147 = scalar_lea.vmem %s0, %s146
      %p148 = pneg %p35
      %p149 = pneg %p32
      %p150 = pneg %p56
      %p151 = pneg %p53
      %p152 = pneg %p77
      %p153 = pneg %p74
      %p154 = pneg %p103
      %p155 = pneg %p100
      %p156 = scmp.lt.s32.totalorder %s14, 1
      %s157 = scalar_select %p156, %s14, 1
      %s158 = smul.addr %s157, 32
      %s159 = smul.addr %s158, 8
      %s160 = scalar_lea.vmem %s3, %s159
      %p161 = scmp.lt.s32.totalorder %s14, 1
      %s162 = scalar_select %p161, %s14, 1
      %s163 = smul.addr %s162, 32
      %s164 = smul.addr %s163, 8
      %s165 = scalar_lea.vmem %s0, %s164
      %p166 = scmp.lt.s32.totalorder %s14, 1
      %s167 = scalar_select %p166, %s14, 1
      %s168 = smul.addr %s167, 32
      %s169 = smul.addr %s168, 8
      %s170 = scalar_lea.vmem %s3, %s169
      %v171 = vld [vmem:[%s165] sm:$0xff]
      %v172 = vld [vmem:[%s165 + $0x8] sm:$0xff]
      %v173 = vld [vmem:[%s165 + $0x10] sm:$0xff]
      %v174 = vld [vmem:[%s165 + $0x18] sm:$0xff]
      %v175 = vld [vmem:[%s165 + $0x20] sm:$0xff]
      %v176 = vld [vmem:[%s165 + $0x28] sm:$0xff]
      %v177 = vld [vmem:[%s165 + $0x30] sm:$0xff]
      %v178 = vld [vmem:[%s165 + $0x38] sm:$0xff]
      %v179 = vld [vmem:[%s165 + $0x40] sm:$0xff]
      %v180 = vld [vmem:[%s165 + $0x48] sm:$0xff]
      %v181 = vld [vmem:[%s165 + $0x50] sm:$0xff]
      %v182 = vld [vmem:[%s165 + $0x58] sm:$0xff]
      %v183 = vld [vmem:[%s165 + $0x60] sm:$0xff]
      %v184 = vld [vmem:[%s165 + $0x68] sm:$0xff]
      %v185 = vld [vmem:[%s165 + $0x70] sm:$0xff]
      %v186 = vld [vmem:[%s165 + $0x78] sm:$0xff]
      %v187 = vld [vmem:[%s165 + $0x80] sm:$0xff]
      %v188 = vld [vmem:[%s165 + $0x88] sm:$0xff]
      %v189 = vld [vmem:[%s165 + $0x90] sm:$0xff]
      %v190 = vld [vmem:[%s165 + $0x98] sm:$0xff]
      %v191 = vld [vmem:[%s165 + $0xa0] sm:$0xff]
      %v192 = vld [vmem:[%s165 + $0xa8] sm:$0xff]
      %v193 = vld [vmem:[%s165 + $0xb0] sm:$0xff]
      %v194 = vld [vmem:[%s165 + $0xb8] sm:$0xff]
      %v195 = vld [vmem:[%s165 + $0xc0] sm:$0xff]
      %v196 = vld [vmem:[%s165 + $0xc8] sm:$0xff]
      %v197 = vld [vmem:[%s165 + $0xd0] sm:$0xff]
      %v198 = vld [vmem:[%s165 + $0xd8] sm:$0xff]
      %v199 = vld [vmem:[%s165 + $0xe0] sm:$0xff]
      %v200 = vld [vmem:[%s165 + $0xe8] sm:$0xff]
      %v201 = vld [vmem:[%s165 + $0xf0] sm:$0xff]
      %v202 = vld [vmem:[%s165 + $0xf8] sm:$0xff]
      %vm235 = vcmask 1040384
      %v236 = vrot.slane %v171, 7
      %v237 = vrot.slane %v172, 7
      %v238 = vsel %vm235, %v236, %v237
      %v239 = vrot.slane %v173, 7
      %v240 = vrot.slane %v174, 7
      %v241 = vsel %vm235, %v239, %v240
      %v242 = vrot.slane %v175, 7
      %v243 = vrot.slane %v176, 7
      %v244 = vsel %vm235, %v242, %v243
      %v245 = vrot.slane %v177, 7
      %v246 = vrot.slane %v178, 7
      %v247 = vsel %vm235, %v245, %v246
      %v248 = vrot.slane %v179, 7
      %v249 = vrot.slane %v180, 7
      %v250 = vsel %vm235, %v248, %v249
      %v251 = vrot.slane %v181, 7
      %v252 = vrot.slane %v182, 7
      %v253 = vsel %vm235, %v251, %v252
      %v254 = vrot.slane %v183, 7
      %v255 = vrot.slane %v184, 7
      %v256 = vsel %vm235, %v254, %v255
      %v257 = vrot.slane %v185, 7
      %v258 = vrot.slane %v186, 7
      %v259 = vsel %vm235, %v257, %v258
      %v260 = vrot.slane %v187, 7
      %v261 = vrot.slane %v188, 7
      %v262 = vsel %vm235, %v260, %v261
      %v263 = vrot.slane %v189, 7
      %v264 = vrot.slane %v190, 7
      %v265 = vsel %vm235, %v263, %v264
      %v266 = vrot.slane %v191, 7
      %v267 = vrot.slane %v192, 7
      %v268 = vsel %vm235, %v266, %v267
      %v269 = vrot.slane %v193, 7
      %v270 = vrot.slane %v194, 7
      %v271 = vsel %vm235, %v269, %v270
      %v272 = vrot.slane %v195, 7
      %v273 = vrot.slane %v196, 7
      %v274 = vsel %vm235, %v272, %v273
      %v275 = vrot.slane %v197, 7
      %v276 = vrot.slane %v198, 7
      %v277 = vsel %vm235, %v275, %v276
      %v278 = vrot.slane %v199, 7
      %v279 = vrot.slane %v200, 7
      %v280 = vsel %vm235, %v278, %v279
      %v281 = vrot.slane %v201, 7
      %v282 = vrot.slane %v202, 7
      %v283 = vsel %vm235, %v281, %v282
      %v331 = vsel %vm235, 0.0, %v236
      %v332 = vsel %vm235, 0.0, %v239
      %v333 = vsel %vm235, 0.0, %v242
      %v334 = vsel %vm235, 0.0, %v245
      %v335 = vsel %vm235, 0.0, %v248
      %v336 = vsel %vm235, 0.0, %v251
      %v337 = vsel %vm235, 0.0, %v254
      %v338 = vsel %vm235, 0.0, %v257
      %v339 = vsel %vm235, 0.0, %v260
      %v340 = vsel %vm235, 0.0, %v263
      %v341 = vsel %vm235, 0.0, %v266
      %v342 = vsel %vm235, 0.0, %v269
      %v343 = vsel %vm235, 0.0, %v272
      %v344 = vsel %vm235, 0.0, %v275
      %v345 = vsel %vm235, 0.0, %v278
      %v346 = vsel %vm235, 0.0, %v281
      %v347 = vsel %vm235, %v237, 0.0
      %v348 = vsel %vm235, %v240, 0.0
      %v349 = vsel %vm235, %v243, 0.0
      %v350 = vsel %vm235, %v246, 0.0
      %v351 = vsel %vm235, %v249, 0.0
      %v352 = vsel %vm235, %v252, 0.0
      %v353 = vsel %vm235, %v255, 0.0
      %v354 = vsel %vm235, %v258, 0.0
      %v355 = vsel %vm235, %v261, 0.0
      %v356 = vsel %vm235, %v264, 0.0
      %v357 = vsel %vm235, %v267, 0.0
      %v358 = vsel %vm235, %v270, 0.0
      %v359 = vsel %vm235, %v273, 0.0
      %v360 = vsel %vm235, %v276, 0.0
      %v361 = vsel %vm235, %v279, 0.0
      %v362 = vsel %vm235, %v282, 0.0
      %vm394 = vcmask 1046528
      %v395 = vrot.slane 0.0, 1
      %v396 = vsel %vm394, %v395, %v395
      %v397 = vrot.slane %v331, 1
      %v398 = vrot.slane %v238, 1
      %v399 = vsel %vm394, %v397, %v398
      %v400 = vrot.slane %v347, 1
      %v401 = vsel %vm394, %v398, %v400
      %v402 = vrot.slane %v332, 1
      %v403 = vrot.slane %v241, 1
      %v404 = vsel %vm394, %v402, %v403
      %v405 = vrot.slane %v348, 1
      %v406 = vsel %vm394, %v403, %v405
      %v407 = vrot.slane %v333, 1
      %v408 = vrot.slane %v244, 1
      %v409 = vsel %vm394, %v407, %v408
      %v410 = vrot.slane %v349, 1
      %v411 = vsel %vm394, %v408, %v410
      %v412 = vrot.slane %v334, 1
      %v413 = vrot.slane %v247, 1
      %v414 = vsel %vm394, %v412, %v413
      %v415 = vrot.slane %v350, 1
      %v416 = vsel %vm394, %v413, %v415
      %v417 = vrot.slane %v335, 1
      %v418 = vrot.slane %v250, 1
      %v419 = vsel %vm394, %v417, %v418
      %v420 = vrot.slane %v351, 1
      %v421 = vsel %vm394, %v418, %v420
      %v422 = vrot.slane %v336, 1
      %v423 = vrot.slane %v253, 1
      %v424 = vsel %vm394, %v422, %v423
      %v425 = vrot.slane %v352, 1
      %v426 = vsel %vm394, %v423, %v425
      %v427 = vrot.slane %v337, 1
      %v428 = vrot.slane %v256, 1
      %v429 = vsel %vm394, %v427, %v428
      %v430 = vrot.slane %v353, 1
      %v431 = vsel %vm394, %v428, %v430
      %v432 = vrot.slane %v338, 1
      %v433 = vrot.slane %v259, 1
      %v434 = vsel %vm394, %v432, %v433
      %v435 = vrot.slane %v354, 1
      %v436 = vsel %vm394, %v433, %v435
      %v437 = vrot.slane %v339, 1
      %v438 = vrot.slane %v262, 1
      %v439 = vsel %vm394, %v437, %v438
      %v440 = vrot.slane %v355, 1
      %v441 = vsel %vm394, %v438, %v440
      %v442 = vrot.slane %v340, 1
      %v443 = vrot.slane %v265, 1
      %v444 = vsel %vm394, %v442, %v443
      %v445 = vrot.slane %v356, 1
      %v446 = vsel %vm394, %v443, %v445
      %v447 = vrot.slane %v341, 1
      %v448 = vrot.slane %v268, 1
      %v449 = vsel %vm394, %v447, %v448
      %v450 = vrot.slane %v357, 1
      %v451 = vsel %vm394, %v448, %v450
      %v452 = vrot.slane %v342, 1
      %v453 = vrot.slane %v271, 1
      %v454 = vsel %vm394, %v452, %v453
      %v455 = vrot.slane %v358, 1
      %v456 = vsel %vm394, %v453, %v455
      %v457 = vrot.slane %v343, 1
      %v458 = vrot.slane %v274, 1
      %v459 = vsel %vm394, %v457, %v458
      %v460 = vrot.slane %v359, 1
      %v461 = vsel %vm394, %v458, %v460
      %v462 = vrot.slane %v344, 1
      %v463 = vrot.slane %v277, 1
      %v464 = vsel %vm394, %v462, %v463
      %v465 = vrot.slane %v360, 1
      %v466 = vsel %vm394, %v463, %v465
      %v467 = vrot.slane %v345, 1
      %v468 = vrot.slane %v280, 1
      %v469 = vsel %vm394, %v467, %v468
      %v470 = vrot.slane %v361, 1
      %v471 = vsel %vm394, %v468, %v470
      %vm472 = vcmask 1045504
      %v473 = vrot.slane 0.0, 2
      %v474 = vsel %vm472, %v473, %v473
      %v475 = vrot.slane %v331, 2
      %v476 = vrot.slane %v238, 2
      %v477 = vsel %vm472, %v475, %v476
      %v478 = vrot.slane %v347, 2
      %v479 = vsel %vm472, %v476, %v478
      %v480 = vrot.slane %v332, 2
      %v481 = vrot.slane %v241, 2
      %v482 = vsel %vm472, %v480, %v481
      %v483 = vrot.slane %v348, 2
      %v484 = vsel %vm472, %v481, %v483
      %v485 = vrot.slane %v333, 2
      %v486 = vrot.slane %v244, 2
      %v487 = vsel %vm472, %v485, %v486
      %v488 = vrot.slane %v349, 2
      %v489 = vsel %vm472, %v486, %v488
      %v490 = vrot.slane %v334, 2
      %v491 = vrot.slane %v247, 2
      %v492 = vsel %vm472, %v490, %v491
      %v493 = vrot.slane %v350, 2
      %v494 = vsel %vm472, %v491, %v493
      %v495 = vrot.slane %v335, 2
      %v496 = vrot.slane %v250, 2
      %v497 = vsel %vm472, %v495, %v496
      %v498 = vrot.slane %v351, 2
      %v499 = vsel %vm472, %v496, %v498
      %v500 = vrot.slane %v336, 2
      %v501 = vrot.slane %v253, 2
      %v502 = vsel %vm472, %v500, %v501
      %v503 = vrot.slane %v352, 2
      %v504 = vsel %vm472, %v501, %v503
      %v505 = vrot.slane %v337, 2
      %v506 = vrot.slane %v256, 2
      %v507 = vsel %vm472, %v505, %v506
      %v508 = vrot.slane %v353, 2
      %v509 = vsel %vm472, %v506, %v508
      %v510 = vrot.slane %v338, 2
      %v511 = vrot.slane %v259, 2
      %v512 = vsel %vm472, %v510, %v511
      %v513 = vrot.slane %v354, 2
      %v514 = vsel %vm472, %v511, %v513
      %v515 = vrot.slane %v339, 2
      %v516 = vrot.slane %v262, 2
      %v517 = vsel %vm472, %v515, %v516
      %v518 = vrot.slane %v355, 2
      %v519 = vsel %vm472, %v516, %v518
      %v520 = vrot.slane %v340, 2
      %v521 = vrot.slane %v265, 2
      %v522 = vsel %vm472, %v520, %v521
      %v523 = vrot.slane %v356, 2
      %v524 = vsel %vm472, %v521, %v523
      %v525 = vrot.slane %v341, 2
      %v526 = vrot.slane %v268, 2
      %v527 = vsel %vm472, %v525, %v526
      %v528 = vrot.slane %v357, 2
      %v529 = vsel %vm472, %v526, %v528
      %v530 = vrot.slane %v342, 2
      %v531 = vrot.slane %v271, 2
      %v532 = vsel %vm472, %v530, %v531
      %v533 = vrot.slane %v358, 2
      %v534 = vsel %vm472, %v531, %v533
      %v535 = vrot.slane %v343, 2
      %v536 = vrot.slane %v274, 2
      %v537 = vsel %vm472, %v535, %v536
      %v538 = vrot.slane %v359, 2
      %v539 = vsel %vm472, %v536, %v538
      %v540 = vrot.slane %v344, 2
      %v541 = vrot.slane %v277, 2
      %v542 = vsel %vm472, %v540, %v541
      %v543 = vrot.slane %v360, 2
      %v544 = vsel %vm472, %v541, %v543
      %v545 = vrot.slane %v345, 2
      %v546 = vrot.slane %v280, 2
      %v547 = vsel %vm472, %v545, %v546
      %v548 = vrot.slane %v361, 2
      %v549 = vsel %vm472, %v546, %v548
      %v552 = vrot.slane %v346, 1
      %v553 = vrot.slane %v283, 1
      %v554 = vsel %vm394, %v552, %v553
      %v555 = vrot.slane %v362, 1
      %v556 = vsel %vm394, %v553, %v555
      %v557 = vrot.slane %v346, 2
      %v558 = vrot.slane %v283, 2
      %v559 = vsel %vm472, %v557, %v558
      %v560 = vrot.slane %v362, 2
      %v561 = vsel %vm472, %v558, %v560
      %562 = vrot.lane.b32.xlu0 %v396, 12
      %v563 = vpop.permute.xlu0 %562
      %564 = vrot.lane.b32.xlu0 %v399, 12
      %v565 = vpop.permute.xlu0 %564
      %566 = vrot.lane.b32.xlu0 %v401, 12
      %v567 = vpop.permute.xlu0 %566
      %568 = vrot.lane.b32.xlu0 %v404, 12
      %v569 = vpop.permute.xlu0 %568
      %570 = vrot.lane.b32.xlu0 %v406, 12
      %v571 = vpop.permute.xlu0 %570
      %572 = vrot.lane.b32.xlu0 %v409, 12
      %v573 = vpop.permute.xlu0 %572
      %574 = vrot.lane.b32.xlu0 %v411, 12
      %v575 = vpop.permute.xlu0 %574
      %576 = vrot.lane.b32.xlu0 %v414, 12
      %v577 = vpop.permute.xlu0 %576
      %578 = vrot.lane.b32.xlu0 %v416, 12
      %v579 = vpop.permute.xlu0 %578
      %580 = vrot.lane.b32.xlu0 %v419, 12
      %v581 = vpop.permute.xlu0 %580
      %582 = vrot.lane.b32.xlu0 %v421, 12
      %v583 = vpop.permute.xlu0 %582
      %584 = vrot.lane.b32.xlu0 %v424, 12
      %v585 = vpop.permute.xlu0 %584
      %586 = vrot.lane.b32.xlu0 %v426, 12
      %v587 = vpop.permute.xlu0 %586
      %588 = vrot.lane.b32.xlu0 %v429, 12
      %v589 = vpop.permute.xlu0 %588
      %590 = vrot.lane.b32.xlu0 %v431, 12
      %v591 = vpop.permute.xlu0 %590
      %592 = vrot.lane.b32.xlu0 %v434, 12
      %v593 = vpop.permute.xlu0 %592
      %594 = vrot.lane.b32.xlu0 %v436, 12
      %v595 = vpop.permute.xlu0 %594
      %596 = vrot.lane.b32.xlu0 %v439, 12
      %v597 = vpop.permute.xlu0 %596
      %598 = vrot.lane.b32.xlu0 %v441, 12
      %v599 = vpop.permute.xlu0 %598
      %600 = vrot.lane.b32.xlu0 %v444, 12
      %v601 = vpop.permute.xlu0 %600
      %602 = vrot.lane.b32.xlu0 %v446, 12
      %v603 = vpop.permute.xlu0 %602
      %604 = vrot.lane.b32.xlu0 %v449, 12
      %v605 = vpop.permute.xlu0 %604
      %606 = vrot.lane.b32.xlu0 %v451, 12
      %v607 = vpop.permute.xlu0 %606
      %608 = vrot.lane.b32.xlu0 %v454, 12
      %v609 = vpop.permute.xlu0 %608
      %610 = vrot.lane.b32.xlu0 %v456, 12
      %v611 = vpop.permute.xlu0 %610
      %612 = vrot.lane.b32.xlu0 %v459, 12
      %v613 = vpop.permute.xlu0 %612
      %614 = vrot.lane.b32.xlu0 %v461, 12
      %v615 = vpop.permute.xlu0 %614
      %616 = vrot.lane.b32.xlu0 %v464, 12
      %v617 = vpop.permute.xlu0 %616
      %618 = vrot.lane.b32.xlu0 %v466, 12
      %v619 = vpop.permute.xlu0 %618
      %620 = vrot.lane.b32.xlu0 %v469, 12
      %v621 = vpop.permute.xlu0 %620
      %622 = vrot.lane.b32.xlu0 %v471, 12
      %v623 = vpop.permute.xlu0 %622
      %655 = vrot.lane.b32.xlu0 %v474, 24
      %v656 = vpop.permute.xlu0 %655
      %657 = vrot.lane.b32.xlu0 %v477, 24
      %v658 = vpop.permute.xlu0 %657
      %659 = vrot.lane.b32.xlu0 %v479, 24
      %v660 = vpop.permute.xlu0 %659
      %661 = vrot.lane.b32.xlu0 %v482, 24
      %v662 = vpop.permute.xlu0 %661
      %663 = vrot.lane.b32.xlu0 %v484, 24
      %v664 = vpop.permute.xlu0 %663
      %665 = vrot.lane.b32.xlu0 %v487, 24
      %v666 = vpop.permute.xlu0 %665
      %667 = vrot.lane.b32.xlu0 %v489, 24
      %v668 = vpop.permute.xlu0 %667
      %669 = vrot.lane.b32.xlu0 %v492, 24
      %v670 = vpop.permute.xlu0 %669
      %671 = vrot.lane.b32.xlu0 %v494, 24
      %v672 = vpop.permute.xlu0 %671
      %673 = vrot.lane.b32.xlu0 %v497, 24
      %v674 = vpop.permute.xlu0 %673
      %675 = vrot.lane.b32.xlu0 %v499, 24
      %v676 = vpop.permute.xlu0 %675
      %677 = vrot.lane.b32.xlu0 %v502, 24
      %v678 = vpop.permute.xlu0 %677
      %679 = vrot.lane.b32.xlu0 %v504, 24
      %v680 = vpop.permute.xlu0 %679
      %681 = vrot.lane.b32.xlu0 %v507, 24
      %v682 = vpop.permute.xlu0 %681
      %683 = vrot.lane.b32.xlu0 %v509, 24
      %v684 = vpop.permute.xlu0 %683
      %685 = vrot.lane.b32.xlu0 %v512, 24
      %v686 = vpop.permute.xlu0 %685
      %687 = vrot.lane.b32.xlu0 %v514, 24
      %v688 = vpop.permute.xlu0 %687
      %689 = vrot.lane.b32.xlu0 %v517, 24
      %v690 = vpop.permute.xlu0 %689
      %691 = vrot.lane.b32.xlu0 %v519, 24
      %v692 = vpop.permute.xlu0 %691
      %693 = vrot.lane.b32.xlu0 %v522, 24
      %v694 = vpop.permute.xlu0 %693
      %695 = vrot.lane.b32.xlu0 %v524, 24
      %v696 = vpop.permute.xlu0 %695
      %697 = vrot.lane.b32.xlu0 %v527, 24
      %v698 = vpop.permute.xlu0 %697
      %699 = vrot.lane.b32.xlu0 %v529, 24
      %v700 = vpop.permute.xlu0 %699
      %701 = vrot.lane.b32.xlu0 %v532, 24
      %v702 = vpop.permute.xlu0 %701
      %703 = vrot.lane.b32.xlu0 %v534, 24
      %v704 = vpop.permute.xlu0 %703
      %705 = vrot.lane.b32.xlu0 %v537, 24
      %v706 = vpop.permute.xlu0 %705
      %707 = vrot.lane.b32.xlu0 %v539, 24
      %v708 = vpop.permute.xlu0 %707
      %709 = vrot.lane.b32.xlu0 %v542, 24
      %v710 = vpop.permute.xlu0 %709
      %711 = vrot.lane.b32.xlu0 %v544, 24
      %v712 = vpop.permute.xlu0 %711
      %713 = vrot.lane.b32.xlu0 %v547, 24
      %v714 = vpop.permute.xlu0 %713
      %715 = vrot.lane.b32.xlu0 %v549, 24
      %v716 = vpop.permute.xlu0 %715
      %748 = vrot.lane.b32.xlu0 %v331, 36
      %v749 = vpop.permute.xlu0 %748
      %750 = vrot.lane.b32.xlu0 %v238, 36
      %v751 = vpop.permute.xlu0 %750
      %752 = vrot.lane.b32.xlu0 %v332, 36
      %v753 = vpop.permute.xlu0 %752
      %754 = vrot.lane.b32.xlu0 %v241, 36
      %v755 = vpop.permute.xlu0 %754
      %756 = vrot.lane.b32.xlu0 %v333, 36
      %v757 = vpop.permute.xlu0 %756
      %758 = vrot.lane.b32.xlu0 %v244, 36
      %v759 = vpop.permute.xlu0 %758
      %760 = vrot.lane.b32.xlu0 %v334, 36
      %v761 = vpop.permute.xlu0 %760
      %762 = vrot.lane.b32.xlu0 %v247, 36
      %v763 = vpop.permute.xlu0 %762
      %764 = vrot.lane.b32.xlu0 %v335, 36
      %v765 = vpop.permute.xlu0 %764
      %766 = vrot.lane.b32.xlu0 %v250, 36
      %v767 = vpop.permute.xlu0 %766
      %768 = vrot.lane.b32.xlu0 %v336, 36
      %v769 = vpop.permute.xlu0 %768
      %770 = vrot.lane.b32.xlu0 %v253, 36
      %v771 = vpop.permute.xlu0 %770
      %772 = vrot.lane.b32.xlu0 %v337, 36
      %v773 = vpop.permute.xlu0 %772
      %774 = vrot.lane.b32.xlu0 %v256, 36
      %v775 = vpop.permute.xlu0 %774
      %776 = vrot.lane.b32.xlu0 %v338, 36
      %v777 = vpop.permute.xlu0 %776
      %778 = vrot.lane.b32.xlu0 %v259, 36
      %v779 = vpop.permute.xlu0 %778
      %780 = vrot.lane.b32.xlu0 %v339, 36
      %v781 = vpop.permute.xlu0 %780
      %782 = vrot.lane.b32.xlu0 %v262, 36
      %v783 = vpop.permute.xlu0 %782
      %784 = vrot.lane.b32.xlu0 %v340, 36
      %v785 = vpop.permute.xlu0 %784
      %786 = vrot.lane.b32.xlu0 %v265, 36
      %v787 = vpop.permute.xlu0 %786
      %788 = vrot.lane.b32.xlu0 %v341, 36
      %v789 = vpop.permute.xlu0 %788
      %790 = vrot.lane.b32.xlu0 %v268, 36
      %v791 = vpop.permute.xlu0 %790
      %792 = vrot.lane.b32.xlu0 %v342, 36
      %v793 = vpop.permute.xlu0 %792
      %794 = vrot.lane.b32.xlu0 %v271, 36
      %v795 = vpop.permute.xlu0 %794
      %796 = vrot.lane.b32.xlu0 %v343, 36
      %v797 = vpop.permute.xlu0 %796
      %798 = vrot.lane.b32.xlu0 %v274, 36
      %v799 = vpop.permute.xlu0 %798
      %800 = vrot.lane.b32.xlu0 %v344, 36
      %v801 = vpop.permute.xlu0 %800
      %802 = vrot.lane.b32.xlu0 %v277, 36
      %v803 = vpop.permute.xlu0 %802
      %804 = vrot.lane.b32.xlu0 %v345, 36
      %v805 = vpop.permute.xlu0 %804
      %806 = vrot.lane.b32.xlu0 %v280, 36
      %v807 = vpop.permute.xlu0 %806
      %808 = vrot.lane.b32.xlu0 %v346, 36
      %v809 = vpop.permute.xlu0 %808
      %810 = vrot.lane.b32.xlu0 %v283, 36
      %v811 = vpop.permute.xlu0 %810
      %844 = vrot.lane.b32.xlu0 %v399, 48
      %v845 = vpop.permute.xlu0 %844
      %846 = vrot.lane.b32.xlu0 %v401, 48
      %v847 = vpop.permute.xlu0 %846
      %848 = vrot.lane.b32.xlu0 %v404, 48
      %v849 = vpop.permute.xlu0 %848
      %850 = vrot.lane.b32.xlu0 %v406, 48
      %v851 = vpop.permute.xlu0 %850
      %852 = vrot.lane.b32.xlu0 %v409, 48
      %v853 = vpop.permute.xlu0 %852
      %854 = vrot.lane.b32.xlu0 %v411, 48
      %v855 = vpop.permute.xlu0 %854
      %856 = vrot.lane.b32.xlu0 %v414, 48
      %v857 = vpop.permute.xlu0 %856
      %858 = vrot.lane.b32.xlu0 %v416, 48
      %v859 = vpop.permute.xlu0 %858
      %860 = vrot.lane.b32.xlu0 %v419, 48
      %v861 = vpop.permute.xlu0 %860
      %862 = vrot.lane.b32.xlu0 %v421, 48
      %v863 = vpop.permute.xlu0 %862
      %864 = vrot.lane.b32.xlu0 %v424, 48
      %v865 = vpop.permute.xlu0 %864
      %866 = vrot.lane.b32.xlu0 %v426, 48
      %v867 = vpop.permute.xlu0 %866
      %868 = vrot.lane.b32.xlu0 %v429, 48
      %v869 = vpop.permute.xlu0 %868
      %870 = vrot.lane.b32.xlu0 %v431, 48
      %v871 = vpop.permute.xlu0 %870
      %872 = vrot.lane.b32.xlu0 %v434, 48
      %v873 = vpop.permute.xlu0 %872
      %874 = vrot.lane.b32.xlu0 %v436, 48
      %v875 = vpop.permute.xlu0 %874
      %876 = vrot.lane.b32.xlu0 %v439, 48
      %v877 = vpop.permute.xlu0 %876
      %878 = vrot.lane.b32.xlu0 %v441, 48
      %v879 = vpop.permute.xlu0 %878
      %880 = vrot.lane.b32.xlu0 %v444, 48
      %v881 = vpop.permute.xlu0 %880
      %882 = vrot.lane.b32.xlu0 %v446, 48
      %v883 = vpop.permute.xlu0 %882
      %884 = vrot.lane.b32.xlu0 %v449, 48
      %v885 = vpop.permute.xlu0 %884
      %886 = vrot.lane.b32.xlu0 %v451, 48
      %v887 = vpop.permute.xlu0 %886
      %888 = vrot.lane.b32.xlu0 %v454, 48
      %v889 = vpop.permute.xlu0 %888
      %890 = vrot.lane.b32.xlu0 %v456, 48
      %v891 = vpop.permute.xlu0 %890
      %892 = vrot.lane.b32.xlu0 %v459, 48
      %v893 = vpop.permute.xlu0 %892
      %894 = vrot.lane.b32.xlu0 %v461, 48
      %v895 = vpop.permute.xlu0 %894
      %896 = vrot.lane.b32.xlu0 %v464, 48
      %v897 = vpop.permute.xlu0 %896
      %898 = vrot.lane.b32.xlu0 %v466, 48
      %v899 = vpop.permute.xlu0 %898
      %900 = vrot.lane.b32.xlu0 %v469, 48
      %v901 = vpop.permute.xlu0 %900
      %902 = vrot.lane.b32.xlu0 %v471, 48
      %v903 = vpop.permute.xlu0 %902
      %904 = vrot.lane.b32.xlu0 %v554, 48
      %v905 = vpop.permute.xlu0 %904
      %906 = vrot.lane.b32.xlu0 %v556, 48
      %v907 = vpop.permute.xlu0 %906
      %940 = vrot.lane.b32.xlu0 %v477, 60
      %v941 = vpop.permute.xlu0 %940
      %942 = vrot.lane.b32.xlu0 %v479, 60
      %v943 = vpop.permute.xlu0 %942
      %944 = vrot.lane.b32.xlu0 %v482, 60
      %v945 = vpop.permute.xlu0 %944
      %946 = vrot.lane.b32.xlu0 %v484, 60
      %v947 = vpop.permute.xlu0 %946
      %948 = vrot.lane.b32.xlu0 %v487, 60
      %v949 = vpop.permute.xlu0 %948
      %950 = vrot.lane.b32.xlu0 %v489, 60
      %v951 = vpop.permute.xlu0 %950
      %952 = vrot.lane.b32.xlu0 %v492, 60
      %v953 = vpop.permute.xlu0 %952
      %954 = vrot.lane.b32.xlu0 %v494, 60
      %v955 = vpop.permute.xlu0 %954
      %956 = vrot.lane.b32.xlu0 %v497, 60
      %v957 = vpop.permute.xlu0 %956
      %958 = vrot.lane.b32.xlu0 %v499, 60
      %v959 = vpop.permute.xlu0 %958
      %960 = vrot.lane.b32.xlu0 %v502, 60
      %v961 = vpop.permute.xlu0 %960
      %962 = vrot.lane.b32.xlu0 %v504, 60
      %v963 = vpop.permute.xlu0 %962
      %964 = vrot.lane.b32.xlu0 %v507, 60
      %v965 = vpop.permute.xlu0 %964
      %966 = vrot.lane.b32.xlu0 %v509, 60
      %v967 = vpop.permute.xlu0 %966
      %968 = vrot.lane.b32.xlu0 %v512, 60
      %v969 = vpop.permute.xlu0 %968
      %970 = vrot.lane.b32.xlu0 %v514, 60
      %v971 = vpop.permute.xlu0 %970
      %972 = vrot.lane.b32.xlu0 %v517, 60
      %v973 = vpop.permute.xlu0 %972
      %974 = vrot.lane.b32.xlu0 %v519, 60
      %v975 = vpop.permute.xlu0 %974
      %976 = vrot.lane.b32.xlu0 %v522, 60
      %v977 = vpop.permute.xlu0 %976
      %978 = vrot.lane.b32.xlu0 %v524, 60
      %v979 = vpop.permute.xlu0 %978
      %980 = vrot.lane.b32.xlu0 %v527, 60
      %v981 = vpop.permute.xlu0 %980
      %982 = vrot.lane.b32.xlu0 %v529, 60
      %v983 = vpop.permute.xlu0 %982
      %984 = vrot.lane.b32.xlu0 %v532, 60
      %v985 = vpop.permute.xlu0 %984
      %986 = vrot.lane.b32.xlu0 %v534, 60
      %v987 = vpop.permute.xlu0 %986
      %988 = vrot.lane.b32.xlu0 %v537, 60
      %v989 = vpop.permute.xlu0 %988
      %990 = vrot.lane.b32.xlu0 %v539, 60
      %v991 = vpop.permute.xlu0 %990
      %992 = vrot.lane.b32.xlu0 %v542, 60
      %v993 = vpop.permute.xlu0 %992
      %994 = vrot.lane.b32.xlu0 %v544, 60
      %v995 = vpop.permute.xlu0 %994
      %996 = vrot.lane.b32.xlu0 %v547, 60
      %v997 = vpop.permute.xlu0 %996
      %998 = vrot.lane.b32.xlu0 %v549, 60
      %v999 = vpop.permute.xlu0 %998
      %1000 = vrot.lane.b32.xlu0 %v559, 60
      %v1001 = vpop.permute.xlu0 %1000
      %1002 = vrot.lane.b32.xlu0 %v561, 60
      %v1003 = vpop.permute.xlu0 %1002
      %1036 = vrot.lane.b32.xlu0 %v332, 72
      %v1037 = vpop.permute.xlu0 %1036
      %1038 = vrot.lane.b32.xlu0 %v241, 72
      %v1039 = vpop.permute.xlu0 %1038
      %1040 = vrot.lane.b32.xlu0 %v333, 72
      %v1041 = vpop.permute.xlu0 %1040
      %1042 = vrot.lane.b32.xlu0 %v244, 72
      %v1043 = vpop.permute.xlu0 %1042
      %1044 = vrot.lane.b32.xlu0 %v334, 72
      %v1045 = vpop.permute.xlu0 %1044
      %1046 = vrot.lane.b32.xlu0 %v247, 72
      %v1047 = vpop.permute.xlu0 %1046
      %1048 = vrot.lane.b32.xlu0 %v335, 72
      %v1049 = vpop.permute.xlu0 %1048
      %1050 = vrot.lane.b32.xlu0 %v250, 72
      %v1051 = vpop.permute.xlu0 %1050
      %1052 = vrot.lane.b32.xlu0 %v336, 72
      %v1053 = vpop.permute.xlu0 %1052
      %1054 = vrot.lane.b32.xlu0 %v253, 72
      %v1055 = vpop.permute.xlu0 %1054
      %1056 = vrot.lane.b32.xlu0 %v337, 72
      %v1057 = vpop.permute.xlu0 %1056
      %1058 = vrot.lane.b32.xlu0 %v256, 72
      %v1059 = vpop.permute.xlu0 %1058
      %1060 = vrot.lane.b32.xlu0 %v338, 72
      %v1061 = vpop.permute.xlu0 %1060
      %1062 = vrot.lane.b32.xlu0 %v259, 72
      %v1063 = vpop.permute.xlu0 %1062
      %1064 = vrot.lane.b32.xlu0 %v339, 72
      %v1065 = vpop.permute.xlu0 %1064
      %1066 = vrot.lane.b32.xlu0 %v262, 72
      %v1067 = vpop.permute.xlu0 %1066
      %1068 = vrot.lane.b32.xlu0 %v340, 72
      %v1069 = vpop.permute.xlu0 %1068
      %1070 = vrot.lane.b32.xlu0 %v265, 72
      %v1071 = vpop.permute.xlu0 %1070
      %1072 = vrot.lane.b32.xlu0 %v341, 72
      %v1073 = vpop.permute.xlu0 %1072
      %1074 = vrot.lane.b32.xlu0 %v268, 72
      %v1075 = vpop.permute.xlu0 %1074
      %1076 = vrot.lane.b32.xlu0 %v342, 72
      %v1077 = vpop.permute.xlu0 %1076
      %1078 = vrot.lane.b32.xlu0 %v271, 72
      %v1079 = vpop.permute.xlu0 %1078
      %1080 = vrot.lane.b32.xlu0 %v343, 72
      %v1081 = vpop.permute.xlu0 %1080
      %1082 = vrot.lane.b32.xlu0 %v274, 72
      %v1083 = vpop.permute.xlu0 %1082
      %1084 = vrot.lane.b32.xlu0 %v344, 72
      %v1085 = vpop.permute.xlu0 %1084
      %1086 = vrot.lane.b32.xlu0 %v277, 72
      %v1087 = vpop.permute.xlu0 %1086
      %1088 = vrot.lane.b32.xlu0 %v345, 72
      %v1089 = vpop.permute.xlu0 %1088
      %1090 = vrot.lane.b32.xlu0 %v280, 72
      %v1091 = vpop.permute.xlu0 %1090
      %1092 = vrot.lane.b32.xlu0 %v346, 72
      %v1093 = vpop.permute.xlu0 %1092
      %1094 = vrot.lane.b32.xlu0 %v283, 72
      %v1095 = vpop.permute.xlu0 %1094
      %1096 = vrot.lane.b32.xlu0 0.0, 72
      %v1097 = vpop.permute.xlu0 %1096
      %1129 = vrot.lane.b32.xlu0 %v404, 84
      %v1130 = vpop.permute.xlu0 %1129
      %1131 = vrot.lane.b32.xlu0 %v406, 84
      %v1132 = vpop.permute.xlu0 %1131
      %1133 = vrot.lane.b32.xlu0 %v409, 84
      %v1134 = vpop.permute.xlu0 %1133
      %1135 = vrot.lane.b32.xlu0 %v411, 84
      %v1136 = vpop.permute.xlu0 %1135
      %1137 = vrot.lane.b32.xlu0 %v414, 84
      %v1138 = vpop.permute.xlu0 %1137
      %1139 = vrot.lane.b32.xlu0 %v416, 84
      %v1140 = vpop.permute.xlu0 %1139
      %1141 = vrot.lane.b32.xlu0 %v419, 84
      %v1142 = vpop.permute.xlu0 %1141
      %1143 = vrot.lane.b32.xlu0 %v421, 84
      %v1144 = vpop.permute.xlu0 %1143
      %1145 = vrot.lane.b32.xlu0 %v424, 84
      %v1146 = vpop.permute.xlu0 %1145
      %1147 = vrot.lane.b32.xlu0 %v426, 84
      %v1148 = vpop.permute.xlu0 %1147
      %1149 = vrot.lane.b32.xlu0 %v429, 84
      %v1150 = vpop.permute.xlu0 %1149
      %1151 = vrot.lane.b32.xlu0 %v431, 84
      %v1152 = vpop.permute.xlu0 %1151
      %1153 = vrot.lane.b32.xlu0 %v434, 84
      %v1154 = vpop.permute.xlu0 %1153
      %1155 = vrot.lane.b32.xlu0 %v436, 84
      %v1156 = vpop.permute.xlu0 %1155
      %1157 = vrot.lane.b32.xlu0 %v439, 84
      %v1158 = vpop.permute.xlu0 %1157
      %1159 = vrot.lane.b32.xlu0 %v441, 84
      %v1160 = vpop.permute.xlu0 %1159
      %1161 = vrot.lane.b32.xlu0 %v444, 84
      %v1162 = vpop.permute.xlu0 %1161
      %1163 = vrot.lane.b32.xlu0 %v446, 84
      %v1164 = vpop.permute.xlu0 %1163
      %1165 = vrot.lane.b32.xlu0 %v449, 84
      %v1166 = vpop.permute.xlu0 %1165
      %1167 = vrot.lane.b32.xlu0 %v451, 84
      %v1168 = vpop.permute.xlu0 %1167
      %1169 = vrot.lane.b32.xlu0 %v454, 84
      %v1170 = vpop.permute.xlu0 %1169
      %1171 = vrot.lane.b32.xlu0 %v456, 84
      %v1172 = vpop.permute.xlu0 %1171
      %1173 = vrot.lane.b32.xlu0 %v459, 84
      %v1174 = vpop.permute.xlu0 %1173
      %1175 = vrot.lane.b32.xlu0 %v461, 84
      %v1176 = vpop.permute.xlu0 %1175
      %1177 = vrot.lane.b32.xlu0 %v464, 84
      %v1178 = vpop.permute.xlu0 %1177
      %1179 = vrot.lane.b32.xlu0 %v466, 84
      %v1180 = vpop.permute.xlu0 %1179
      %1181 = vrot.lane.b32.xlu0 %v469, 84
      %v1182 = vpop.permute.xlu0 %1181
      %1183 = vrot.lane.b32.xlu0 %v471, 84
      %v1184 = vpop.permute.xlu0 %1183
      %1185 = vrot.lane.b32.xlu0 %v554, 84
      %v1186 = vpop.permute.xlu0 %1185
      %1187 = vrot.lane.b32.xlu0 %v556, 84
      %v1188 = vpop.permute.xlu0 %1187
      %1189 = vrot.lane.b32.xlu0 %v396, 84
      %v1190 = vpop.permute.xlu0 %1189
      %1222 = vrot.lane.b32.xlu0 %v482, 96
      %v1223 = vpop.permute.xlu0 %1222
      %1224 = vrot.lane.b32.xlu0 %v484, 96
      %v1225 = vpop.permute.xlu0 %1224
      %1226 = vrot.lane.b32.xlu0 %v487, 96
      %v1227 = vpop.permute.xlu0 %1226
      %1228 = vrot.lane.b32.xlu0 %v489, 96
      %v1229 = vpop.permute.xlu0 %1228
      %1230 = vrot.lane.b32.xlu0 %v492, 96
      %v1231 = vpop.permute.xlu0 %1230
      %1232 = vrot.lane.b32.xlu0 %v494, 96
      %v1233 = vpop.permute.xlu0 %1232
      %1234 = vrot.lane.b32.xlu0 %v497, 96
      %v1235 = vpop.permute.xlu0 %1234
      %1236 = vrot.lane.b32.xlu0 %v499, 96
      %v1237 = vpop.permute.xlu0 %1236
      %1238 = vrot.lane.b32.xlu0 %v502, 96
      %v1239 = vpop.permute.xlu0 %1238
      %1240 = vrot.lane.b32.xlu0 %v504, 96
      %v1241 = vpop.permute.xlu0 %1240
      %1242 = vrot.lane.b32.xlu0 %v507, 96
      %v1243 = vpop.permute.xlu0 %1242
      %1244 = vrot.lane.b32.xlu0 %v509, 96
      %v1245 = vpop.permute.xlu0 %1244
      %1246 = vrot.lane.b32.xlu0 %v512, 96
      %v1247 = vpop.permute.xlu0 %1246
      %1248 = vrot.lane.b32.xlu0 %v514, 96
      %v1249 = vpop.permute.xlu0 %1248
      %1250 = vrot.lane.b32.xlu0 %v517, 96
      %v1251 = vpop.permute.xlu0 %1250
      %1252 = vrot.lane.b32.xlu0 %v519, 96
      %v1253 = vpop.permute.xlu0 %1252
      %1254 = vrot.lane.b32.xlu0 %v522, 96
      %v1255 = vpop.permute.xlu0 %1254
      %1256 = vrot.lane.b32.xlu0 %v524, 96
      %v1257 = vpop.permute.xlu0 %1256
      %1258 = vrot.lane.b32.xlu0 %v527, 96
      %v1259 = vpop.permute.xlu0 %1258
      %1260 = vrot.lane.b32.xlu0 %v529, 96
      %v1261 = vpop.permute.xlu0 %1260
      %1262 = vrot.lane.b32.xlu0 %v532, 96
      %v1263 = vpop.permute.xlu0 %1262
      %1264 = vrot.lane.b32.xlu0 %v534, 96
      %v1265 = vpop.permute.xlu0 %1264
      %1266 = vrot.lane.b32.xlu0 %v537, 96
      %v1267 = vpop.permute.xlu0 %1266
      %1268 = vrot.lane.b32.xlu0 %v539, 96
      %v1269 = vpop.permute.xlu0 %1268
      %1270 = vrot.lane.b32.xlu0 %v542, 96
      %v1271 = vpop.permute.xlu0 %1270
      %1272 = vrot.lane.b32.xlu0 %v544, 96
      %v1273 = vpop.permute.xlu0 %1272
      %1274 = vrot.lane.b32.xlu0 %v547, 96
      %v1275 = vpop.permute.xlu0 %1274
      %1276 = vrot.lane.b32.xlu0 %v549, 96
      %v1277 = vpop.permute.xlu0 %1276
      %1278 = vrot.lane.b32.xlu0 %v559, 96
      %v1279 = vpop.permute.xlu0 %1278
      %1280 = vrot.lane.b32.xlu0 %v561, 96
      %v1281 = vpop.permute.xlu0 %1280
      %1282 = vrot.lane.b32.xlu0 %v474, 96
      %v1283 = vpop.permute.xlu0 %1282
      %vm1315 = vcmask 97280
      %v1316 = vsel %vm1315, 0.0, %v563
      %v1317 = vsel %vm1315, %v331, %v565
      %v1318 = vsel %vm1315, %v238, %v567
      %v1319 = vsel %vm1315, %v332, %v569
      %v1320 = vsel %vm1315, %v241, %v571
      %v1321 = vsel %vm1315, %v333, %v573
      %v1322 = vsel %vm1315, %v244, %v575
      %v1323 = vsel %vm1315, %v334, %v577
      %v1324 = vsel %vm1315, %v247, %v579
      %v1325 = vsel %vm1315, %v335, %v581
      %v1326 = vsel %vm1315, %v250, %v583
      %v1327 = vsel %vm1315, %v336, %v585
      %v1328 = vsel %vm1315, %v253, %v587
      %v1329 = vsel %vm1315, %v337, %v589
      %v1330 = vsel %vm1315, %v256, %v591
      %v1331 = vsel %vm1315, %v338, %v593
      %v1332 = vsel %vm1315, %v259, %v595
      %v1333 = vsel %vm1315, %v339, %v597
      %v1334 = vsel %vm1315, %v262, %v599
      %v1335 = vsel %vm1315, %v340, %v601
      %v1336 = vsel %vm1315, %v265, %v603
      %v1337 = vsel %vm1315, %v341, %v605
      %v1338 = vsel %vm1315, %v268, %v607
      %v1339 = vsel %vm1315, %v342, %v609
      %v1340 = vsel %vm1315, %v271, %v611
      %v1341 = vsel %vm1315, %v343, %v613
      %v1342 = vsel %vm1315, %v274, %v615
      %v1343 = vsel %vm1315, %v344, %v617
      %v1344 = vsel %vm1315, %v277, %v619
      %v1345 = vsel %vm1315, %v345, %v621
      %v1346 = vsel %vm1315, %v280, %v623
      %vm1347 = vcmask 195584
      %v1348 = vsel %vm1347, %v1316, %v656
      %v1349 = vsel %vm1347, %v1317, %v658
      %v1350 = vsel %vm1347, %v1318, %v660
      %v1351 = vsel %vm1347, %v1319, %v662
      %v1352 = vsel %vm1347, %v1320, %v664
      %v1353 = vsel %vm1347, %v1321, %v666
      %v1354 = vsel %vm1347, %v1322, %v668
      %v1355 = vsel %vm1347, %v1323, %v670
      %v1356 = vsel %vm1347, %v1324, %v672
      %v1357 = vsel %vm1347, %v1325, %v674
      %v1358 = vsel %vm1347, %v1326, %v676
      %v1359 = vsel %vm1347, %v1327, %v678
      %v1360 = vsel %vm1347, %v1328, %v680
      %v1361 = vsel %vm1347, %v1329, %v682
      %v1362 = vsel %vm1347, %v1330, %v684
      %v1363 = vsel %vm1347, %v1331, %v686
      %v1364 = vsel %vm1347, %v1332, %v688
      %v1365 = vsel %vm1347, %v1333, %v690
      %v1366 = vsel %vm1347, %v1334, %v692
      %v1367 = vsel %vm1347, %v1335, %v694
      %v1368 = vsel %vm1347, %v1336, %v696
      %v1369 = vsel %vm1347, %v1337, %v698
      %v1370 = vsel %vm1347, %v1338, %v700
      %v1371 = vsel %vm1347, %v1339, %v702
      %v1372 = vsel %vm1347, %v1340, %v704
      %v1373 = vsel %vm1347, %v1341, %v706
      %v1374 = vsel %vm1347, %v1342, %v708
      %v1375 = vsel %vm1347, %v1343, %v710
      %v1376 = vsel %vm1347, %v1344, %v712
      %v1377 = vsel %vm1347, %v1345, %v714
      %v1378 = vsel %vm1347, %v1346, %v716
      %vm1379 = vcmask 293888
      %v1380 = vsel %vm1379, %v1348, %v749
      %v1381 = vsel %vm1379, %v1348, %v751
      %v1382 = vsel %vm1379, %v1349, %v753
      %v1383 = vsel %vm1379, %v1350, %v755
      %v1384 = vsel %vm1379, %v1351, %v757
      %v1385 = vsel %vm1379, %v1352, %v759
      %v1386 = vsel %vm1379, %v1353, %v761
      %v1387 = vsel %vm1379, %v1354, %v763
      %v1388 = vsel %vm1379, %v1355, %v765
      %v1389 = vsel %vm1379, %v1356, %v767
      %v1390 = vsel %vm1379, %v1357, %v769
      %v1391 = vsel %vm1379, %v1358, %v771
      %v1392 = vsel %vm1379, %v1359, %v773
      %v1393 = vsel %vm1379, %v1360, %v775
      %v1394 = vsel %vm1379, %v1361, %v777
      %v1395 = vsel %vm1379, %v1362, %v779
      %v1396 = vsel %vm1379, %v1363, %v781
      %v1397 = vsel %vm1379, %v1364, %v783
      %v1398 = vsel %vm1379, %v1365, %v785
      %v1399 = vsel %vm1379, %v1366, %v787
      %v1400 = vsel %vm1379, %v1367, %v789
      %v1401 = vsel %vm1379, %v1368, %v791
      %v1402 = vsel %vm1379, %v1369, %v793
      %v1403 = vsel %vm1379, %v1370, %v795
      %v1404 = vsel %vm1379, %v1371, %v797
      %v1405 = vsel %vm1379, %v1372, %v799
      %v1406 = vsel %vm1379, %v1373, %v801
      %v1407 = vsel %vm1379, %v1374, %v803
      %v1408 = vsel %vm1379, %v1375, %v805
      %v1409 = vsel %vm1379, %v1376, %v807
      %v1410 = vsel %vm1379, %v1377, %v809
      %v1411 = vsel %vm1379, %v1378, %v811
      %vm1412 = vcmask 392192
      %v1413 = vsel %vm1412, %v1380, %v845
      %v1414 = vsel %vm1412, %v1381, %v847
      %v1415 = vsel %vm1412, %v1382, %v849
      %v1416 = vsel %vm1412, %v1383, %v851
      %v1417 = vsel %vm1412, %v1384, %v853
      %v1418 = vsel %vm1412, %v1385, %v855
      %v1419 = vsel %vm1412, %v1386, %v857
      %v1420 = vsel %vm1412, %v1387, %v859
      %v1421 = vsel %vm1412, %v1388, %v861
      %v1422 = vsel %vm1412, %v1389, %v863
      %v1423 = vsel %vm1412, %v1390, %v865
      %v1424 = vsel %vm1412, %v1391, %v867
      %v1425 = vsel %vm1412, %v1392, %v869
      %v1426 = vsel %vm1412, %v1393, %v871
      %v1427 = vsel %vm1412, %v1394, %v873
      %v1428 = vsel %vm1412, %v1395, %v875
      %v1429 = vsel %vm1412, %v1396, %v877
      %v1430 = vsel %vm1412, %v1397, %v879
      %v1431 = vsel %vm1412, %v1398, %v881
      %v1432 = vsel %vm1412, %v1399, %v883
      %v1433 = vsel %vm1412, %v1400, %v885
      %v1434 = vsel %vm1412, %v1401, %v887
      %v1435 = vsel %vm1412, %v1402, %v889
      %v1436 = vsel %vm1412, %v1403, %v891
      %v1437 = vsel %vm1412, %v1404, %v893
      %v1438 = vsel %vm1412, %v1405, %v895
      %v1439 = vsel %vm1412, %v1406, %v897
      %v1440 = vsel %vm1412, %v1407, %v899
      %v1441 = vsel %vm1412, %v1408, %v901
      %v1442 = vsel %vm1412, %v1409, %v903
      %v1443 = vsel %vm1412, %v1410, %v905
      %v1444 = vsel %vm1412, %v1411, %v907
      %vm1445 = vcmask 490496
      %v1446 = vsel %vm1445, %v1413, %v941
      %v1447 = vsel %vm1445, %v1414, %v943
      %v1448 = vsel %vm1445, %v1415, %v945
      %v1449 = vsel %vm1445, %v1416, %v947
      %v1450 = vsel %vm1445, %v1417, %v949
      %v1451 = vsel %vm1445, %v1418, %v951
      %v1452 = vsel %vm1445, %v1419, %v953
      %v1453 = vsel %vm1445, %v1420, %v955
      %v1454 = vsel %vm1445, %v1421, %v957
      %v1455 = vsel %vm1445, %v1422, %v959
      %v1456 = vsel %vm1445, %v1423, %v961
      %v1457 = vsel %vm1445, %v1424, %v963
      %v1458 = vsel %vm1445, %v1425, %v965
      %v1459 = vsel %vm1445, %v1426, %v967
      %v1460 = vsel %vm1445, %v1427, %v969
      %v1461 = vsel %vm1445, %v1428, %v971
      %v1462 = vsel %vm1445, %v1429, %v973
      %v1463 = vsel %vm1445, %v1430, %v975
      %v1464 = vsel %vm1445, %v1431, %v977
      %v1465 = vsel %vm1445, %v1432, %v979
      %v1466 = vsel %vm1445, %v1433, %v981
      %v1467 = vsel %vm1445, %v1434, %v983
      %v1468 = vsel %vm1445, %v1435, %v985
      %v1469 = vsel %vm1445, %v1436, %v987
      %v1470 = vsel %vm1445, %v1437, %v989
      %v1471 = vsel %vm1445, %v1438, %v991
      %v1472 = vsel %vm1445, %v1439, %v993
      %v1473 = vsel %vm1445, %v1440, %v995
      %v1474 = vsel %vm1445, %v1441, %v997
      %v1475 = vsel %vm1445, %v1442, %v999
      %v1476 = vsel %vm1445, %v1443, %v1001
      %v1477 = vsel %vm1445, %v1444, %v1003
      %vm1478 = vcmask 588800
      %v1479 = vsel %vm1478, %v1446, %v1037
      %v1480 = vsel %vm1478, %v1447, %v1039
      %v1481 = vsel %vm1478, %v1448, %v1041
      %v1482 = vsel %vm1478, %v1449, %v1043
      %v1483 = vsel %vm1478, %v1450, %v1045
      %v1484 = vsel %vm1478, %v1451, %v1047
      %v1485 = vsel %vm1478, %v1452, %v1049
      %v1486 = vsel %vm1478, %v1453, %v1051
      %v1487 = vsel %vm1478, %v1454, %v1053
      %v1488 = vsel %vm1478, %v1455, %v1055
      %v1489 = vsel %vm1478, %v1456, %v1057
      %v1490 = vsel %vm1478, %v1457, %v1059
      %v1491 = vsel %vm1478, %v1458, %v1061
      %v1492 = vsel %vm1478, %v1459, %v1063
      %v1493 = vsel %vm1478, %v1460, %v1065
      %v1494 = vsel %vm1478, %v1461, %v1067
      %v1495 = vsel %vm1478, %v1462, %v1069
      %v1496 = vsel %vm1478, %v1463, %v1071
      %v1497 = vsel %vm1478, %v1464, %v1073
      %v1498 = vsel %vm1478, %v1465, %v1075
      %v1499 = vsel %vm1478, %v1466, %v1077
      %v1500 = vsel %vm1478, %v1467, %v1079
      %v1501 = vsel %vm1478, %v1468, %v1081
      %v1502 = vsel %vm1478, %v1469, %v1083
      %v1503 = vsel %vm1478, %v1470, %v1085
      %v1504 = vsel %vm1478, %v1471, %v1087
      %v1505 = vsel %vm1478, %v1472, %v1089
      %v1506 = vsel %vm1478, %v1473, %v1091
      %v1507 = vsel %vm1478, %v1474, %v1093
      %v1508 = vsel %vm1478, %v1475, %v1095
      %v1509 = vsel %vm1478, %v1476, %v1097
      %v1510 = vsel %vm1478, %v1477, %v1097
      %vm1511 = vcmask 687104
      %v1512 = vsel %vm1511, %v1479, %v1130
      %v1513 = vsel %vm1511, %v1480, %v1132
      %v1514 = vsel %vm1511, %v1481, %v1134
      %v1515 = vsel %vm1511, %v1482, %v1136
      %v1516 = vsel %vm1511, %v1483, %v1138
      %v1517 = vsel %vm1511, %v1484, %v1140
      %v1518 = vsel %vm1511, %v1485, %v1142
      %v1519 = vsel %vm1511, %v1486, %v1144
      %v1520 = vsel %vm1511, %v1487, %v1146
      %v1521 = vsel %vm1511, %v1488, %v1148
      %v1522 = vsel %vm1511, %v1489, %v1150
      %v1523 = vsel %vm1511, %v1490, %v1152
      %v1524 = vsel %vm1511, %v1491, %v1154
      %v1525 = vsel %vm1511, %v1492, %v1156
      %v1526 = vsel %vm1511, %v1493, %v1158
      %v1527 = vsel %vm1511, %v1494, %v1160
      %v1528 = vsel %vm1511, %v1495, %v1162
      %v1529 = vsel %vm1511, %v1496, %v1164
      %v1530 = vsel %vm1511, %v1497, %v1166
      %v1531 = vsel %vm1511, %v1498, %v1168
      %v1532 = vsel %vm1511, %v1499, %v1170
      %v1533 = vsel %vm1511, %v1500, %v1172
      %v1534 = vsel %vm1511, %v1501, %v1174
      %v1535 = vsel %vm1511, %v1502, %v1176
      %v1536 = vsel %vm1511, %v1503, %v1178
      %v1537 = vsel %vm1511, %v1504, %v1180
      %v1538 = vsel %vm1511, %v1505, %v1182
      %v1539 = vsel %vm1511, %v1506, %v1184
      %v1540 = vsel %vm1511, %v1507, %v1186
      %v1541 = vsel %vm1511, %v1508, %v1188
      %v1542 = vsel %vm1511, %v1509, %v1190
      %v1543 = vsel %vm1511, %v1510, %v1190
      %vm1544 = vcmask 785408
      %v1545 = vsel %vm1544, %v1512, %v1223
      %v1546 = vsel %vm1544, %v1513, %v1225
      %v1547 = vsel %vm1544, %v1514, %v1227
      %v1548 = vsel %vm1544, %v1515, %v1229
      %v1549 = vsel %vm1544, %v1516, %v1231
      %v1550 = vsel %vm1544, %v1517, %v1233
      %v1551 = vsel %vm1544, %v1518, %v1235
      %v1552 = vsel %vm1544, %v1519, %v1237
      %v1553 = vsel %vm1544, %v1520, %v1239
      %v1554 = vsel %vm1544, %v1521, %v1241
      %v1555 = vsel %vm1544, %v1522, %v1243
      %v1556 = vsel %vm1544, %v1523, %v1245
      %v1557 = vsel %vm1544, %v1524, %v1247
      %v1558 = vsel %vm1544, %v1525, %v1249
      %v1559 = vsel %vm1544, %v1526, %v1251
      %v1560 = vsel %vm1544, %v1527, %v1253
      %v1561 = vsel %vm1544, %v1528, %v1255
      %v1562 = vsel %vm1544, %v1529, %v1257
      %v1563 = vsel %vm1544, %v1530, %v1259
      %v1564 = vsel %vm1544, %v1531, %v1261
      %v1565 = vsel %vm1544, %v1532, %v1263
      %v1566 = vsel %vm1544, %v1533, %v1265
      %v1567 = vsel %vm1544, %v1534, %v1267
      %v1568 = vsel %vm1544, %v1535, %v1269
      %v1569 = vsel %vm1544, %v1536, %v1271
      %v1570 = vsel %vm1544, %v1537, %v1273
      %v1571 = vsel %vm1544, %v1538, %v1275
      %v1572 = vsel %vm1544, %v1539, %v1277
      %v1573 = vsel %vm1544, %v1540, %v1279
      %v1574 = vsel %vm1544, %v1541, %v1281
      %v1575 = vsel %vm1544, %v1542, %v1283
      %v1576 = vsel %vm1544, %v1543, %v1283
      %v1577 = vld [vmem:[%s1] sm:$0xff]
      %v1578 = vld [vmem:[%s1 + $0x8] sm:$0xff]
      %v1579 = vld [vmem:[%s1 + $0x10] sm:$0xff]
      %v1580 = vld [vmem:[%s1 + $0x18] sm:$0xff]
      %v1581 = vld [vmem:[%s1 + $0x20] sm:$0xff]
      %v1582 = vld [vmem:[%s1 + $0x28] sm:$0xff]
      %v1583 = vld [vmem:[%s1 + $0x30] sm:$0xff]
      %v1584 = vld [vmem:[%s1 + $0x38] sm:$0xff]
      %v1585 = vld [vmem:[%s1 + $0x40] sm:$0xff]
      %v1586 = vld [vmem:[%s1 + $0x48] sm:$0xff]
      %v1587 = vld [vmem:[%s1 + $0x50] sm:$0xff]
      %v1588 = vld [vmem:[%s1 + $0x58] sm:$0xff]
      %v1589 = vld [vmem:[%s1 + $0x60] sm:$0xff]
      %v1590 = vld [vmem:[%s1 + $0x68] sm:$0xf]
      %v1591 = vld [vmem:[%s2] sm:$0x1]
      %v1593 = vlaneseq
      %v1594 = vshrl.u32 %v1593, 7
      %v1595 = vsub.s32 0, %v1594
      %v1596 = vrot.slane %v1591, %v1595
      %vm1598 = vcmask 883712
      %v1600 = vsel %vm1598, %v1545, 0
      %v1603 = vsel %vm1598, %v1546, 0
      %v1606 = vsel %vm1598, %v1547, 0
      %v1609 = vsel %vm1598, %v1548, 0
      %v1612 = vsel %vm1598, %v1549, 0
      %v1615 = vsel %vm1598, %v1550, 0
      %v1618 = vsel %vm1598, %v1551, 0
      %v1621 = vsel %vm1598, %v1552, 0
      %v1624 = vsel %vm1598, %v1553, 0
      %v1627 = vsel %vm1598, %v1554, 0
      %v1630 = vsel %vm1598, %v1555, 0
      %v1633 = vsel %vm1598, %v1556, 0
      %v1636 = vsel %vm1598, %v1557, 0
      %v1639 = vsel %vm1598, %v1558, 0
      %v1642 = vsel %vm1598, %v1559, 0
      %v1645 = vsel %vm1598, %v1560, 0
      %v1648 = vsel %vm1598, %v1561, 0
      %v1651 = vsel %vm1598, %v1562, 0
      %v1654 = vsel %vm1598, %v1563, 0
      %v1657 = vsel %vm1598, %v1564, 0
      %v1660 = vsel %vm1598, %v1565, 0
      %v1663 = vsel %vm1598, %v1566, 0
      %v1666 = vsel %vm1598, %v1567, 0
      %v1669 = vsel %vm1598, %v1568, 0
      %v1672 = vsel %vm1598, %v1569, 0
      %v1675 = vsel %vm1598, %v1570, 0
      %v1678 = vsel %vm1598, %v1571, 0
      %v1681 = vsel %vm1598, %v1572, 0
      %v1684 = vsel %vm1598, %v1573, 0
      %v1687 = vsel %vm1598, %v1574, 0
      %v1690 = vsel %vm1598, %v1575, 0
      %v1693 = vsel %vm1598, %v1576, 0
      %vm1695 = vcmask 1043456
      %v1697 = vsel %vm1695, %v1590, 0
      %1699 = vmatprep.subr.mxu0 0.0
      %v1700 = vand.u32 %v1577, 4294901760
      %1701 = vmatpush1.msra.mxu0 %v1700
      %1702 = vmatprep.subr.mxu0 0.0
      %v1703 = vand.u32 %v1578, 4294901760
      %1704 = vmatpush1.msra.mxu0 %v1703
      %1705 = vmatprep.subr.mxu0 0.0
      %v1706 = vand.u32 %v1579, 4294901760
      %1707 = vmatpush1.msra.mxu0 %v1706
      %1708 = vmatprep.subr.mxu0 0.0
      %v1709 = vand.u32 %v1580, 4294901760
      %1710 = vmatpush1.msra.mxu0 %v1709
      %1711 = vmatprep.subr.mxu0 0.0
      %v1712 = vand.u32 %v1581, 4294901760
      %1713 = vmatpush1.msra.mxu0 %v1712
      %1714 = vmatprep.subr.mxu0 0.0
      %v1715 = vand.u32 %v1582, 4294901760
      %1716 = vmatpush1.msra.mxu0 %v1715
      %1717 = vmatprep.subr.mxu0 0.0
      %v1718 = vand.u32 %v1583, 4294901760
      %1719 = vmatpush1.msra.mxu0 %v1718
      %1720 = vmatprep.subr.mxu0 0.0
      %v1721 = vand.u32 %v1584, 4294901760
      %1722 = vmatpush1.msra.mxu0 %v1721
      %1723 = vmatprep.subr.mxu0 0.0
      %v1724 = vand.u32 %v1585, 4294901760
      %1725 = vmatpush1.msra.mxu0 %v1724
      %1726 = vmatprep.subr.mxu0 0.0
      %v1727 = vand.u32 %v1586, 4294901760
      %1728 = vmatpush1.msra.mxu0 %v1727
      %1729 = vmatprep.subr.mxu0 0.0
      %v1730 = vand.u32 %v1587, 4294901760
      %1731 = vmatpush1.msra.mxu0 %v1730
      %1732 = vmatprep.subr.mxu0 0.0
      %v1733 = vand.u32 %v1588, 4294901760
      %1734 = vmatpush1.msra.mxu0 %v1733
      %1735 = vmatprep.subr.mxu0 0.0
      %v1736 = vand.u32 %v1589, 4294901760
      %1737 = vmatpush1.msra.mxu0 %v1736
      %1738 = vmatprep.subr.mxu0 0.0
      %v1739 = vand.u32 %v1697, 4294901760
      %1740 = vmatpush1.msra.mxu0 %v1739
      %1741 = vmatprep.subr.mxu0 0.0
      %1742 = vmatpush1.msra.mxu0 0.0
      %1743 = vmatprep.subr.mxu0 0.0
      %1744 = vmatpush1.msra.mxu0 0.0
      %1745 = vmatprep.subr.mxu0 0.0
      %1746 = vmatpush1.msra.mxu0 0.0
      %1747 = vmatprep.subr.mxu0 0.0
      %1748 = vmatpush1.msra.mxu0 0.0
      %1749 = vmatprep.subr.mxu0 0.0
      %1750 = vmatpush1.msra.mxu0 0.0
      %1751 = vmatprep.subr.mxu0 0.0
      %1752 = vmatpush1.msra.mxu0 0.0
      %1753 = vmatprep.subr.mxu0 0.0
      %1754 = vmatpush1.msra.mxu0 0.0
      %1755 = vmatprep.subr.mxu0 0.0
      %1756 = vmatpush1.msra.mxu0 0.0
      %1757 = vmatprep.subr.mxu0 0.0
      %1758 = vmatpush1.msra.mxu0 0.0
      %1759 = vmatprep.subr.mxu0 0.0
      %1760 = vmatpush1.msra.mxu0 0.0
      %1761 = vmatprep.subr.mxu0 0.0
      %1762 = vmatpush1.msra.mxu0 0.0
      %1763 = vmatprep.subr.mxu0 0.0
      %1764 = vmatpush1.msra.mxu0 0.0
      %1765 = vmatprep.subr.mxu0 0.0
      %1766 = vmatpush1.msra.mxu0 0.0
      %1767 = vmatprep.subr.mxu0 0.0
      %1768 = vmatpush1.msra.mxu0 0.0
      %1769 = vmatprep.subr.mxu0 0.0
      %1770 = vmatpush1.msra.mxu0 0.0
      %1771 = vmatprep.subr.mxu0 0.0
      %1772 = vmatpush1.msra.mxu0 0.0
      %1773 = vmatprep.subr.mxu0 0.0
      %1774 = vmatpush1.msra.mxu0 0.0
      %1775 = vmatprep.subr.mxu0 0.0
      %1776 = vmatpush1.msra.mxu0 0.0
      %1777 = vmatprep.mubr.f32.mxu0 0.0
      %v1778 = vand.u32 %v1600, 4294901760
      %v1779 = vsub.f32 %v1600, %v1778
      %v1780 = vand.u32 %v1779, 4294901760
      %v1781 = vsub.f32 %v1779, %v1780
      %v1782 = vand.u32 %v1781, 4294901760
      %1783 = vmatmul.mubr.f32.gmra.mrb[0].mxu0 %v1782
      %v1784 = vpop.f32.mrb[0].mxu0
      %v1785 = vadd.f32 %v1596, %v1784
      %v1786 = vpop.f32.mrb[0].mxu0
      %1787 = vmatprep.mubr.f32.mxu0 0.0
      %v1788 = vand.u32 %v1603, 4294901760
      %v1789 = vsub.f32 %v1603, %v1788
      %v1790 = vand.u32 %v1789, 4294901760
      %v1791 = vsub.f32 %v1789, %v1790
      %v1792 = vand.u32 %v1791, 4294901760
      %1793 = vmatmul.mubr.f32.gmra.mrb[0].mxu0 %v1792
      %v1794 = vpop.f32.mrb[0].mxu0
      %v1795 = vadd.f32 %v1596, %v1794
      %v1796 = vpop.f32.mrb[0].mxu0
      %1797 = vmatprep.mubr.f32.mxu0 0.0
      %v1798 = vand.u32 %v1606, 4294901760
      %v1799 = vsub.f32 %v1606, %v1798
      %v1800 = vand.u32 %v1799, 4294901760
      %v1801 = vsub.f32 %v1799, %v1800
      %v1802 = vand.u32 %v1801, 4294901760
      %1803 = vmatmul.mubr.f32.gmra.mrb[0].mxu0 %v1802
      %v1804 = vpop.f32.mrb[0].mxu0
      %v1805 = vadd.f32 %v1596, %v1804
      %v1806 = vpop.f32.mrb[0].mxu0
      %1807 = vmatprep.mubr.f32.mxu0 0.0
      %v1808 = vand.u32 %v1609, 4294901760
      %v1809 = vsub.f32 %v1609, %v1808
      %v1810 = vand.u32 %v1809, 4294901760
      %v1811 = vsub.f32 %v1809, %v1810
      %v1812 = vand.u32 %v1811, 4294901760
      %1813 = vmatmul.mubr.f32.gmra.mrb[0].mxu0 %v1812
      %v1814 = vpop.f32.mrb[0].mxu0
      %v1815 = vadd.f32 %v1596, %v1814
      %v1816 = vpop.f32.mrb[0].mxu0
      %1817 = vmatprep.mubr.f32.mxu0 0.0
      %v1818 = vand.u32 %v1612, 4294901760
      %v1819 = vsub.f32 %v1612, %v1818
      %v1820 = vand.u32 %v1819, 4294901760
      %v1821 = vsub.f32 %v1819, %v1820
      %v1822 = vand.u32 %v1821, 4294901760
      %1823 = vmatmul.mubr.f32.gmra.mrb[0].mxu0 %v1822
      %v1824 = vpop.f32.mrb[0].mxu0
      %v1825 = vadd.f32 %v1596, %v1824
      %v1826 = vpop.f32.mrb[0].mxu0
      %1827 = vmatprep.mubr.f32.mxu0 0.0
      %v1828 = vand.u32 %v1615, 4294901760
      %v1829 = vsub.f32 %v1615, %v1828
      %v1830 = vand.u32 %v1829, 4294901760
      %v1831 = vsub.f32 %v1829, %v1830
      %v1832 = vand.u32 %v1831, 4294901760
      %1833 = vmatmul.mubr.f32.gmra.mrb[0].mxu0 %v1832
      %v1834 = vpop.f32.mrb[0].mxu0
      %v1835 = vadd.f32 %v1596, %v1834
      %v1836 = vpop.f32.mrb[0].mxu0
      %1837 = vmatprep.mubr.f32.mxu0 0.0
      %v1838 = vand.u32 %v1618, 4294901760
      %v1839 = vsub.f32 %v1618, %v1838
      %v1840 = vand.u32 %v1839, 4294901760
      %v1841 = vsub.f32 %v1839, %v1840
      %v1842 = vand.u32 %v1841, 4294901760
      %1843 = vmatmul.mubr.f32.gmra.mrb[0].mxu0 %v1842
      %v1844 = vpop.f32.mrb[0].mxu0
      %v1845 = vadd.f32 %v1596, %v1844
      %v1846 = vpop.f32.mrb[0].mxu0
      %1847 = vmatprep.mubr.f32.mxu0 0.0
      %v1848 = vand.u32 %v1621, 4294901760
      %v1849 = vsub.f32 %v1621, %v1848
      %v1850 = vand.u32 %v1849, 4294901760
      %v1851 = vsub.f32 %v1849, %v1850
      %v1852 = vand.u32 %v1851, 4294901760
      %1853 = vmatmul.mubr.f32.gmra.mrb[0].mxu0 %v1852
      %v1854 = vpop.f32.mrb[0].mxu0
      %v1855 = vadd.f32 %v1596, %v1854
      %v1856 = vpop.f32.mrb[0].mxu0
      %1857 = vmatprep.mubr.f32.mxu0 0.0
      %v1858 = vand.u32 %v1624, 4294901760
      %v1859 = vsub.f32 %v1624, %v1858
      %v1860 = vand.u32 %v1859, 4294901760
      %v1861 = vsub.f32 %v1859, %v1860
      %v1862 = vand.u32 %v1861, 4294901760
      %1863 = vmatmul.mubr.f32.gmra.mrb[0].mxu0 %v1862
      %v1864 = vpop.f32.mrb[0].mxu0
      %v1865 = vadd.f32 %v1596, %v1864
      %v1866 = vpop.f32.mrb[0].mxu0
      %1867 = vmatprep.mubr.f32.mxu0 0.0
      %v1868 = vand.u32 %v1627, 4294901760
      %v1869 = vsub.f32 %v1627, %v1868
      %v1870 = vand.u32 %v1869, 4294901760
      %v1871 = vsub.f32 %v1869, %v1870
      %v1872 = vand.u32 %v1871, 4294901760
      %1873 = vmatmul.mubr.f32.gmra.mrb[0].mxu0 %v1872
      %v1874 = vpop.f32.mrb[0].mxu0
      %v1875 = vadd.f32 %v1596, %v1874
      %v1876 = vpop.f32.mrb[0].mxu0
      %1877 = vmatprep.mubr.f32.mxu0 0.0
      %v1878 = vand.u32 %v1630, 4294901760
      %v1879 = vsub.f32 %v1630, %v1878
      %v1880 = vand.u32 %v1879, 4294901760
      %v1881 = vsub.f32 %v1879, %v1880
      %v1882 = vand.u32 %v1881, 4294901760
      %1883 = vmatmul.mubr.f32.gmra.mrb[0].mxu0 %v1882
      %v1884 = vpop.f32.mrb[0].mxu0
      %v1885 = vadd.f32 %v1596, %v1884
      %v1886 = vpop.f32.mrb[0].mxu0
      %1887 = vmatprep.mubr.f32.mxu0 0.0
      %v1888 = vand.u32 %v1633, 4294901760
      %v1889 = vsub.f32 %v1633, %v1888
      %v1890 = vand.u32 %v1889, 4294901760
      %v1891 = vsub.f32 %v1889, %v1890
      %v1892 = vand.u32 %v1891, 4294901760
      %1893 = vmatmul.mubr.f32.gmra.mrb[0].mxu0 %v1892
      %v1894 = vpop.f32.mrb[0].mxu0
      %v1895 = vadd.f32 %v1596, %v1894
      %v1896 = vpop.f32.mrb[0].mxu0
      %1897 = vmatprep.mubr.f32.mxu0 0.0
      %v1898 = vand.u32 %v1636, 4294901760
      %v1899 = vsub.f32 %v1636, %v1898
      %v1900 = vand.u32 %v1899, 4294901760
      %v1901 = vsub.f32 %v1899, %v1900
      %v1902 = vand.u32 %v1901, 4294901760
      %1903 = vmatmul.mubr.f32.gmra.mrb[0].mxu0 %v1902
      %v1904 = vpop.f32.mrb[0].mxu0
      %v1905 = vadd.f32 %v1596, %v1904
      %v1906 = vpop.f32.mrb[0].mxu0
      %1907 = vmatprep.mubr.f32.mxu0 0.0
      %v1908 = vand.u32 %v1639, 4294901760
      %v1909 = vsub.f32 %v1639, %v1908
      %v1910 = vand.u32 %v1909, 4294901760
      %v1911 = vsub.f32 %v1909, %v1910
      %v1912 = vand.u32 %v1911, 4294901760
      %1913 = vmatmul.mubr.f32.gmra.mrb[0].mxu0 %v1912
      %v1914 = vpop.f32.mrb[0].mxu0
      %v1915 = vadd.f32 %v1596, %v1914
      %v1916 = vpop.f32.mrb[0].mxu0
      %1917 = vmatprep.mubr.f32.mxu0 0.0
      %v1918 = vand.u32 %v1642, 4294901760
      %v1919 = vsub.f32 %v1642, %v1918
      %v1920 = vand.u32 %v1919, 4294901760
      %v1921 = vsub.f32 %v1919, %v1920
      %v1922 = vand.u32 %v1921, 4294901760
      %1923 = vmatmul.mubr.f32.gmra.mrb[0].mxu0 %v1922
      %v1924 = vpop.f32.mrb[0].mxu0
      %v1925 = vadd.f32 %v1596, %v1924
      %v1926 = vpop.f32.mrb[0].mxu0
      %1927 = vmatprep.mubr.f32.mxu0 0.0
      %v1928 = vand.u32 %v1645, 4294901760
      %v1929 = vsub.f32 %v1645, %v1928
      %v1930 = vand.u32 %v1929, 4294901760
      %v1931 = vsub.f32 %v1929, %v1930
      %v1932 = vand.u32 %v1931, 4294901760
      %1933 = vmatmul.mubr.f32.gmra.mrb[0].mxu0 %v1932
      %v1934 = vpop.f32.mrb[0].mxu0
      %v1935 = vadd.f32 %v1596, %v1934
      %v1936 = vpop.f32.mrb[0].mxu0
      %1937 = vmatprep.mubr.f32.mxu0 0.0
      %v1938 = vand.u32 %v1648, 4294901760
      %v1939 = vsub.f32 %v1648, %v1938
      %v1940 = vand.u32 %v1939, 4294901760
      %v1941 = vsub.f32 %v1939, %v1940
      %v1942 = vand.u32 %v1941, 4294901760
      %1943 = vmatmul.mubr.f32.gmra.mrb[0].mxu0 %v1942
      %v1944 = vpop.f32.mrb[0].mxu0
      %v1945 = vadd.f32 %v1596, %v1944
      %v1946 = vpop.f32.mrb[0].mxu0
      %1947 = vmatprep.mubr.f32.mxu0 0.0
      %v1948 = vand.u32 %v1651, 4294901760
      %v1949 = vsub.f32 %v1651, %v1948
      %v1950 = vand.u32 %v1949, 4294901760
      %v1951 = vsub.f32 %v1949, %v1950
      %v1952 = vand.u32 %v1951, 4294901760
      %1953 = vmatmul.mubr.f32.gmra.mrb[0].mxu0 %v1952
      %v1954 = vpop.f32.mrb[0].mxu0
      %v1955 = vadd.f32 %v1596, %v1954
      %v1956 = vpop.f32.mrb[0].mxu0
      %1957 = vmatprep.mubr.f32.mxu0 0.0
      %v1958 = vand.u32 %v1654, 4294901760
      %v1959 = vsub.f32 %v1654, %v1958
      %v1960 = vand.u32 %v1959, 4294901760
      %v1961 = vsub.f32 %v1959, %v1960
      %v1962 = vand.u32 %v1961, 4294901760
      %1963 = vmatmul.mubr.f32.gmra.mrb[0].mxu0 %v1962
      %v1964 = vpop.f32.mrb[0].mxu0
      %v1965 = vadd.f32 %v1596, %v1964
      %v1966 = vpop.f32.mrb[0].mxu0
      %1967 = vmatprep.mubr.f32.mxu0 0.0
      %v1968 = vand.u32 %v1657, 4294901760
      %v1969 = vsub.f32 %v1657, %v1968
      %v1970 = vand.u32 %v1969, 4294901760
      %v1971 = vsub.f32 %v1969, %v1970
      %v1972 = vand.u32 %v1971, 4294901760
      %1973 = vmatmul.mubr.f32.gmra.mrb[0].mxu0 %v1972
      %v1974 = vpop.f32.mrb[0].mxu0
      %v1975 = vadd.f32 %v1596, %v1974
      %v1976 = vpop.f32.mrb[0].mxu0
      %1977 = vmatprep.mubr.f32.mxu0 0.0
      %v1978 = vand.u32 %v1660, 4294901760
      %v1979 = vsub.f32 %v1660, %v1978
      %v1980 = vand.u32 %v1979, 4294901760
      %v1981 = vsub.f32 %v1979, %v1980
      %v1982 = vand.u32 %v1981, 4294901760
      %1983 = vmatmul.mubr.f32.gmra.mrb[0].mxu0 %v1982
      %v1984 = vpop.f32.mrb[0].mxu0
      %v1985 = vadd.f32 %v1596, %v1984
      %v1986 = vpop.f32.mrb[0].mxu0
      %1987 = vmatprep.mubr.f32.mxu0 0.0
      %v1988 = vand.u32 %v1663, 4294901760
      %v1989 = vsub.f32 %v1663, %v1988
      %v1990 = vand.u32 %v1989, 4294901760
      %v1991 = vsub.f32 %v1989, %v1990
      %v1992 = vand.u32 %v1991, 4294901760
      %1993 = vmatmul.mubr.f32.gmra.mrb[0].mxu0 %v1992
      %v1994 = vpop.f32.mrb[0].mxu0
      %v1995 = vadd.f32 %v1596, %v1994
      %v1996 = vpop.f32.mrb[0].mxu0
      %1997 = vmatprep.mubr.f32.mxu0 0.0
      %v1998 = vand.u32 %v1666, 4294901760
      %v1999 = vsub.f32 %v1666, %v1998
      %v2000 = vand.u32 %v1999, 4294901760
      %v2001 = vsub.f32 %v1999, %v2000
      %v2002 = vand.u32 %v2001, 4294901760
      %2003 = vmatmul.mubr.f32.gmra.mrb[0].mxu0 %v2002
      %v2004 = vpop.f32.mrb[0].mxu0
      %v2005 = vadd.f32 %v1596, %v2004
      %v2006 = vpop.f32.mrb[0].mxu0
      %2007 = vmatprep.mubr.f32.mxu0 0.0
      %v2008 = vand.u32 %v1669, 4294901760
      %v2009 = vsub.f32 %v1669, %v2008
      %v2010 = vand.u32 %v2009, 4294901760
      %v2011 = vsub.f32 %v2009, %v2010
      %v2012 = vand.u32 %v2011, 4294901760
      %2013 = vmatmul.mubr.f32.gmra.mrb[0].mxu0 %v2012
      %v2014 = vpop.f32.mrb[0].mxu0
      %v2015 = vadd.f32 %v1596, %v2014
      %v2016 = vpop.f32.mrb[0].mxu0
      %2017 = vmatprep.mubr.f32.mxu0 0.0
      %v2018 = vand.u32 %v1672, 4294901760
      %v2019 = vsub.f32 %v1672, %v2018
      %v2020 = vand.u32 %v2019, 4294901760
      %v2021 = vsub.f32 %v2019, %v2020
      %v2022 = vand.u32 %v2021, 4294901760
      %2023 = vmatmul.mubr.f32.gmra.mrb[0].mxu0 %v2022
      %v2024 = vpop.f32.mrb[0].mxu0
      %v2025 = vadd.f32 %v1596, %v2024
      %v2026 = vpop.f32.mrb[0].mxu0
      %2027 = vmatprep.mubr.f32.mxu0 0.0
      %v2028 = vand.u32 %v1675, 4294901760
      %v2029 = vsub.f32 %v1675, %v2028
      %v2030 = vand.u32 %v2029, 4294901760
      %v2031 = vsub.f32 %v2029, %v2030
      %v2032 = vand.u32 %v2031, 4294901760
      %2033 = vmatmul.mubr.f32.gmra.mrb[0].mxu0 %v2032
      %v2034 = vpop.f32.mrb[0].mxu0
      %v2035 = vadd.f32 %v1596, %v2034
      %v2036 = vpop.f32.mrb[0].mxu0
      %2037 = vmatprep.mubr.f32.mxu0 0.0
      %v2038 = vand.u32 %v1678, 4294901760
      %v2039 = vsub.f32 %v1678, %v2038
      %v2040 = vand.u32 %v2039, 4294901760
      %v2041 = vsub.f32 %v2039, %v2040
      %v2042 = vand.u32 %v2041, 4294901760
      %2043 = vmatmul.mubr.f32.gmra.mrb[0].mxu0 %v2042
      %v2044 = vpop.f32.mrb[0].mxu0
      %v2045 = vadd.f32 %v1596, %v2044
      %v2046 = vpop.f32.mrb[0].mxu0
      %2047 = vmatprep.mubr.f32.mxu0 0.0
      %v2048 = vand.u32 %v1681, 4294901760
      %v2049 = vsub.f32 %v1681, %v2048
      %v2050 = vand.u32 %v2049, 4294901760
      %v2051 = vsub.f32 %v2049, %v2050
      %v2052 = vand.u32 %v2051, 4294901760
      %2053 = vmatmul.mubr.f32.gmra.mrb[0].mxu0 %v2052
      %v2054 = vpop.f32.mrb[0].mxu0
      %v2055 = vadd.f32 %v1596, %v2054
      %v2056 = vpop.f32.mrb[0].mxu0
      %2057 = vmatprep.mubr.f32.mxu0 0.0
      %v2058 = vand.u32 %v1684, 4294901760
      %v2059 = vsub.f32 %v1684, %v2058
      %v2060 = vand.u32 %v2059, 4294901760
      %v2061 = vsub.f32 %v2059, %v2060
      %v2062 = vand.u32 %v2061, 4294901760
      %2063 = vmatmul.mubr.f32.gmra.mrb[0].mxu0 %v2062
      %v2064 = vpop.f32.mrb[0].mxu0
      %v2065 = vadd.f32 %v1596, %v2064
      %v2066 = vpop.f32.mrb[0].mxu0
      %2067 = vmatprep.mubr.f32.mxu0 0.0
      %v2068 = vand.u32 %v1687, 4294901760
      %v2069 = vsub.f32 %v1687, %v2068
      %v2070 = vand.u32 %v2069, 4294901760
      %v2071 = vsub.f32 %v2069, %v2070
      %v2072 = vand.u32 %v2071, 4294901760
      %2073 = vmatmul.mubr.f32.gmra.mrb[0].mxu0 %v2072
      %v2074 = vpop.f32.mrb[0].mxu0
      %v2075 = vadd.f32 %v1596, %v2074
      %v2076 = vpop.f32.mrb[0].mxu0
      %2077 = vmatprep.mubr.f32.mxu0 0.0
      %v2078 = vand.u32 %v1690, 4294901760
      %v2079 = vsub.f32 %v1690, %v2078
      %v2080 = vand.u32 %v2079, 4294901760
      %v2081 = vsub.f32 %v2079, %v2080
      %v2082 = vand.u32 %v2081, 4294901760
      %2083 = vmatmul.mubr.f32.gmra.mrb[0].mxu0 %v2082
      %v2084 = vpop.f32.mrb[0].mxu0
      %v2085 = vadd.f32 %v1596, %v2084
      %v2086 = vpop.f32.mrb[0].mxu0
      %2087 = vmatprep.mubr.f32.mxu0 0.0
      %v2088 = vand.u32 %v1693, 4294901760
      %v2089 = vsub.f32 %v1693, %v2088
      %v2090 = vand.u32 %v2089, 4294901760
      %v2091 = vsub.f32 %v2089, %v2090
      %v2092 = vand.u32 %v2091, 4294901760
      %2093 = vmatmul.mubr.f32.gmra.mrb[0].mxu0 %v2092
      %v2094 = vpop.f32.mrb[0].mxu0
      %v2095 = vadd.f32 %v1596, %v2094
      %v2096 = vpop.f32.mrb[0].mxu0
      %2097 = vdwg.mxu0
      %2098 = vmatprep.subr.mxu0 0.0
      %v2099 = vand.u32 %v1577, 4294901760
      %v2100 = vsub.f32 %v1577, %v2099
      %v2101 = vand.u32 %v2100, 4294901760
      %v2102 = vsub.f32 %v2100, %v2101
      %v2103 = vand.u32 %v2102, 4294901760
      %2104 = vmatpush1.msra.mxu0 %v2103
      %2105 = vmatprep.subr.mxu0 0.0
      %v2106 = vand.u32 %v1578, 4294901760
      %v2107 = vsub.f32 %v1578, %v2106
      %v2108 = vand.u32 %v2107, 4294901760
      %v2109 = vsub.f32 %v2107, %v2108
      %v2110 = vand.u32 %v2109, 4294901760
      %2111 = vmatpush1.msra.mxu0 %v2110
      %2112 = vmatprep.subr.mxu0 0.0
      %v2113 = vand.u32 %v1579, 4294901760
      %v2114 = vsub.f32 %v1579, %v2113
      %v2115 = vand.u32 %v2114, 4294901760
      %v2116 = vsub.f32 %v2114, %v2115
      %v2117 = vand.u32 %v2116, 4294901760
      %2118 = vmatpush1.msra.mxu0 %v2117
      %2119 = vmatprep.subr.mxu0 0.0
      %v2120 = vand.u32 %v1580, 4294901760
      %v2121 = vsub.f32 %v1580, %v2120
      %v2122 = vand.u32 %v2121, 4294901760
      %v2123 = vsub.f32 %v2121, %v2122
      %v2124 = vand.u32 %v2123, 4294901760
      %2125 = vmatpush1.msra.mxu0 %v2124
      %2126 = vmatprep.subr.mxu0 0.0
      %v2127 = vand.u32 %v1581, 4294901760
      %v2128 = vsub.f32 %v1581, %v2127
      %v2129 = vand.u32 %v2128, 4294901760
      %v2130 = vsub.f32 %v2128, %v2129
      %v2131 = vand.u32 %v2130, 4294901760
      %2132 = vmatpush1.msra.mxu0 %v2131
      %2133 = vmatprep.subr.mxu0 0.0
      %v2134 = vand.u32 %v1582, 4294901760
      %v2135 = vsub.f32 %v1582, %v2134
      %v2136 = vand.u32 %v2135, 4294901760
      %v2137 = vsub.f32 %v2135, %v2136
      %v2138 = vand.u32 %v2137, 4294901760
      %2139 = vmatpush1.msra.mxu0 %v2138
      %2140 = vmatprep.subr.mxu0 0.0
      %v2141 = vand.u32 %v1583, 4294901760
      %v2142 = vsub.f32 %v1583, %v2141
      %v2143 = vand.u32 %v2142, 4294901760
      %v2144 = vsub.f32 %v2142, %v2143
      %v2145 = vand.u32 %v2144, 4294901760
      %2146 = vmatpush1.msra.mxu0 %v2145
      %2147 = vmatprep.subr.mxu0 0.0
      %v2148 = vand.u32 %v1584, 4294901760
      %v2149 = vsub.f32 %v1584, %v2148
      %v2150 = vand.u32 %v2149, 4294901760
      %v2151 = vsub.f32 %v2149, %v2150
      %v2152 = vand.u32 %v2151, 4294901760
      %2153 = vmatpush1.msra.mxu0 %v2152
      %2154 = vmatprep.subr.mxu0 0.0
      %v2155 = vand.u32 %v1585, 4294901760
      %v2156 = vsub.f32 %v1585, %v2155
      %v2157 = vand.u32 %v2156, 4294901760
      %v2158 = vsub.f32 %v2156, %v2157
      %v2159 = vand.u32 %v2158, 4294901760
      %2160 = vmatpush1.msra.mxu0 %v2159
      %2161 = vmatprep.subr.mxu0 0.0
      %v2162 = vand.u32 %v1586, 4294901760
      %v2163 = vsub.f32 %v1586, %v2162
      %v2164 = vand.u32 %v2163, 4294901760
      %v2165 = vsub.f32 %v2163, %v2164
      %v2166 = vand.u32 %v2165, 4294901760
      %2167 = vmatpush1.msra.mxu0 %v2166
      %2168 = vmatprep.subr.mxu0 0.0
      %v2169 = vand.u32 %v1587, 4294901760
      %v2170 = vsub.f32 %v1587, %v2169
      %v2171 = vand.u32 %v2170, 4294901760
      %v2172 = vsub.f32 %v2170, %v2171
      %v2173 = vand.u32 %v2172, 4294901760
      %2174 = vmatpush1.msra.mxu0 %v2173
      %2175 = vmatprep.subr.mxu0 0.0
      %v2176 = vand.u32 %v1588, 4294901760
      %v2177 = vsub.f32 %v1588, %v2176
      %v2178 = vand.u32 %v2177, 4294901760
      %v2179 = vsub.f32 %v2177, %v2178
      %v2180 = vand.u32 %v2179, 4294901760
      %2181 = vmatpush1.msra.mxu0 %v2180
      %2182 = vmatprep.subr.mxu0 0.0
      %v2183 = vand.u32 %v1589, 4294901760
      %v2184 = vsub.f32 %v1589, %v2183
      %v2185 = vand.u32 %v2184, 4294901760
      %v2186 = vsub.f32 %v2184, %v2185
      %v2187 = vand.u32 %v2186, 4294901760
      %2188 = vmatpush1.msra.mxu0 %v2187
      %2189 = vmatprep.subr.mxu0 0.0
      %v2190 = vand.u32 %v1697, 4294901760
      %v2191 = vsub.f32 %v1697, %v2190
      %v2192 = vand.u32 %v2191, 4294901760
      %v2193 = vsub.f32 %v2191, %v2192
      %v2194 = vand.u32 %v2193, 4294901760
      %2195 = vmatpush1.msra.mxu0 %v2194
      %2196 = vmatprep.subr.mxu0 0.0
      %2197 = vmatpush1.msra.mxu0 0.0
      %2198 = vmatprep.subr.mxu0 0.0
      %2199 = vmatpush1.msra.mxu0 0.0
      %2200 = vmatprep.subr.mxu0 0.0
      %2201 = vmatpush1.msra.mxu0 0.0
      %2202 = vmatprep.subr.mxu0 0.0
      %2203 = vmatpush1.msra.mxu0 0.0
      %2204 = vmatprep.subr.mxu0 0.0
      %2205 = vmatpush1.msra.mxu0 0.0
      %2206 = vmatprep.subr.mxu0 0.0
      %2207 = vmatpush1.msra.mxu0 0.0
      %2208 = vmatprep.subr.mxu0 0.0
      %2209 = vmatpush1.msra.mxu0 0.0
      %2210 = vmatprep.subr.mxu0 0.0
      %2211 = vmatpush1.msra.mxu0 0.0
      %2212 = vmatprep.subr.mxu0 0.0
      %2213 = vmatpush1.msra.mxu0 0.0
      %2214 = vmatprep.subr.mxu0 0.0
      %2215 = vmatpush1.msra.mxu0 0.0
      %2216 = vmatprep.subr.mxu0 0.0
      %2217 = vmatpush1.msra.mxu0 0.0
      %2218 = vmatprep.subr.mxu0 0.0
      %2219 = vmatpush1.msra.mxu0 0.0
      %2220 = vmatprep.subr.mxu0 0.0
      %2221 = vmatpush1.msra.mxu0 0.0
      %2222 = vmatprep.subr.mxu0 0.0
      %2223 = vmatpush1.msra.mxu0 0.0
      %2224 = vmatprep.subr.mxu0 0.0
      %2225 = vmatpush1.msra.mxu0 0.0
      %2226 = vmatprep.subr.mxu0 0.0
      %2227 = vmatpush1.msra.mxu0 0.0
      %2228 = vmatprep.subr.mxu0 0.0
      %2229 = vmatpush1.msra.mxu0 0.0
      %2230 = vmatprep.subr.mxu0 0.0
      %2231 = vmatpush1.msra.mxu0 0.0
      %2232 = vmatprep.mubr.f32.mxu0 0.0
      %v2233 = vand.u32 %v1600, 4294901760
      %2234 = vmatmul.mubr.f32.gmra.mrb[0].mxu0 %v2233
      %v2235 = vpop.f32.mrb[0].mxu0
      %v2236 = vadd.f32 %v1785, %v2235
      %v2237 = vpop.f32.mrb[0].mxu0
      %2238 = vmatprep.mubr.f32.mxu0 0.0
      %v2239 = vand.u32 %v1603, 4294901760
      %2240 = vmatmul.mubr.f32.gmra.mrb[0].mxu0 %v2239
      %v2241 = vpop.f32.mrb[0].mxu0
      %v2242 = vadd.f32 %v1795, %v2241
      %v2243 = vpop.f32.mrb[0].mxu0
      %2244 = vmatprep.mubr.f32.mxu0 0.0
      %v2245 = vand.u32 %v1606, 4294901760
      %2246 = vmatmul.mubr.f32.gmra.mrb[0].mxu0 %v2245
      %v2247 = vpop.f32.mrb[0].mxu0
      %v2248 = vadd.f32 %v1805, %v2247
      %v2249 = vpop.f32.mrb[0].mxu0
      %2250 = vmatprep.mubr.f32.mxu0 0.0
      %v2251 = vand.u32 %v1609, 4294901760
      %2252 = vmatmul.mubr.f32.gmra.mrb[0].mxu0 %v2251
      %v2253 = vpop.f32.mrb[0].mxu0
      %v2254 = vadd.f32 %v1815, %v2253
      %v2255 = vpop.f32.mrb[0].mxu0
      %2256 = vmatprep.mubr.f32.mxu0 0.0
      %v2257 = vand.u32 %v1612, 4294901760
      %2258 = vmatmul.mubr.f32.gmra.mrb[0].mxu0 %v2257
      %v2259 = vpop.f32.mrb[0].mxu0
      %v2260 = vadd.f32 %v1825, %v2259
      %v2261 = vpop.f32.mrb[0].mxu0
      %2262 = vmatprep.mubr.f32.mxu0 0.0
      %v2263 = vand.u32 %v1615, 4294901760
      %2264 = vmatmul.mubr.f32.gmra.mrb[0].mxu0 %v2263
      %v2265 = vpop.f32.mrb[0].mxu0
      %v2266 = vadd.f32 %v1835, %v2265
      %v2267 = vpop.f32.mrb[0].mxu0
      %2268 = vmatprep.mubr.f32.mxu0 0.0
      %v2269 = vand.u32 %v1618, 4294901760
      %2270 = vmatmul.mubr.f32.gmra.mrb[0].mxu0 %v2269
      %v2271 = vpop.f32.mrb[0].mxu0
      %v2272 = vadd.f32 %v1845, %v2271
      %v2273 = vpop.f32.mrb[0].mxu0
      %2274 = vmatprep.mubr.f32.mxu0 0.0
      %v2275 = vand.u32 %v1621, 4294901760
      %2276 = vmatmul.mubr.f32.gmra.mrb[0].mxu0 %v2275
      %v2277 = vpop.f32.mrb[0].mxu0
      %v2278 = vadd.f32 %v1855, %v2277
      %v2279 = vpop.f32.mrb[0].mxu0
      %2280 = vmatprep.mubr.f32.mxu0 0.0
      %v2281 = vand.u32 %v1624, 4294901760
      %2282 = vmatmul.mubr.f32.gmra.mrb[0].mxu0 %v2281
      %v2283 = vpop.f32.mrb[0].mxu0
      %v2284 = vadd.f32 %v1865, %v2283
      %v2285 = vpop.f32.mrb[0].mxu0
      %2286 = vmatprep.mubr.f32.mxu0 0.0
      %v2287 = vand.u32 %v1627, 4294901760
      %2288 = vmatmul.mubr.f32.gmra.mrb[0].mxu0 %v2287
      %v2289 = vpop.f32.mrb[0].mxu0
      %v2290 = vadd.f32 %v1875, %v2289
      %v2291 = vpop.f32.mrb[0].mxu0
      %2292 = vmatprep.mubr.f32.mxu0 0.0
      %v2293 = vand.u32 %v1630, 4294901760
      %2294 = vmatmul.mubr.f32.gmra.mrb[0].mxu0 %v2293
      %v2295 = vpop.f32.mrb[0].mxu0
      %v2296 = vadd.f32 %v1885, %v2295
      %v2297 = vpop.f32.mrb[0].mxu0
      %2298 = vmatprep.mubr.f32.mxu0 0.0
      %v2299 = vand.u32 %v1633, 4294901760
      %2300 = vmatmul.mubr.f32.gmra.mrb[0].mxu0 %v2299
      %v2301 = vpop.f32.mrb[0].mxu0
      %v2302 = vadd.f32 %v1895, %v2301
      %v2303 = vpop.f32.mrb[0].mxu0
      %2304 = vmatprep.mubr.f32.mxu0 0.0
      %v2305 = vand.u32 %v1636, 4294901760
      %2306 = vmatmul.mubr.f32.gmra.mrb[0].mxu0 %v2305
      %v2307 = vpop.f32.mrb[0].mxu0
      %v2308 = vadd.f32 %v1905, %v2307
      %v2309 = vpop.f32.mrb[0].mxu0
      %2310 = vmatprep.mubr.f32.mxu0 0.0
      %v2311 = vand.u32 %v1639, 4294901760
      %2312 = vmatmul.mubr.f32.gmra.mrb[0].mxu0 %v2311
      %v2313 = vpop.f32.mrb[0].mxu0
      %v2314 = vadd.f32 %v1915, %v2313
      %v2315 = vpop.f32.mrb[0].mxu0
      %2316 = vmatprep.mubr.f32.mxu0 0.0
      %v2317 = vand.u32 %v1642, 4294901760
      %2318 = vmatmul.mubr.f32.gmra.mrb[0].mxu0 %v2317
      %v2319 = vpop.f32.mrb[0].mxu0
      %v2320 = vadd.f32 %v1925, %v2319
      %v2321 = vpop.f32.mrb[0].mxu0
      %2322 = vmatprep.mubr.f32.mxu0 0.0
      %v2323 = vand.u32 %v1645, 4294901760
      %2324 = vmatmul.mubr.f32.gmra.mrb[0].mxu0 %v2323
      %v2325 = vpop.f32.mrb[0].mxu0
      %v2326 = vadd.f32 %v1935, %v2325
      %v2327 = vpop.f32.mrb[0].mxu0
      %2328 = vmatprep.mubr.f32.mxu0 0.0
      %v2329 = vand.u32 %v1648, 4294901760
      %2330 = vmatmul.mubr.f32.gmra.mrb[0].mxu0 %v2329
      %v2331 = vpop.f32.mrb[0].mxu0
      %v2332 = vadd.f32 %v1945, %v2331
      %v2333 = vpop.f32.mrb[0].mxu0
      %2334 = vmatprep.mubr.f32.mxu0 0.0
      %v2335 = vand.u32 %v1651, 4294901760
      %2336 = vmatmul.mubr.f32.gmra.mrb[0].mxu0 %v2335
      %v2337 = vpop.f32.mrb[0].mxu0
      %v2338 = vadd.f32 %v1955, %v2337
      %v2339 = vpop.f32.mrb[0].mxu0
      %2340 = vmatprep.mubr.f32.mxu0 0.0
      %v2341 = vand.u32 %v1654, 4294901760
      %2342 = vmatmul.mubr.f32.gmra.mrb[0].mxu0 %v2341
      %v2343 = vpop.f32.mrb[0].mxu0
      %v2344 = vadd.f32 %v1965, %v2343
      %v2345 = vpop.f32.mrb[0].mxu0
      %2346 = vmatprep.mubr.f32.mxu0 0.0
      %v2347 = vand.u32 %v1657, 4294901760
      %2348 = vmatmul.mubr.f32.gmra.mrb[0].mxu0 %v2347
      %v2349 = vpop.f32.mrb[0].mxu0
      %v2350 = vadd.f32 %v1975, %v2349
      %v2351 = vpop.f32.mrb[0].mxu0
      %2352 = vmatprep.mubr.f32.mxu0 0.0
      %v2353 = vand.u32 %v1660, 4294901760
      %2354 = vmatmul.mubr.f32.gmra.mrb[0].mxu0 %v2353
      %v2355 = vpop.f32.mrb[0].mxu0
      %v2356 = vadd.f32 %v1985, %v2355
      %v2357 = vpop.f32.mrb[0].mxu0
      %2358 = vmatprep.mubr.f32.mxu0 0.0
      %v2359 = vand.u32 %v1663, 4294901760
      %2360 = vmatmul.mubr.f32.gmra.mrb[0].mxu0 %v2359
      %v2361 = vpop.f32.mrb[0].mxu0
      %v2362 = vadd.f32 %v1995, %v2361
      %v2363 = vpop.f32.mrb[0].mxu0
      %2364 = vmatprep.mubr.f32.mxu0 0.0
      %v2365 = vand.u32 %v1666, 4294901760
      %2366 = vmatmul.mubr.f32.gmra.mrb[0].mxu0 %v2365
      %v2367 = vpop.f32.mrb[0].mxu0
      %v2368 = vadd.f32 %v2005, %v2367
      %v2369 = vpop.f32.mrb[0].mxu0
      %2370 = vmatprep.mubr.f32.mxu0 0.0
      %v2371 = vand.u32 %v1669, 4294901760
      %2372 = vmatmul.mubr.f32.gmra.mrb[0].mxu0 %v2371
      %v2373 = vpop.f32.mrb[0].mxu0
      %v2374 = vadd.f32 %v2015, %v2373
      %v2375 = vpop.f32.mrb[0].mxu0
      %2376 = vmatprep.mubr.f32.mxu0 0.0
      %v2377 = vand.u32 %v1672, 4294901760
      %2378 = vmatmul.mubr.f32.gmra.mrb[0].mxu0 %v2377
      %v2379 = vpop.f32.mrb[0].mxu0
      %v2380 = vadd.f32 %v2025, %v2379
      %v2381 = vpop.f32.mrb[0].mxu0
      %2382 = vmatprep.mubr.f32.mxu0 0.0
      %v2383 = vand.u32 %v1675, 4294901760
      %2384 = vmatmul.mubr.f32.gmra.mrb[0].mxu0 %v2383
      %v2385 = vpop.f32.mrb[0].mxu0
      %v2386 = vadd.f32 %v2035, %v2385
      %v2387 = vpop.f32.mrb[0].mxu0
      %2388 = vmatprep.mubr.f32.mxu0 0.0
      %v2389 = vand.u32 %v1678, 4294901760
      %2390 = vmatmul.mubr.f32.gmra.mrb[0].mxu0 %v2389
      %v2391 = vpop.f32.mrb[0].mxu0
      %v2392 = vadd.f32 %v2045, %v2391
      %v2393 = vpop.f32.mrb[0].mxu0
      %2394 = vmatprep.mubr.f32.mxu0 0.0
      %v2395 = vand.u32 %v1681, 4294901760
      %2396 = vmatmul.mubr.f32.gmra.mrb[0].mxu0 %v2395
      %v2397 = vpop.f32.mrb[0].mxu0
      %v2398 = vadd.f32 %v2055, %v2397
      %v2399 = vpop.f32.mrb[0].mxu0
      %2400 = vmatprep.mubr.f32.mxu0 0.0
      %v2401 = vand.u32 %v1684, 4294901760
      %2402 = vmatmul.mubr.f32.gmra.mrb[0].mxu0 %v2401
      %v2403 = vpop.f32.mrb[0].mxu0
      %v2404 = vadd.f32 %v2065, %v2403
      %v2405 = vpop.f32.mrb[0].mxu0
      %2406 = vmatprep.mubr.f32.mxu0 0.0
      %v2407 = vand.u32 %v1687, 4294901760
      %2408 = vmatmul.mubr.f32.gmra.mrb[0].mxu0 %v2407
      %v2409 = vpop.f32.mrb[0].mxu0
      %v2410 = vadd.f32 %v2075, %v2409
      %v2411 = vpop.f32.mrb[0].mxu0
      %2412 = vmatprep.mubr.f32.mxu0 0.0
      %v2413 = vand.u32 %v1690, 4294901760
      %2414 = vmatmul.mubr.f32.gmra.mrb[0].mxu0 %v2413
      %v2415 = vpop.f32.mrb[0].mxu0
      %v2416 = vadd.f32 %v2085, %v2415
      %v2417 = vpop.f32.mrb[0].mxu0
      %2418 = vmatprep.mubr.f32.mxu0 0.0
      %v2419 = vand.u32 %v1693, 4294901760
      %2420 = vmatmul.mubr.f32.gmra.mrb[0].mxu0 %v2419
      %v2421 = vpop.f32.mrb[0].mxu0
      %v2422 = vadd.f32 %v2095, %v2421
      %v2423 = vpop.f32.mrb[0].mxu0
      %2424 = vdwg.mxu0
      %2425 = vmatprep.subr.mxu0 0.0
      %v2426 = vand.u32 %v1577, 4294901760
      %v2427 = vsub.f32 %v1577, %v2426
      %2428 = vmatpush1.msra.mxu0 %v2427
      %2429 = vmatprep.subr.mxu0 0.0
      %v2430 = vand.u32 %v1578, 4294901760
      %v2431 = vsub.f32 %v1578, %v2430
      %2432 = vmatpush1.msra.mxu0 %v2431
      %2433 = vmatprep.subr.mxu0 0.0
      %v2434 = vand.u32 %v1579, 4294901760
      %v2435 = vsub.f32 %v1579, %v2434
      %2436 = vmatpush1.msra.mxu0 %v2435
      %2437 = vmatprep.subr.mxu0 0.0
      %v2438 = vand.u32 %v1580, 4294901760
      %v2439 = vsub.f32 %v1580, %v2438
      %2440 = vmatpush1.msra.mxu0 %v2439
      %2441 = vmatprep.subr.mxu0 0.0
      %v2442 = vand.u32 %v1581, 4294901760
      %v2443 = vsub.f32 %v1581, %v2442
      %2444 = vmatpush1.msra.mxu0 %v2443
      %2445 = vmatprep.subr.mxu0 0.0
      %v2446 = vand.u32 %v1582, 4294901760
      %v2447 = vsub.f32 %v1582, %v2446
      %2448 = vmatpush1.msra.mxu0 %v2447
      %2449 = vmatprep.subr.mxu0 0.0
      %v2450 = vand.u32 %v1583, 4294901760
      %v2451 = vsub.f32 %v1583, %v2450
      %2452 = vmatpush1.msra.mxu0 %v2451
      %2453 = vmatprep.subr.mxu0 0.0
      %v2454 = vand.u32 %v1584, 4294901760
      %v2455 = vsub.f32 %v1584, %v2454
      %2456 = vmatpush1.msra.mxu0 %v2455
      %2457 = vmatprep.subr.mxu0 0.0
      %v2458 = vand.u32 %v1585, 4294901760
      %v2459 = vsub.f32 %v1585, %v2458
      %2460 = vmatpush1.msra.mxu0 %v2459
      %2461 = vmatprep.subr.mxu0 0.0
      %v2462 = vand.u32 %v1586, 4294901760
      %v2463 = vsub.f32 %v1586, %v2462
      %2464 = vmatpush1.msra.mxu0 %v2463
      %2465 = vmatprep.subr.mxu0 0.0
      %v2466 = vand.u32 %v1587, 4294901760
      %v2467 = vsub.f32 %v1587, %v2466
      %2468 = vmatpush1.msra.mxu0 %v2467
      %2469 = vmatprep.subr.mxu0 0.0
      %v2470 = vand.u32 %v1588, 4294901760
      %v2471 = vsub.f32 %v1588, %v2470
      %2472 = vmatpush1.msra.mxu0 %v2471
      %2473 = vmatprep.subr.mxu0 0.0
      %v2474 = vand.u32 %v1589, 4294901760
      %v2475 = vsub.f32 %v1589, %v2474
      %2476 = vmatpush1.msra.mxu0 %v2475
      %2477 = vmatprep.subr.mxu0 0.0
      %v2478 = vand.u32 %v1697, 4294901760
      %v2479 = vsub.f32 %v1697, %v2478
      %2480 = vmatpush1.msra.mxu0 %v2479
      %2481 = vmatprep.subr.mxu0 0.0
      %2482 = vmatpush1.msra.mxu0 0.0
      %2483 = vmatprep.subr.mxu0 0.0
      %2484 = vmatpush1.msra.mxu0 0.0
      %2485 = vmatprep.subr.mxu0 0.0
      %2486 = vmatpush1.msra.mxu0 0.0
      %2487 = vmatprep.subr.mxu0 0.0
      %2488 = vmatpush1.msra.mxu0 0.0
      %2489 = vmatprep.subr.mxu0 0.0
      %2490 = vmatpush1.msra.mxu0 0.0
      %2491 = vmatprep.subr.mxu0 0.0
      %2492 = vmatpush1.msra.mxu0 0.0
      %2493 = vmatprep.subr.mxu0 0.0
      %2494 = vmatpush1.msra.mxu0 0.0
      %2495 = vmatprep.subr.mxu0 0.0
      %2496 = vmatpush1.msra.mxu0 0.0
      %2497 = vmatprep.subr.mxu0 0.0
      %2498 = vmatpush1.msra.mxu0 0.0
      %2499 = vmatprep.subr.mxu0 0.0
      %2500 = vmatpush1.msra.mxu0 0.0
      %2501 = vmatprep.subr.mxu0 0.0
      %2502 = vmatpush1.msra.mxu0 0.0
      %2503 = vmatprep.subr.mxu0 0.0
      %2504 = vmatpush1.msra.mxu0 0.0
      %2505 = vmatprep.subr.mxu0 0.0
      %2506 = vmatpush1.msra.mxu0 0.0
      %2507 = vmatprep.subr.mxu0 0.0
      %2508 = vmatpush1.msra.mxu0 0.0
      %2509 = vmatprep.subr.mxu0 0.0
      %2510 = vmatpush1.msra.mxu0 0.0
      %2511 = vmatprep.subr.mxu0 0.0
      %2512 = vmatpush1.msra.mxu0 0.0
      %2513 = vmatprep.subr.mxu0 0.0
      %2514 = vmatpush1.msra.mxu0 0.0
      %2515 = vmatprep.subr.mxu0 0.0
      %2516 = vmatpush1.msra.mxu0 0.0
      %2517 = vmatprep.mubr.f32.mxu0 0.0
      %v2518 = vand.u32 %v1600, 4294901760
      %v2519 = vsub.f32 %v1600, %v2518
      %2520 = vmatmul.mubr.f32.gmra.mrb[0].mxu0 %v2519
      %v2521 = vpop.f32.mrb[0].mxu0
      %v2522 = vadd.f32 %v2236, %v2521
      %v2523 = vpop.f32.mrb[0].mxu0
      %2524 = vmatprep.mubr.f32.mxu0 0.0
      %v2525 = vand.u32 %v1603, 4294901760
      %v2526 = vsub.f32 %v1603, %v2525
      %2527 = vmatmul.mubr.f32.gmra.mrb[0].mxu0 %v2526
      %v2528 = vpop.f32.mrb[0].mxu0
      %v2529 = vadd.f32 %v2242, %v2528
      %v2530 = vpop.f32.mrb[0].mxu0
      %2531 = vmatprep.mubr.f32.mxu0 0.0
      %v2532 = vand.u32 %v1606, 4294901760
      %v2533 = vsub.f32 %v1606, %v2532
      %2534 = vmatmul.mubr.f32.gmra.mrb[0].mxu0 %v2533
      %v2535 = vpop.f32.mrb[0].mxu0
      %v2536 = vadd.f32 %v2248, %v2535
      %v2537 = vpop.f32.mrb[0].mxu0
      %2538 = vmatprep.mubr.f32.mxu0 0.0
      %v2539 = vand.u32 %v1609, 4294901760
      %v2540 = vsub.f32 %v1609, %v2539
      %2541 = vmatmul.mubr.f32.gmra.mrb[0].mxu0 %v2540
      %v2542 = vpop.f32.mrb[0].mxu0
      %v2543 = vadd.f32 %v2254, %v2542
      %v2544 = vpop.f32.mrb[0].mxu0
      %2545 = vmatprep.mubr.f32.mxu0 0.0
      %v2546 = vand.u32 %v1612, 4294901760
      %v2547 = vsub.f32 %v1612, %v2546
      %2548 = vmatmul.mubr.f32.gmra.mrb[0].mxu0 %v2547
      %v2549 = vpop.f32.mrb[0].mxu0
      %v2550 = vadd.f32 %v2260, %v2549
      %v2551 = vpop.f32.mrb[0].mxu0
      %2552 = vmatprep.mubr.f32.mxu0 0.0
      %v2553 = vand.u32 %v1615, 4294901760
      %v2554 = vsub.f32 %v1615, %v2553
      %2555 = vmatmul.mubr.f32.gmra.mrb[0].mxu0 %v2554
      %v2556 = vpop.f32.mrb[0].mxu0
      %v2557 = vadd.f32 %v2266, %v2556
      %v2558 = vpop.f32.mrb[0].mxu0
      %2559 = vmatprep.mubr.f32.mxu0 0.0
      %v2560 = vand.u32 %v1618, 4294901760
      %v2561 = vsub.f32 %v1618, %v2560
      %2562 = vmatmul.mubr.f32.gmra.mrb[0].mxu0 %v2561
      %v2563 = vpop.f32.mrb[0].mxu0
      %v2564 = vadd.f32 %v2272, %v2563
      %v2565 = vpop.f32.mrb[0].mxu0
      %2566 = vmatprep.mubr.f32.mxu0 0.0
      %v2567 = vand.u32 %v1621, 4294901760
      %v2568 = vsub.f32 %v1621, %v2567
      %2569 = vmatmul.mubr.f32.gmra.mrb[0].mxu0 %v2568
      %v2570 = vpop.f32.mrb[0].mxu0
      %v2571 = vadd.f32 %v2278, %v2570
      %v2572 = vpop.f32.mrb[0].mxu0
      %2573 = vmatprep.mubr.f32.mxu0 0.0
      %v2574 = vand.u32 %v1624, 4294901760
      %v2575 = vsub.f32 %v1624, %v2574
      %2576 = vmatmul.mubr.f32.gmra.mrb[0].mxu0 %v2575
      %v2577 = vpop.f32.mrb[0].mxu0
      %v2578 = vadd.f32 %v2284, %v2577
      %v2579 = vpop.f32.mrb[0].mxu0
      %2580 = vmatprep.mubr.f32.mxu0 0.0
      %v2581 = vand.u32 %v1627, 4294901760
      %v2582 = vsub.f32 %v1627, %v2581
      %2583 = vmatmul.mubr.f32.gmra.mrb[0].mxu0 %v2582
      %v2584 = vpop.f32.mrb[0].mxu0
      %v2585 = vadd.f32 %v2290, %v2584
      %v2586 = vpop.f32.mrb[0].mxu0
      %2587 = vmatprep.mubr.f32.mxu0 0.0
      %v2588 = vand.u32 %v1630, 4294901760
      %v2589 = vsub.f32 %v1630, %v2588
      %2590 = vmatmul.mubr.f32.gmra.mrb[0].mxu0 %v2589
      %v2591 = vpop.f32.mrb[0].mxu0
      %v2592 = vadd.f32 %v2296, %v2591
      %v2593 = vpop.f32.mrb[0].mxu0
      %2594 = vmatprep.mubr.f32.mxu0 0.0
      %v2595 = vand.u32 %v1633, 4294901760
      %v2596 = vsub.f32 %v1633, %v2595
      %2597 = vmatmul.mubr.f32.gmra.mrb[0].mxu0 %v2596
      %v2598 = vpop.f32.mrb[0].mxu0
      %v2599 = vadd.f32 %v2302, %v2598
      %v2600 = vpop.f32.mrb[0].mxu0
      %2601 = vmatprep.mubr.f32.mxu0 0.0
      %v2602 = vand.u32 %v1636, 4294901760
      %v2603 = vsub.f32 %v1636, %v2602
      %2604 = vmatmul.mubr.f32.gmra.mrb[0].mxu0 %v2603
      %v2605 = vpop.f32.mrb[0].mxu0
      %v2606 = vadd.f32 %v2308, %v2605
      %v2607 = vpop.f32.mrb[0].mxu0
      %2608 = vmatprep.mubr.f32.mxu0 0.0
      %v2609 = vand.u32 %v1639, 4294901760
      %v2610 = vsub.f32 %v1639, %v2609
      %2611 = vmatmul.mubr.f32.gmra.mrb[0].mxu0 %v2610
      %v2612 = vpop.f32.mrb[0].mxu0
      %v2613 = vadd.f32 %v2314, %v2612
      %v2614 = vpop.f32.mrb[0].mxu0
      %2615 = vmatprep.mubr.f32.mxu0 0.0
      %v2616 = vand.u32 %v1642, 4294901760
      %v2617 = vsub.f32 %v1642, %v2616
      %2618 = vmatmul.mubr.f32.gmra.mrb[0].mxu0 %v2617
      %v2619 = vpop.f32.mrb[0].mxu0
      %v2620 = vadd.f32 %v2320, %v2619
      %v2621 = vpop.f32.mrb[0].mxu0
      %2622 = vmatprep.mubr.f32.mxu0 0.0
      %v2623 = vand.u32 %v1645, 4294901760
      %v2624 = vsub.f32 %v1645, %v2623
      %2625 = vmatmul.mubr.f32.gmra.mrb[0].mxu0 %v2624
      %v2626 = vpop.f32.mrb[0].mxu0
      %v2627 = vadd.f32 %v2326, %v2626
      %v2628 = vpop.f32.mrb[0].mxu0
      %2629 = vmatprep.mubr.f32.mxu0 0.0
      %v2630 = vand.u32 %v1648, 4294901760
      %v2631 = vsub.f32 %v1648, %v2630
      %2632 = vmatmul.mubr.f32.gmra.mrb[0].mxu0 %v2631
      %v2633 = vpop.f32.mrb[0].mxu0
      %v2634 = vadd.f32 %v2332, %v2633
      %v2635 = vpop.f32.mrb[0].mxu0
      %2636 = vmatprep.mubr.f32.mxu0 0.0
      %v2637 = vand.u32 %v1651, 4294901760
      %v2638 = vsub.f32 %v1651, %v2637
      %2639 = vmatmul.mubr.f32.gmra.mrb[0].mxu0 %v2638
      %v2640 = vpop.f32.mrb[0].mxu0
      %v2641 = vadd.f32 %v2338, %v2640
      %v2642 = vpop.f32.mrb[0].mxu0
      %2643 = vmatprep.mubr.f32.mxu0 0.0
      %v2644 = vand.u32 %v1654, 4294901760
      %v2645 = vsub.f32 %v1654, %v2644
      %2646 = vmatmul.mubr.f32.gmra.mrb[0].mxu0 %v2645
      %v2647 = vpop.f32.mrb[0].mxu0
      %v2648 = vadd.f32 %v2344, %v2647
      %v2649 = vpop.f32.mrb[0].mxu0
      %2650 = vmatprep.mubr.f32.mxu0 0.0
      %v2651 = vand.u32 %v1657, 4294901760
      %v2652 = vsub.f32 %v1657, %v2651
      %2653 = vmatmul.mubr.f32.gmra.mrb[0].mxu0 %v2652
      %v2654 = vpop.f32.mrb[0].mxu0
      %v2655 = vadd.f32 %v2350, %v2654
      %v2656 = vpop.f32.mrb[0].mxu0
      %2657 = vmatprep.mubr.f32.mxu0 0.0
      %v2658 = vand.u32 %v1660, 4294901760
      %v2659 = vsub.f32 %v1660, %v2658
      %2660 = vmatmul.mubr.f32.gmra.mrb[0].mxu0 %v2659
      %v2661 = vpop.f32.mrb[0].mxu0
      %v2662 = vadd.f32 %v2356, %v2661
      %v2663 = vpop.f32.mrb[0].mxu0
      %2664 = vmatprep.mubr.f32.mxu0 0.0
      %v2665 = vand.u32 %v1663, 4294901760
      %v2666 = vsub.f32 %v1663, %v2665
      %2667 = vmatmul.mubr.f32.gmra.mrb[0].mxu0 %v2666
      %v2668 = vpop.f32.mrb[0].mxu0
      %v2669 = vadd.f32 %v2362, %v2668
      %v2670 = vpop.f32.mrb[0].mxu0
      %2671 = vmatprep.mubr.f32.mxu0 0.0
      %v2672 = vand.u32 %v1666, 4294901760
      %v2673 = vsub.f32 %v1666, %v2672
      %2674 = vmatmul.mubr.f32.gmra.mrb[0].mxu0 %v2673
      %v2675 = vpop.f32.mrb[0].mxu0
      %v2676 = vadd.f32 %v2368, %v2675
      %v2677 = vpop.f32.mrb[0].mxu0
      %2678 = vmatprep.mubr.f32.mxu0 0.0
      %v2679 = vand.u32 %v1669, 4294901760
      %v2680 = vsub.f32 %v1669, %v2679
      %2681 = vmatmul.mubr.f32.gmra.mrb[0].mxu0 %v2680
      %v2682 = vpop.f32.mrb[0].mxu0
      %v2683 = vadd.f32 %v2374, %v2682
      %v2684 = vpop.f32.mrb[0].mxu0
      %2685 = vmatprep.mubr.f32.mxu0 0.0
      %v2686 = vand.u32 %v1672, 4294901760
      %v2687 = vsub.f32 %v1672, %v2686
      %2688 = vmatmul.mubr.f32.gmra.mrb[0].mxu0 %v2687
      %v2689 = vpop.f32.mrb[0].mxu0
      %v2690 = vadd.f32 %v2380, %v2689
      %v2691 = vpop.f32.mrb[0].mxu0
      %2692 = vmatprep.mubr.f32.mxu0 0.0
      %v2693 = vand.u32 %v1675, 4294901760
      %v2694 = vsub.f32 %v1675, %v2693
      %2695 = vmatmul.mubr.f32.gmra.mrb[0].mxu0 %v2694
      %v2696 = vpop.f32.mrb[0].mxu0
      %v2697 = vadd.f32 %v2386, %v2696
      %v2698 = vpop.f32.mrb[0].mxu0
      %2699 = vmatprep.mubr.f32.mxu0 0.0
      %v2700 = vand.u32 %v1678, 4294901760
      %v2701 = vsub.f32 %v1678, %v2700
      %2702 = vmatmul.mubr.f32.gmra.mrb[0].mxu0 %v2701
      %v2703 = vpop.f32.mrb[0].mxu0
      %v2704 = vadd.f32 %v2392, %v2703
      %v2705 = vpop.f32.mrb[0].mxu0
      %2706 = vmatprep.mubr.f32.mxu0 0.0
      %v2707 = vand.u32 %v1681, 4294901760
      %v2708 = vsub.f32 %v1681, %v2707
      %2709 = vmatmul.mubr.f32.gmra.mrb[0].mxu0 %v2708
      %v2710 = vpop.f32.mrb[0].mxu0
      %v2711 = vadd.f32 %v2398, %v2710
      %v2712 = vpop.f32.mrb[0].mxu0
      %2713 = vmatprep.mubr.f32.mxu0 0.0
      %v2714 = vand.u32 %v1684, 4294901760
      %v2715 = vsub.f32 %v1684, %v2714
      %2716 = vmatmul.mubr.f32.gmra.mrb[0].mxu0 %v2715
      %v2717 = vpop.f32.mrb[0].mxu0
      %v2718 = vadd.f32 %v2404, %v2717
      %v2719 = vpop.f32.mrb[0].mxu0
      %2720 = vmatprep.mubr.f32.mxu0 0.0
      %v2721 = vand.u32 %v1687, 4294901760
      %v2722 = vsub.f32 %v1687, %v2721
      %2723 = vmatmul.mubr.f32.gmra.mrb[0].mxu0 %v2722
      %v2724 = vpop.f32.mrb[0].mxu0
      %v2725 = vadd.f32 %v2410, %v2724
      %v2726 = vpop.f32.mrb[0].mxu0
      %2727 = vmatprep.mubr.f32.mxu0 0.0
      %v2728 = vand.u32 %v1690, 4294901760
      %v2729 = vsub.f32 %v1690, %v2728
      %2730 = vmatmul.mubr.f32.gmra.mrb[0].mxu0 %v2729
      %v2731 = vpop.f32.mrb[0].mxu0
      %v2732 = vadd.f32 %v2416, %v2731
      %v2733 = vpop.f32.mrb[0].mxu0
      %2734 = vmatprep.mubr.f32.mxu0 0.0
      %v2735 = vand.u32 %v1693, 4294901760
      %v2736 = vsub.f32 %v1693, %v2735
      %2737 = vmatmul.mubr.f32.gmra.mrb[0].mxu0 %v2736
      %v2738 = vpop.f32.mrb[0].mxu0
      %v2739 = vadd.f32 %v2422, %v2738
      %v2740 = vpop.f32.mrb[0].mxu0
      %2741 = vdwg.mxu0
      %2742 = vmatprep.subr.mxu0 0.0
      %v2743 = vand.u32 %v1577, 4294901760
      %2744 = vmatpush1.msra.mxu0 %v2743
      %2745 = vmatprep.subr.mxu0 0.0
      %v2746 = vand.u32 %v1578, 4294901760
      %2747 = vmatpush1.msra.mxu0 %v2746
      %2748 = vmatprep.subr.mxu0 0.0
      %v2749 = vand.u32 %v1579, 4294901760
      %2750 = vmatpush1.msra.mxu0 %v2749
      %2751 = vmatprep.subr.mxu0 0.0
      %v2752 = vand.u32 %v1580, 4294901760
      %2753 = vmatpush1.msra.mxu0 %v2752
      %2754 = vmatprep.subr.mxu0 0.0
      %v2755 = vand.u32 %v1581, 4294901760
      %2756 = vmatpush1.msra.mxu0 %v2755
      %2757 = vmatprep.subr.mxu0 0.0
      %v2758 = vand.u32 %v1582, 4294901760
      %2759 = vmatpush1.msra.mxu0 %v2758
      %2760 = vmatprep.subr.mxu0 0.0
      %v2761 = vand.u32 %v1583, 4294901760
      %2762 = vmatpush1.msra.mxu0 %v2761
      %2763 = vmatprep.subr.mxu0 0.0
      %v2764 = vand.u32 %v1584, 4294901760
      %2765 = vmatpush1.msra.mxu0 %v2764
      %2766 = vmatprep.subr.mxu0 0.0
      %v2767 = vand.u32 %v1585, 4294901760
      %2768 = vmatpush1.msra.mxu0 %v2767
      %2769 = vmatprep.subr.mxu0 0.0
      %v2770 = vand.u32 %v1586, 4294901760
      %2771 = vmatpush1.msra.mxu0 %v2770
      %2772 = vmatprep.subr.mxu0 0.0
      %v2773 = vand.u32 %v1587, 4294901760
      %2774 = vmatpush1.msra.mxu0 %v2773
      %2775 = vmatprep.subr.mxu0 0.0
      %v2776 = vand.u32 %v1588, 4294901760
      %2777 = vmatpush1.msra.mxu0 %v2776
      %2778 = vmatprep.subr.mxu0 0.0
      %v2779 = vand.u32 %v1589, 4294901760
      %2780 = vmatpush1.msra.mxu0 %v2779
      %2781 = vmatprep.subr.mxu0 0.0
      %v2782 = vand.u32 %v1697, 4294901760
      %2783 = vmatpush1.msra.mxu0 %v2782
      %2784 = vmatprep.subr.mxu0 0.0
      %2785 = vmatpush1.msra.mxu0 0.0
      %2786 = vmatprep.subr.mxu0 0.0
      %2787 = vmatpush1.msra.mxu0 0.0
      %2788 = vmatprep.subr.mxu0 0.0
      %2789 = vmatpush1.msra.mxu0 0.0
      %2790 = vmatprep.subr.mxu0 0.0
      %2791 = vmatpush1.msra.mxu0 0.0
      %2792 = vmatprep.subr.mxu0 0.0
      %2793 = vmatpush1.msra.mxu0 0.0
      %2794 = vmatprep.subr.mxu0 0.0
      %2795 = vmatpush1.msra.mxu0 0.0
      %2796 = vmatprep.subr.mxu0 0.0
      %2797 = vmatpush1.msra.mxu0 0.0
      %2798 = vmatprep.subr.mxu0 0.0
      %2799 = vmatpush1.msra.mxu0 0.0
      %2800 = vmatprep.subr.mxu0 0.0
      %2801 = vmatpush1.msra.mxu0 0.0
      %2802 = vmatprep.subr.mxu0 0.0
      %2803 = vmatpush1.msra.mxu0 0.0
      %2804 = vmatprep.subr.mxu0 0.0
      %2805 = vmatpush1.msra.mxu0 0.0
      %2806 = vmatprep.subr.mxu0 0.0
      %2807 = vmatpush1.msra.mxu0 0.0
      %2808 = vmatprep.subr.mxu0 0.0
      %2809 = vmatpush1.msra.mxu0 0.0
      %2810 = vmatprep.subr.mxu0 0.0
      %2811 = vmatpush1.msra.mxu0 0.0
      %2812 = vmatprep.subr.mxu0 0.0
      %2813 = vmatpush1.msra.mxu0 0.0
      %2814 = vmatprep.subr.mxu0 0.0
      %2815 = vmatpush1.msra.mxu0 0.0
      %2816 = vmatprep.subr.mxu0 0.0
      %2817 = vmatpush1.msra.mxu0 0.0
      %2818 = vmatprep.subr.mxu0 0.0
      %2819 = vmatpush1.msra.mxu0 0.0
      %2820 = vmatprep.mubr.f32.mxu0 0.0
      %v2821 = vand.u32 %v1600, 4294901760
      %v2822 = vsub.f32 %v1600, %v2821
      %v2823 = vand.u32 %v2822, 4294901760
      %2824 = vmatmul.mubr.f32.gmra.mrb[0].mxu0 %v2823
      %v2825 = vpop.f32.mrb[0].mxu0
      %v2826 = vadd.f32 %v2522, %v2825
      %v2827 = vpop.f32.mrb[0].mxu0
      %2828 = vmatprep.mubr.f32.mxu0 0.0
      %v2829 = vand.u32 %v1603, 4294901760
      %v2830 = vsub.f32 %v1603, %v2829
      %v2831 = vand.u32 %v2830, 4294901760
      %2832 = vmatmul.mubr.f32.gmra.mrb[0].mxu0 %v2831
      %v2833 = vpop.f32.mrb[0].mxu0
      %v2834 = vadd.f32 %v2529, %v2833
      %v2835 = vpop.f32.mrb[0].mxu0
      %2836 = vmatprep.mubr.f32.mxu0 0.0
      %v2837 = vand.u32 %v1606, 4294901760
      %v2838 = vsub.f32 %v1606, %v2837
      %v2839 = vand.u32 %v2838, 4294901760
      %2840 = vmatmul.mubr.f32.gmra.mrb[0].mxu0 %v2839
      %v2841 = vpop.f32.mrb[0].mxu0
      %v2842 = vadd.f32 %v2536, %v2841
      %v2843 = vpop.f32.mrb[0].mxu0
      %2844 = vmatprep.mubr.f32.mxu0 0.0
      %v2845 = vand.u32 %v1609, 4294901760
      %v2846 = vsub.f32 %v1609, %v2845
      %v2847 = vand.u32 %v2846, 4294901760
      %2848 = vmatmul.mubr.f32.gmra.mrb[0].mxu0 %v2847
      %v2849 = vpop.f32.mrb[0].mxu0
      %v2850 = vadd.f32 %v2543, %v2849
      %v2851 = vpop.f32.mrb[0].mxu0
      %2852 = vmatprep.mubr.f32.mxu0 0.0
      %v2853 = vand.u32 %v1612, 4294901760
      %v2854 = vsub.f32 %v1612, %v2853
      %v2855 = vand.u32 %v2854, 4294901760
      %2856 = vmatmul.mubr.f32.gmra.mrb[0].mxu0 %v2855
      %v2857 = vpop.f32.mrb[0].mxu0
      %v2858 = vadd.f32 %v2550, %v2857
      %v2859 = vpop.f32.mrb[0].mxu0
      %2860 = vmatprep.mubr.f32.mxu0 0.0
      %v2861 = vand.u32 %v1615, 4294901760
      %v2862 = vsub.f32 %v1615, %v2861
      %v2863 = vand.u32 %v2862, 4294901760
      %2864 = vmatmul.mubr.f32.gmra.mrb[0].mxu0 %v2863
      %v2865 = vpop.f32.mrb[0].mxu0
      %v2866 = vadd.f32 %v2557, %v2865
      %v2867 = vpop.f32.mrb[0].mxu0
      %2868 = vmatprep.mubr.f32.mxu0 0.0
      %v2869 = vand.u32 %v1618, 4294901760
      %v2870 = vsub.f32 %v1618, %v2869
      %v2871 = vand.u32 %v2870, 4294901760
      %2872 = vmatmul.mubr.f32.gmra.mrb[0].mxu0 %v2871
      %v2873 = vpop.f32.mrb[0].mxu0
      %v2874 = vadd.f32 %v2564, %v2873
      %v2875 = vpop.f32.mrb[0].mxu0
      %2876 = vmatprep.mubr.f32.mxu0 0.0
      %v2877 = vand.u32 %v1621, 4294901760
      %v2878 = vsub.f32 %v1621, %v2877
      %v2879 = vand.u32 %v2878, 4294901760
      %2880 = vmatmul.mubr.f32.gmra.mrb[0].mxu0 %v2879
      %v2881 = vpop.f32.mrb[0].mxu0
      %v2882 = vadd.f32 %v2571, %v2881
      %v2883 = vpop.f32.mrb[0].mxu0
      %2884 = vmatprep.mubr.f32.mxu0 0.0
      %v2885 = vand.u32 %v1624, 4294901760
      %v2886 = vsub.f32 %v1624, %v2885
      %v2887 = vand.u32 %v2886, 4294901760
      %2888 = vmatmul.mubr.f32.gmra.mrb[0].mxu0 %v2887
      %v2889 = vpop.f32.mrb[0].mxu0
      %v2890 = vadd.f32 %v2578, %v2889
      %v2891 = vpop.f32.mrb[0].mxu0
      %2892 = vmatprep.mubr.f32.mxu0 0.0
      %v2893 = vand.u32 %v1627, 4294901760
      %v2894 = vsub.f32 %v1627, %v2893
      %v2895 = vand.u32 %v2894, 4294901760
      %2896 = vmatmul.mubr.f32.gmra.mrb[0].mxu0 %v2895
      %v2897 = vpop.f32.mrb[0].mxu0
      %v2898 = vadd.f32 %v2585, %v2897
      %v2899 = vpop.f32.mrb[0].mxu0
      %2900 = vmatprep.mubr.f32.mxu0 0.0
      %v2901 = vand.u32 %v1630, 4294901760
      %v2902 = vsub.f32 %v1630, %v2901
      %v2903 = vand.u32 %v2902, 4294901760
      %2904 = vmatmul.mubr.f32.gmra.mrb[0].mxu0 %v2903
      %v2905 = vpop.f32.mrb[0].mxu0
      %v2906 = vadd.f32 %v2592, %v2905
      %v2907 = vpop.f32.mrb[0].mxu0
      %2908 = vmatprep.mubr.f32.mxu0 0.0
      %v2909 = vand.u32 %v1633, 4294901760
      %v2910 = vsub.f32 %v1633, %v2909
      %v2911 = vand.u32 %v2910, 4294901760
      %2912 = vmatmul.mubr.f32.gmra.mrb[0].mxu0 %v2911
      %v2913 = vpop.f32.mrb[0].mxu0
      %v2914 = vadd.f32 %v2599, %v2913
      %v2915 = vpop.f32.mrb[0].mxu0
      %2916 = vmatprep.mubr.f32.mxu0 0.0
      %v2917 = vand.u32 %v1636, 4294901760
      %v2918 = vsub.f32 %v1636, %v2917
      %v2919 = vand.u32 %v2918, 4294901760
      %2920 = vmatmul.mubr.f32.gmra.mrb[0].mxu0 %v2919
      %v2921 = vpop.f32.mrb[0].mxu0
      %v2922 = vadd.f32 %v2606, %v2921
      %v2923 = vpop.f32.mrb[0].mxu0
      %2924 = vmatprep.mubr.f32.mxu0 0.0
      %v2925 = vand.u32 %v1639, 4294901760
      %v2926 = vsub.f32 %v1639, %v2925
      %v2927 = vand.u32 %v2926, 4294901760
      %2928 = vmatmul.mubr.f32.gmra.mrb[0].mxu0 %v2927
      %v2929 = vpop.f32.mrb[0].mxu0
      %v2930 = vadd.f32 %v2613, %v2929
      %v2931 = vpop.f32.mrb[0].mxu0
      %2932 = vmatprep.mubr.f32.mxu0 0.0
      %v2933 = vand.u32 %v1642, 4294901760
      %v2934 = vsub.f32 %v1642, %v2933
      %v2935 = vand.u32 %v2934, 4294901760
      %2936 = vmatmul.mubr.f32.gmra.mrb[0].mxu0 %v2935
      %v2937 = vpop.f32.mrb[0].mxu0
      %v2938 = vadd.f32 %v2620, %v2937
      %v2939 = vpop.f32.mrb[0].mxu0
      %2940 = vmatprep.mubr.f32.mxu0 0.0
      %v2941 = vand.u32 %v1645, 4294901760
      %v2942 = vsub.f32 %v1645, %v2941
      %v2943 = vand.u32 %v2942, 4294901760
      %2944 = vmatmul.mubr.f32.gmra.mrb[0].mxu0 %v2943
      %v2945 = vpop.f32.mrb[0].mxu0
      %v2946 = vadd.f32 %v2627, %v2945
      %v2947 = vpop.f32.mrb[0].mxu0
      %2948 = vmatprep.mubr.f32.mxu0 0.0
      %v2949 = vand.u32 %v1648, 4294901760
      %v2950 = vsub.f32 %v1648, %v2949
      %v2951 = vand.u32 %v2950, 4294901760
      %2952 = vmatmul.mubr.f32.gmra.mrb[0].mxu0 %v2951
      %v2953 = vpop.f32.mrb[0].mxu0
      %v2954 = vadd.f32 %v2634, %v2953
      %v2955 = vpop.f32.mrb[0].mxu0
      %2956 = vmatprep.mubr.f32.mxu0 0.0
      %v2957 = vand.u32 %v1651, 4294901760
      %v2958 = vsub.f32 %v1651, %v2957
      %v2959 = vand.u32 %v2958, 4294901760
      %2960 = vmatmul.mubr.f32.gmra.mrb[0].mxu0 %v2959
      %v2961 = vpop.f32.mrb[0].mxu0
      %v2962 = vadd.f32 %v2641, %v2961
      %v2963 = vpop.f32.mrb[0].mxu0
      %2964 = vmatprep.mubr.f32.mxu0 0.0
      %v2965 = vand.u32 %v1654, 4294901760
      %v2966 = vsub.f32 %v1654, %v2965
      %v2967 = vand.u32 %v2966, 4294901760
      %2968 = vmatmul.mubr.f32.gmra.mrb[0].mxu0 %v2967
      %v2969 = vpop.f32.mrb[0].mxu0
      %v2970 = vadd.f32 %v2648, %v2969
      %v2971 = vpop.f32.mrb[0].mxu0
      %2972 = vmatprep.mubr.f32.mxu0 0.0
      %v2973 = vand.u32 %v1657, 4294901760
      %v2974 = vsub.f32 %v1657, %v2973
      %v2975 = vand.u32 %v2974, 4294901760
      %2976 = vmatmul.mubr.f32.gmra.mrb[0].mxu0 %v2975
      %v2977 = vpop.f32.mrb[0].mxu0
      %v2978 = vadd.f32 %v2655, %v2977
      %v2979 = vpop.f32.mrb[0].mxu0
      %2980 = vmatprep.mubr.f32.mxu0 0.0
      %v2981 = vand.u32 %v1660, 4294901760
      %v2982 = vsub.f32 %v1660, %v2981
      %v2983 = vand.u32 %v2982, 4294901760
      %2984 = vmatmul.mubr.f32.gmra.mrb[0].mxu0 %v2983
      %v2985 = vpop.f32.mrb[0].mxu0
      %v2986 = vadd.f32 %v2662, %v2985
      %v2987 = vpop.f32.mrb[0].mxu0
      %2988 = vmatprep.mubr.f32.mxu0 0.0
      %v2989 = vand.u32 %v1663, 4294901760
      %v2990 = vsub.f32 %v1663, %v2989
      %v2991 = vand.u32 %v2990, 4294901760
      %2992 = vmatmul.mubr.f32.gmra.mrb[0].mxu0 %v2991
      %v2993 = vpop.f32.mrb[0].mxu0
      %v2994 = vadd.f32 %v2669, %v2993
      %v2995 = vpop.f32.mrb[0].mxu0
      %2996 = vmatprep.mubr.f32.mxu0 0.0
      %v2997 = vand.u32 %v1666, 4294901760
      %v2998 = vsub.f32 %v1666, %v2997
      %v2999 = vand.u32 %v2998, 4294901760
      %3000 = vmatmul.mubr.f32.gmra.mrb[0].mxu0 %v2999
      %v3001 = vpop.f32.mrb[0].mxu0
      %v3002 = vadd.f32 %v2676, %v3001
      %v3003 = vpop.f32.mrb[0].mxu0
      %3004 = vmatprep.mubr.f32.mxu0 0.0
      %v3005 = vand.u32 %v1669, 4294901760
      %v3006 = vsub.f32 %v1669, %v3005
      %v3007 = vand.u32 %v3006, 4294901760
      %3008 = vmatmul.mubr.f32.gmra.mrb[0].mxu0 %v3007
      %v3009 = vpop.f32.mrb[0].mxu0
      %v3010 = vadd.f32 %v2683, %v3009
      %v3011 = vpop.f32.mrb[0].mxu0
      %3012 = vmatprep.mubr.f32.mxu0 0.0
      %v3013 = vand.u32 %v1672, 4294901760
      %v3014 = vsub.f32 %v1672, %v3013
      %v3015 = vand.u32 %v3014, 4294901760
      %3016 = vmatmul.mubr.f32.gmra.mrb[0].mxu0 %v3015
      %v3017 = vpop.f32.mrb[0].mxu0
      %v3018 = vadd.f32 %v2690, %v3017
      %v3019 = vpop.f32.mrb[0].mxu0
      %3020 = vmatprep.mubr.f32.mxu0 0.0
      %v3021 = vand.u32 %v1675, 4294901760
      %v3022 = vsub.f32 %v1675, %v3021
      %v3023 = vand.u32 %v3022, 4294901760
      %3024 = vmatmul.mubr.f32.gmra.mrb[0].mxu0 %v3023
      %v3025 = vpop.f32.mrb[0].mxu0
      %v3026 = vadd.f32 %v2697, %v3025
      %v3027 = vpop.f32.mrb[0].mxu0
      %3028 = vmatprep.mubr.f32.mxu0 0.0
      %v3029 = vand.u32 %v1678, 4294901760
      %v3030 = vsub.f32 %v1678, %v3029
      %v3031 = vand.u32 %v3030, 4294901760
      %3032 = vmatmul.mubr.f32.gmra.mrb[0].mxu0 %v3031
      %v3033 = vpop.f32.mrb[0].mxu0
      %v3034 = vadd.f32 %v2704, %v3033
      %v3035 = vpop.f32.mrb[0].mxu0
      %3036 = vmatprep.mubr.f32.mxu0 0.0
      %v3037 = vand.u32 %v1681, 4294901760
      %v3038 = vsub.f32 %v1681, %v3037
      %v3039 = vand.u32 %v3038, 4294901760
      %3040 = vmatmul.mubr.f32.gmra.mrb[0].mxu0 %v3039
      %v3041 = vpop.f32.mrb[0].mxu0
      %v3042 = vadd.f32 %v2711, %v3041
      %v3043 = vpop.f32.mrb[0].mxu0
      %3044 = vmatprep.mubr.f32.mxu0 0.0
      %v3045 = vand.u32 %v1684, 4294901760
      %v3046 = vsub.f32 %v1684, %v3045
      %v3047 = vand.u32 %v3046, 4294901760
      %3048 = vmatmul.mubr.f32.gmra.mrb[0].mxu0 %v3047
      %v3049 = vpop.f32.mrb[0].mxu0
      %v3050 = vadd.f32 %v2718, %v3049
      %v3051 = vpop.f32.mrb[0].mxu0
      %3052 = vmatprep.mubr.f32.mxu0 0.0
      %v3053 = vand.u32 %v1687, 4294901760
      %v3054 = vsub.f32 %v1687, %v3053
      %v3055 = vand.u32 %v3054, 4294901760
      %3056 = vmatmul.mubr.f32.gmra.mrb[0].mxu0 %v3055
      %v3057 = vpop.f32.mrb[0].mxu0
      %v3058 = vadd.f32 %v2725, %v3057
      %v3059 = vpop.f32.mrb[0].mxu0
      %3060 = vmatprep.mubr.f32.mxu0 0.0
      %v3061 = vand.u32 %v1690, 4294901760
      %v3062 = vsub.f32 %v1690, %v3061
      %v3063 = vand.u32 %v3062, 4294901760
      %3064 = vmatmul.mubr.f32.gmra.mrb[0].mxu0 %v3063
      %v3065 = vpop.f32.mrb[0].mxu0
      %v3066 = vadd.f32 %v2732, %v3065
      %v3067 = vpop.f32.mrb[0].mxu0
      %3068 = vmatprep.mubr.f32.mxu0 0.0
      %v3069 = vand.u32 %v1693, 4294901760
      %v3070 = vsub.f32 %v1693, %v3069
      %v3071 = vand.u32 %v3070, 4294901760
      %3072 = vmatmul.mubr.f32.gmra.mrb[0].mxu0 %v3071
      %v3073 = vpop.f32.mrb[0].mxu0
      %v3074 = vadd.f32 %v2739, %v3073
      %v3075 = vpop.f32.mrb[0].mxu0
      %3076 = vdwg.mxu0
      %3077 = vmatprep.subr.mxu0 0.0
      %v3078 = vand.u32 %v1577, 4294901760
      %v3079 = vsub.f32 %v1577, %v3078
      %v3080 = vand.u32 %v3079, 4294901760
      %3081 = vmatpush1.msra.mxu0 %v3080
      %3082 = vmatprep.subr.mxu0 0.0
      %v3083 = vand.u32 %v1578, 4294901760
      %v3084 = vsub.f32 %v1578, %v3083
      %v3085 = vand.u32 %v3084, 4294901760
      %3086 = vmatpush1.msra.mxu0 %v3085
      %3087 = vmatprep.subr.mxu0 0.0
      %v3088 = vand.u32 %v1579, 4294901760
      %v3089 = vsub.f32 %v1579, %v3088
      %v3090 = vand.u32 %v3089, 4294901760
      %3091 = vmatpush1.msra.mxu0 %v3090
      %3092 = vmatprep.subr.mxu0 0.0
      %v3093 = vand.u32 %v1580, 4294901760
      %v3094 = vsub.f32 %v1580, %v3093
      %v3095 = vand.u32 %v3094, 4294901760
      %3096 = vmatpush1.msra.mxu0 %v3095
      %3097 = vmatprep.subr.mxu0 0.0
      %v3098 = vand.u32 %v1581, 4294901760
      %v3099 = vsub.f32 %v1581, %v3098
      %v3100 = vand.u32 %v3099, 4294901760
      %3101 = vmatpush1.msra.mxu0 %v3100
      %3102 = vmatprep.subr.mxu0 0.0
      %v3103 = vand.u32 %v1582, 4294901760
      %v3104 = vsub.f32 %v1582, %v3103
      %v3105 = vand.u32 %v3104, 4294901760
      %3106 = vmatpush1.msra.mxu0 %v3105
      %3107 = vmatprep.subr.mxu0 0.0
      %v3108 = vand.u32 %v1583, 4294901760
      %v3109 = vsub.f32 %v1583, %v3108
      %v3110 = vand.u32 %v3109, 4294901760
      %3111 = vmatpush1.msra.mxu0 %v3110
      %3112 = vmatprep.subr.mxu0 0.0
      %v3113 = vand.u32 %v1584, 4294901760
      %v3114 = vsub.f32 %v1584, %v3113
      %v3115 = vand.u32 %v3114, 4294901760
      %3116 = vmatpush1.msra.mxu0 %v3115
      %3117 = vmatprep.subr.mxu0 0.0
      %v3118 = vand.u32 %v1585, 4294901760
      %v3119 = vsub.f32 %v1585, %v3118
      %v3120 = vand.u32 %v3119, 4294901760
      %3121 = vmatpush1.msra.mxu0 %v3120
      %3122 = vmatprep.subr.mxu0 0.0
      %v3123 = vand.u32 %v1586, 4294901760
      %v3124 = vsub.f32 %v1586, %v3123
      %v3125 = vand.u32 %v3124, 4294901760
      %3126 = vmatpush1.msra.mxu0 %v3125
      %3127 = vmatprep.subr.mxu0 0.0
      %v3128 = vand.u32 %v1587, 4294901760
      %v3129 = vsub.f32 %v1587, %v3128
      %v3130 = vand.u32 %v3129, 4294901760
      %3131 = vmatpush1.msra.mxu0 %v3130
      %3132 = vmatprep.subr.mxu0 0.0
      %v3133 = vand.u32 %v1588, 4294901760
      %v3134 = vsub.f32 %v1588, %v3133
      %v3135 = vand.u32 %v3134, 4294901760
      %3136 = vmatpush1.msra.mxu0 %v3135
      %3137 = vmatprep.subr.mxu0 0.0
      %v3138 = vand.u32 %v1589, 4294901760
      %v3139 = vsub.f32 %v1589, %v3138
      %v3140 = vand.u32 %v3139, 4294901760
      %3141 = vmatpush1.msra.mxu0 %v3140
      %3142 = vmatprep.subr.mxu0 0.0
      %v3143 = vand.u32 %v1697, 4294901760
      %v3144 = vsub.f32 %v1697, %v3143
      %v3145 = vand.u32 %v3144, 4294901760
      %3146 = vmatpush1.msra.mxu0 %v3145
      %3147 = vmatprep.subr.mxu0 0.0
      %3148 = vmatpush1.msra.mxu0 0.0
      %3149 = vmatprep.subr.mxu0 0.0
      %3150 = vmatpush1.msra.mxu0 0.0
      %3151 = vmatprep.subr.mxu0 0.0
      %3152 = vmatpush1.msra.mxu0 0.0
      %3153 = vmatprep.subr.mxu0 0.0
      %3154 = vmatpush1.msra.mxu0 0.0
      %3155 = vmatprep.subr.mxu0 0.0
      %3156 = vmatpush1.msra.mxu0 0.0
      %3157 = vmatprep.subr.mxu0 0.0
      %3158 = vmatpush1.msra.mxu0 0.0
      %3159 = vmatprep.subr.mxu0 0.0
      %3160 = vmatpush1.msra.mxu0 0.0
      %3161 = vmatprep.subr.mxu0 0.0
      %3162 = vmatpush1.msra.mxu0 0.0
      %3163 = vmatprep.subr.mxu0 0.0
      %3164 = vmatpush1.msra.mxu0 0.0
      %3165 = vmatprep.subr.mxu0 0.0
      %3166 = vmatpush1.msra.mxu0 0.0
      %3167 = vmatprep.subr.mxu0 0.0
      %3168 = vmatpush1.msra.mxu0 0.0
      %3169 = vmatprep.subr.mxu0 0.0
      %3170 = vmatpush1.msra.mxu0 0.0
      %3171 = vmatprep.subr.mxu0 0.0
      %3172 = vmatpush1.msra.mxu0 0.0
      %3173 = vmatprep.subr.mxu0 0.0
      %3174 = vmatpush1.msra.mxu0 0.0
      %3175 = vmatprep.subr.mxu0 0.0
      %3176 = vmatpush1.msra.mxu0 0.0
      %3177 = vmatprep.subr.mxu0 0.0
      %3178 = vmatpush1.msra.mxu0 0.0
      %3179 = vmatprep.subr.mxu0 0.0
      %3180 = vmatpush1.msra.mxu0 0.0
      %3181 = vmatprep.subr.mxu0 0.0
      %3182 = vmatpush1.msra.mxu0 0.0
      %3183 = vmatprep.mubr.f32.mxu0 0.0
      %v3184 = vand.u32 %v1600, 4294901760
      %3185 = vmatmul.mubr.f32.gmra.mrb[0].mxu0 %v3184
      %v3186 = vpop.f32.mrb[0].mxu0
      %v3187 = vadd.f32 %v2826, %v3186
      %v3188 = vpop.f32.mrb[0].mxu0
      %3189 = vmatprep.mubr.f32.mxu0 0.0
      %v3190 = vand.u32 %v1603, 4294901760
      %3191 = vmatmul.mubr.f32.gmra.mrb[0].mxu0 %v3190
      %v3192 = vpop.f32.mrb[0].mxu0
      %v3193 = vadd.f32 %v2834, %v3192
      %v3194 = vpop.f32.mrb[0].mxu0
      %3195 = vmatprep.mubr.f32.mxu0 0.0
      %v3196 = vand.u32 %v1606, 4294901760
      %3197 = vmatmul.mubr.f32.gmra.mrb[0].mxu0 %v3196
      %v3198 = vpop.f32.mrb[0].mxu0
      %v3199 = vadd.f32 %v2842, %v3198
      %v3200 = vpop.f32.mrb[0].mxu0
      %3201 = vmatprep.mubr.f32.mxu0 0.0
      %v3202 = vand.u32 %v1609, 4294901760
      %3203 = vmatmul.mubr.f32.gmra.mrb[0].mxu0 %v3202
      %v3204 = vpop.f32.mrb[0].mxu0
      %v3205 = vadd.f32 %v2850, %v3204
      %v3206 = vpop.f32.mrb[0].mxu0
      %3207 = vmatprep.mubr.f32.mxu0 0.0
      %v3208 = vand.u32 %v1612, 4294901760
      %3209 = vmatmul.mubr.f32.gmra.mrb[0].mxu0 %v3208
      %v3210 = vpop.f32.mrb[0].mxu0
      %v3211 = vadd.f32 %v2858, %v3210
      %v3212 = vpop.f32.mrb[0].mxu0
      %3213 = vmatprep.mubr.f32.mxu0 0.0
      %v3214 = vand.u32 %v1615, 4294901760
      %3215 = vmatmul.mubr.f32.gmra.mrb[0].mxu0 %v3214
      %v3216 = vpop.f32.mrb[0].mxu0
      %v3217 = vadd.f32 %v2866, %v3216
      %v3218 = vpop.f32.mrb[0].mxu0
      %3219 = vmatprep.mubr.f32.mxu0 0.0
      %v3220 = vand.u32 %v1618, 4294901760
      %3221 = vmatmul.mubr.f32.gmra.mrb[0].mxu0 %v3220
      %v3222 = vpop.f32.mrb[0].mxu0
      %v3223 = vadd.f32 %v2874, %v3222
      %v3224 = vpop.f32.mrb[0].mxu0
      %3225 = vmatprep.mubr.f32.mxu0 0.0
      %v3226 = vand.u32 %v1621, 4294901760
      %3227 = vmatmul.mubr.f32.gmra.mrb[0].mxu0 %v3226
      %v3228 = vpop.f32.mrb[0].mxu0
      %v3229 = vadd.f32 %v2882, %v3228
      %v3230 = vpop.f32.mrb[0].mxu0
      %3231 = vmatprep.mubr.f32.mxu0 0.0
      %v3232 = vand.u32 %v1624, 4294901760
      %3233 = vmatmul.mubr.f32.gmra.mrb[0].mxu0 %v3232
      %v3234 = vpop.f32.mrb[0].mxu0
      %v3235 = vadd.f32 %v2890, %v3234
      %v3236 = vpop.f32.mrb[0].mxu0
      %3237 = vmatprep.mubr.f32.mxu0 0.0
      %v3238 = vand.u32 %v1627, 4294901760
      %3239 = vmatmul.mubr.f32.gmra.mrb[0].mxu0 %v3238
      %v3240 = vpop.f32.mrb[0].mxu0
      %v3241 = vadd.f32 %v2898, %v3240
      %v3242 = vpop.f32.mrb[0].mxu0
      %3243 = vmatprep.mubr.f32.mxu0 0.0
      %v3244 = vand.u32 %v1630, 4294901760
      %3245 = vmatmul.mubr.f32.gmra.mrb[0].mxu0 %v3244
      %v3246 = vpop.f32.mrb[0].mxu0
      %v3247 = vadd.f32 %v2906, %v3246
      %v3248 = vpop.f32.mrb[0].mxu0
      %3249 = vmatprep.mubr.f32.mxu0 0.0
      %v3250 = vand.u32 %v1633, 4294901760
      %3251 = vmatmul.mubr.f32.gmra.mrb[0].mxu0 %v3250
      %v3252 = vpop.f32.mrb[0].mxu0
      %v3253 = vadd.f32 %v2914, %v3252
      %v3254 = vpop.f32.mrb[0].mxu0
      %3255 = vmatprep.mubr.f32.mxu0 0.0
      %v3256 = vand.u32 %v1636, 4294901760
      %3257 = vmatmul.mubr.f32.gmra.mrb[0].mxu0 %v3256
      %v3258 = vpop.f32.mrb[0].mxu0
      %v3259 = vadd.f32 %v2922, %v3258
      %v3260 = vpop.f32.mrb[0].mxu0
      %3261 = vmatprep.mubr.f32.mxu0 0.0
      %v3262 = vand.u32 %v1639, 4294901760
      %3263 = vmatmul.mubr.f32.gmra.mrb[0].mxu0 %v3262
      %v3264 = vpop.f32.mrb[0].mxu0
      %v3265 = vadd.f32 %v2930, %v3264
      %v3266 = vpop.f32.mrb[0].mxu0
      %3267 = vmatprep.mubr.f32.mxu0 0.0
      %v3268 = vand.u32 %v1642, 4294901760
      %3269 = vmatmul.mubr.f32.gmra.mrb[0].mxu0 %v3268
      %v3270 = vpop.f32.mrb[0].mxu0
      %v3271 = vadd.f32 %v2938, %v3270
      %v3272 = vpop.f32.mrb[0].mxu0
      %3273 = vmatprep.mubr.f32.mxu0 0.0
      %v3274 = vand.u32 %v1645, 4294901760
      %3275 = vmatmul.mubr.f32.gmra.mrb[0].mxu0 %v3274
      %v3276 = vpop.f32.mrb[0].mxu0
      %v3277 = vadd.f32 %v2946, %v3276
      %v3278 = vpop.f32.mrb[0].mxu0
      %3279 = vmatprep.mubr.f32.mxu0 0.0
      %v3280 = vand.u32 %v1648, 4294901760
      %3281 = vmatmul.mubr.f32.gmra.mrb[0].mxu0 %v3280
      %v3282 = vpop.f32.mrb[0].mxu0
      %v3283 = vadd.f32 %v2954, %v3282
      %v3284 = vpop.f32.mrb[0].mxu0
      %3285 = vmatprep.mubr.f32.mxu0 0.0
      %v3286 = vand.u32 %v1651, 4294901760
      %3287 = vmatmul.mubr.f32.gmra.mrb[0].mxu0 %v3286
      %v3288 = vpop.f32.mrb[0].mxu0
      %v3289 = vadd.f32 %v2962, %v3288
      %v3290 = vpop.f32.mrb[0].mxu0
      %3291 = vmatprep.mubr.f32.mxu0 0.0
      %v3292 = vand.u32 %v1654, 4294901760
      %3293 = vmatmul.mubr.f32.gmra.mrb[0].mxu0 %v3292
      %v3294 = vpop.f32.mrb[0].mxu0
      %v3295 = vadd.f32 %v2970, %v3294
      %v3296 = vpop.f32.mrb[0].mxu0
      %3297 = vmatprep.mubr.f32.mxu0 0.0
      %v3298 = vand.u32 %v1657, 4294901760
      %3299 = vmatmul.mubr.f32.gmra.mrb[0].mxu0 %v3298
      %v3300 = vpop.f32.mrb[0].mxu0
      %v3301 = vadd.f32 %v2978, %v3300
      %v3302 = vpop.f32.mrb[0].mxu0
      %3303 = vmatprep.mubr.f32.mxu0 0.0
      %v3304 = vand.u32 %v1660, 4294901760
      %3305 = vmatmul.mubr.f32.gmra.mrb[0].mxu0 %v3304
      %v3306 = vpop.f32.mrb[0].mxu0
      %v3307 = vadd.f32 %v2986, %v3306
      %v3308 = vpop.f32.mrb[0].mxu0
      %3309 = vmatprep.mubr.f32.mxu0 0.0
      %v3310 = vand.u32 %v1663, 4294901760
      %3311 = vmatmul.mubr.f32.gmra.mrb[0].mxu0 %v3310
      %v3312 = vpop.f32.mrb[0].mxu0
      %v3313 = vadd.f32 %v2994, %v3312
      %v3314 = vpop.f32.mrb[0].mxu0
      %3315 = vmatprep.mubr.f32.mxu0 0.0
      %v3316 = vand.u32 %v1666, 4294901760
      %3317 = vmatmul.mubr.f32.gmra.mrb[0].mxu0 %v3316
      %v3318 = vpop.f32.mrb[0].mxu0
      %v3319 = vadd.f32 %v3002, %v3318
      %v3320 = vpop.f32.mrb[0].mxu0
      %3321 = vmatprep.mubr.f32.mxu0 0.0
      %v3322 = vand.u32 %v1669, 4294901760
      %3323 = vmatmul.mubr.f32.gmra.mrb[0].mxu0 %v3322
      %v3324 = vpop.f32.mrb[0].mxu0
      %v3325 = vadd.f32 %v3010, %v3324
      %v3326 = vpop.f32.mrb[0].mxu0
      %3327 = vmatprep.mubr.f32.mxu0 0.0
      %v3328 = vand.u32 %v1672, 4294901760
      %3329 = vmatmul.mubr.f32.gmra.mrb[0].mxu0 %v3328
      %v3330 = vpop.f32.mrb[0].mxu0
      %v3331 = vadd.f32 %v3018, %v3330
      %v3332 = vpop.f32.mrb[0].mxu0
      %3333 = vmatprep.mubr.f32.mxu0 0.0
      %v3334 = vand.u32 %v1675, 4294901760
      %3335 = vmatmul.mubr.f32.gmra.mrb[0].mxu0 %v3334
      %v3336 = vpop.f32.mrb[0].mxu0
      %v3337 = vadd.f32 %v3026, %v3336
      %v3338 = vpop.f32.mrb[0].mxu0
      %3339 = vmatprep.mubr.f32.mxu0 0.0
      %v3340 = vand.u32 %v1678, 4294901760
      %3341 = vmatmul.mubr.f32.gmra.mrb[0].mxu0 %v3340
      %v3342 = vpop.f32.mrb[0].mxu0
      %v3343 = vadd.f32 %v3034, %v3342
      %v3344 = vpop.f32.mrb[0].mxu0
      %3345 = vmatprep.mubr.f32.mxu0 0.0
      %v3346 = vand.u32 %v1681, 4294901760
      %3347 = vmatmul.mubr.f32.gmra.mrb[0].mxu0 %v3346
      %v3348 = vpop.f32.mrb[0].mxu0
      %v3349 = vadd.f32 %v3042, %v3348
      %v3350 = vpop.f32.mrb[0].mxu0
      %3351 = vmatprep.mubr.f32.mxu0 0.0
      %v3352 = vand.u32 %v1684, 4294901760
      %3353 = vmatmul.mubr.f32.gmra.mrb[0].mxu0 %v3352
      %v3354 = vpop.f32.mrb[0].mxu0
      %v3355 = vadd.f32 %v3050, %v3354
      %v3356 = vpop.f32.mrb[0].mxu0
      %3357 = vmatprep.mubr.f32.mxu0 0.0
      %v3358 = vand.u32 %v1687, 4294901760
      %3359 = vmatmul.mubr.f32.gmra.mrb[0].mxu0 %v3358
      %v3360 = vpop.f32.mrb[0].mxu0
      %v3361 = vadd.f32 %v3058, %v3360
      %v3362 = vpop.f32.mrb[0].mxu0
      %3363 = vmatprep.mubr.f32.mxu0 0.0
      %v3364 = vand.u32 %v1690, 4294901760
      %3365 = vmatmul.mubr.f32.gmra.mrb[0].mxu0 %v3364
      %v3366 = vpop.f32.mrb[0].mxu0
      %v3367 = vadd.f32 %v3066, %v3366
      %v3368 = vpop.f32.mrb[0].mxu0
      %3369 = vmatprep.mubr.f32.mxu0 0.0
      %v3370 = vand.u32 %v1693, 4294901760
      %3371 = vmatmul.mubr.f32.gmra.mrb[0].mxu0 %v3370
      %v3372 = vpop.f32.mrb[0].mxu0
      %v3373 = vadd.f32 %v3074, %v3372
      %v3374 = vpop.f32.mrb[0].mxu0
      %3375 = vdwg.mxu0
      %3376 = vmatprep.subr.mxu0 0.0
      %v3377 = vand.u32 %v1577, 4294901760
      %3378 = vmatpush1.msra.mxu0 %v3377
      %3379 = vmatprep.subr.mxu0 0.0
      %v3380 = vand.u32 %v1578, 4294901760
      %3381 = vmatpush1.msra.mxu0 %v3380
      %3382 = vmatprep.subr.mxu0 0.0
      %v3383 = vand.u32 %v1579, 4294901760
      %3384 = vmatpush1.msra.mxu0 %v3383
      %3385 = vmatprep.subr.mxu0 0.0
      %v3386 = vand.u32 %v1580, 4294901760
      %3387 = vmatpush1.msra.mxu0 %v3386
      %3388 = vmatprep.subr.mxu0 0.0
      %v3389 = vand.u32 %v1581, 4294901760
      %3390 = vmatpush1.msra.mxu0 %v3389
      %3391 = vmatprep.subr.mxu0 0.0
      %v3392 = vand.u32 %v1582, 4294901760
      %3393 = vmatpush1.msra.mxu0 %v3392
      %3394 = vmatprep.subr.mxu0 0.0
      %v3395 = vand.u32 %v1583, 4294901760
      %3396 = vmatpush1.msra.mxu0 %v3395
      %3397 = vmatprep.subr.mxu0 0.0
      %v3398 = vand.u32 %v1584, 4294901760
      %3399 = vmatpush1.msra.mxu0 %v3398
      %3400 = vmatprep.subr.mxu0 0.0
      %v3401 = vand.u32 %v1585, 4294901760
      %3402 = vmatpush1.msra.mxu0 %v3401
      %3403 = vmatprep.subr.mxu0 0.0
      %v3404 = vand.u32 %v1586, 4294901760
      %3405 = vmatpush1.msra.mxu0 %v3404
      %3406 = vmatprep.subr.mxu0 0.0
      %v3407 = vand.u32 %v1587, 4294901760
      %3408 = vmatpush1.msra.mxu0 %v3407
      %3409 = vmatprep.subr.mxu0 0.0
      %v3410 = vand.u32 %v1588, 4294901760
      %3411 = vmatpush1.msra.mxu0 %v3410
      %3412 = vmatprep.subr.mxu0 0.0
      %v3413 = vand.u32 %v1589, 4294901760
      %3414 = vmatpush1.msra.mxu0 %v3413
      %3415 = vmatprep.subr.mxu0 0.0
      %v3416 = vand.u32 %v1697, 4294901760
      %3417 = vmatpush1.msra.mxu0 %v3416
      %3418 = vmatprep.subr.mxu0 0.0
      %3419 = vmatpush1.msra.mxu0 0.0
      %3420 = vmatprep.subr.mxu0 0.0
      %3421 = vmatpush1.msra.mxu0 0.0
      %3422 = vmatprep.subr.mxu0 0.0
      %3423 = vmatpush1.msra.mxu0 0.0
      %3424 = vmatprep.subr.mxu0 0.0
      %3425 = vmatpush1.msra.mxu0 0.0
      %3426 = vmatprep.subr.mxu0 0.0
      %3427 = vmatpush1.msra.mxu0 0.0
      %3428 = vmatprep.subr.mxu0 0.0
      %3429 = vmatpush1.msra.mxu0 0.0
      %3430 = vmatprep.subr.mxu0 0.0
      %3431 = vmatpush1.msra.mxu0 0.0
      %3432 = vmatprep.subr.mxu0 0.0
      %3433 = vmatpush1.msra.mxu0 0.0
      %3434 = vmatprep.subr.mxu0 0.0
      %3435 = vmatpush1.msra.mxu0 0.0
      %3436 = vmatprep.subr.mxu0 0.0
      %3437 = vmatpush1.msra.mxu0 0.0
      %3438 = vmatprep.subr.mxu0 0.0
      %3439 = vmatpush1.msra.mxu0 0.0
      %3440 = vmatprep.subr.mxu0 0.0
      %3441 = vmatpush1.msra.mxu0 0.0
      %3442 = vmatprep.subr.mxu0 0.0
      %3443 = vmatpush1.msra.mxu0 0.0
      %3444 = vmatprep.subr.mxu0 0.0
      %3445 = vmatpush1.msra.mxu0 0.0
      %3446 = vmatprep.subr.mxu0 0.0
      %3447 = vmatpush1.msra.mxu0 0.0
      %3448 = vmatprep.subr.mxu0 0.0
      %3449 = vmatpush1.msra.mxu0 0.0
      %3450 = vmatprep.subr.mxu0 0.0
      %3451 = vmatpush1.msra.mxu0 0.0
      %3452 = vmatprep.subr.mxu0 0.0
      %3453 = vmatpush1.msra.mxu0 0.0
      %3454 = vmatprep.mubr.f32.mxu0 0.0
      %v3455 = vand.u32 %v1600, 4294901760
      %3456 = vmatmul.mubr.f32.gmra.mrb[0].mxu0 %v3455
      %v3457 = vpop.f32.mrb[0].mxu0
      %v3458 = vadd.f32 %v3187, %v3457
      %v3459 = vpop.f32.mrb[0].mxu0
      %3460 = vmatprep.mubr.f32.mxu0 0.0
      %v3461 = vand.u32 %v1603, 4294901760
      %3462 = vmatmul.mubr.f32.gmra.mrb[0].mxu0 %v3461
      %v3463 = vpop.f32.mrb[0].mxu0
      %v3464 = vadd.f32 %v3193, %v3463
      %v3465 = vpop.f32.mrb[0].mxu0
      %3466 = vmatprep.mubr.f32.mxu0 0.0
      %v3467 = vand.u32 %v1606, 4294901760
      %3468 = vmatmul.mubr.f32.gmra.mrb[0].mxu0 %v3467
      %v3469 = vpop.f32.mrb[0].mxu0
      %v3470 = vadd.f32 %v3199, %v3469
      %v3471 = vpop.f32.mrb[0].mxu0
      %3472 = vmatprep.mubr.f32.mxu0 0.0
      %v3473 = vand.u32 %v1609, 4294901760
      %3474 = vmatmul.mubr.f32.gmra.mrb[0].mxu0 %v3473
      %v3475 = vpop.f32.mrb[0].mxu0
      %v3476 = vadd.f32 %v3205, %v3475
      %v3477 = vpop.f32.mrb[0].mxu0
      %3478 = vmatprep.mubr.f32.mxu0 0.0
      %v3479 = vand.u32 %v1612, 4294901760
      %3480 = vmatmul.mubr.f32.gmra.mrb[0].mxu0 %v3479
      %v3481 = vpop.f32.mrb[0].mxu0
      %v3482 = vadd.f32 %v3211, %v3481
      %v3483 = vpop.f32.mrb[0].mxu0
      %3484 = vmatprep.mubr.f32.mxu0 0.0
      %v3485 = vand.u32 %v1615, 4294901760
      %3486 = vmatmul.mubr.f32.gmra.mrb[0].mxu0 %v3485
      %v3487 = vpop.f32.mrb[0].mxu0
      %v3488 = vadd.f32 %v3217, %v3487
      %v3489 = vpop.f32.mrb[0].mxu0
      %3490 = vmatprep.mubr.f32.mxu0 0.0
      %v3491 = vand.u32 %v1618, 4294901760
      %3492 = vmatmul.mubr.f32.gmra.mrb[0].mxu0 %v3491
      %v3493 = vpop.f32.mrb[0].mxu0
      %v3494 = vadd.f32 %v3223, %v3493
      %v3495 = vpop.f32.mrb[0].mxu0
      %3496 = vmatprep.mubr.f32.mxu0 0.0
      %v3497 = vand.u32 %v1621, 4294901760
      %3498 = vmatmul.mubr.f32.gmra.mrb[0].mxu0 %v3497
      %v3499 = vpop.f32.mrb[0].mxu0
      %v3500 = vadd.f32 %v3229, %v3499
      %v3501 = vpop.f32.mrb[0].mxu0
      %3502 = vmatprep.mubr.f32.mxu0 0.0
      %v3503 = vand.u32 %v1624, 4294901760
      %3504 = vmatmul.mubr.f32.gmra.mrb[0].mxu0 %v3503
      %v3505 = vpop.f32.mrb[0].mxu0
      %v3506 = vadd.f32 %v3235, %v3505
      %v3507 = vpop.f32.mrb[0].mxu0
      %3508 = vmatprep.mubr.f32.mxu0 0.0
      %v3509 = vand.u32 %v1627, 4294901760
      %3510 = vmatmul.mubr.f32.gmra.mrb[0].mxu0 %v3509
      %v3511 = vpop.f32.mrb[0].mxu0
      %v3512 = vadd.f32 %v3241, %v3511
      %v3513 = vpop.f32.mrb[0].mxu0
      %3514 = vmatprep.mubr.f32.mxu0 0.0
      %v3515 = vand.u32 %v1630, 4294901760
      %3516 = vmatmul.mubr.f32.gmra.mrb[0].mxu0 %v3515
      %v3517 = vpop.f32.mrb[0].mxu0
      %v3518 = vadd.f32 %v3247, %v3517
      %v3519 = vpop.f32.mrb[0].mxu0
      %3520 = vmatprep.mubr.f32.mxu0 0.0
      %v3521 = vand.u32 %v1633, 4294901760
      %3522 = vmatmul.mubr.f32.gmra.mrb[0].mxu0 %v3521
      %v3523 = vpop.f32.mrb[0].mxu0
      %v3524 = vadd.f32 %v3253, %v3523
      %v3525 = vpop.f32.mrb[0].mxu0
      %3526 = vmatprep.mubr.f32.mxu0 0.0
      %v3527 = vand.u32 %v1636, 4294901760
      %3528 = vmatmul.mubr.f32.gmra.mrb[0].mxu0 %v3527
      %v3529 = vpop.f32.mrb[0].mxu0
      %v3530 = vadd.f32 %v3259, %v3529
      %v3531 = vpop.f32.mrb[0].mxu0
      %3532 = vmatprep.mubr.f32.mxu0 0.0
      %v3533 = vand.u32 %v1639, 4294901760
      %3534 = vmatmul.mubr.f32.gmra.mrb[0].mxu0 %v3533
      %v3535 = vpop.f32.mrb[0].mxu0
      %v3536 = vadd.f32 %v3265, %v3535
      %v3537 = vpop.f32.mrb[0].mxu0
      %3538 = vmatprep.mubr.f32.mxu0 0.0
      %v3539 = vand.u32 %v1642, 4294901760
      %3540 = vmatmul.mubr.f32.gmra.mrb[0].mxu0 %v3539
      %v3541 = vpop.f32.mrb[0].mxu0
      %v3542 = vadd.f32 %v3271, %v3541
      %v3543 = vpop.f32.mrb[0].mxu0
      %3544 = vmatprep.mubr.f32.mxu0 0.0
      %v3545 = vand.u32 %v1645, 4294901760
      %3546 = vmatmul.mubr.f32.gmra.mrb[0].mxu0 %v3545
      %v3547 = vpop.f32.mrb[0].mxu0
      %v3548 = vadd.f32 %v3277, %v3547
      %v3549 = vpop.f32.mrb[0].mxu0
      %3550 = vmatprep.mubr.f32.mxu0 0.0
      %v3551 = vand.u32 %v1648, 4294901760
      %3552 = vmatmul.mubr.f32.gmra.mrb[0].mxu0 %v3551
      %v3553 = vpop.f32.mrb[0].mxu0
      %v3554 = vadd.f32 %v3283, %v3553
      %v3555 = vpop.f32.mrb[0].mxu0
      %3556 = vmatprep.mubr.f32.mxu0 0.0
      %v3557 = vand.u32 %v1651, 4294901760
      %3558 = vmatmul.mubr.f32.gmra.mrb[0].mxu0 %v3557
      %v3559 = vpop.f32.mrb[0].mxu0
      %v3560 = vadd.f32 %v3289, %v3559
      %v3561 = vpop.f32.mrb[0].mxu0
      %3562 = vmatprep.mubr.f32.mxu0 0.0
      %v3563 = vand.u32 %v1654, 4294901760
      %3564 = vmatmul.mubr.f32.gmra.mrb[0].mxu0 %v3563
      %v3565 = vpop.f32.mrb[0].mxu0
      %v3566 = vadd.f32 %v3295, %v3565
      %v3567 = vpop.f32.mrb[0].mxu0
      %3568 = vmatprep.mubr.f32.mxu0 0.0
      %v3569 = vand.u32 %v1657, 4294901760
      %3570 = vmatmul.mubr.f32.gmra.mrb[0].mxu0 %v3569
      %v3571 = vpop.f32.mrb[0].mxu0
      %v3572 = vadd.f32 %v3301, %v3571
      %v3573 = vpop.f32.mrb[0].mxu0
      %3574 = vmatprep.mubr.f32.mxu0 0.0
      %v3575 = vand.u32 %v1660, 4294901760
      %3576 = vmatmul.mubr.f32.gmra.mrb[0].mxu0 %v3575
      %v3577 = vpop.f32.mrb[0].mxu0
      %v3578 = vadd.f32 %v3307, %v3577
      %v3579 = vpop.f32.mrb[0].mxu0
      %3580 = vmatprep.mubr.f32.mxu0 0.0
      %v3581 = vand.u32 %v1663, 4294901760
      %3582 = vmatmul.mubr.f32.gmra.mrb[0].mxu0 %v3581
      %v3583 = vpop.f32.mrb[0].mxu0
      %v3584 = vadd.f32 %v3313, %v3583
      %v3585 = vpop.f32.mrb[0].mxu0
      %3586 = vmatprep.mubr.f32.mxu0 0.0
      %v3587 = vand.u32 %v1666, 4294901760
      %3588 = vmatmul.mubr.f32.gmra.mrb[0].mxu0 %v3587
      %v3589 = vpop.f32.mrb[0].mxu0
      %v3590 = vadd.f32 %v3319, %v3589
      %v3591 = vpop.f32.mrb[0].mxu0
      %3592 = vmatprep.mubr.f32.mxu0 0.0
      %v3593 = vand.u32 %v1669, 4294901760
      %3594 = vmatmul.mubr.f32.gmra.mrb[0].mxu0 %v3593
      %v3595 = vpop.f32.mrb[0].mxu0
      %v3596 = vadd.f32 %v3325, %v3595
      %v3597 = vpop.f32.mrb[0].mxu0
      %3598 = vmatprep.mubr.f32.mxu0 0.0
      %v3599 = vand.u32 %v1672, 4294901760
      %3600 = vmatmul.mubr.f32.gmra.mrb[0].mxu0 %v3599
      %v3601 = vpop.f32.mrb[0].mxu0
      %v3602 = vadd.f32 %v3331, %v3601
      %v3603 = vpop.f32.mrb[0].mxu0
      %3604 = vmatprep.mubr.f32.mxu0 0.0
      %v3605 = vand.u32 %v1675, 4294901760
      %3606 = vmatmul.mubr.f32.gmra.mrb[0].mxu0 %v3605
      %v3607 = vpop.f32.mrb[0].mxu0
      %v3608 = vadd.f32 %v3337, %v3607
      %v3609 = vpop.f32.mrb[0].mxu0
      %3610 = vmatprep.mubr.f32.mxu0 0.0
      %v3611 = vand.u32 %v1678, 4294901760
      %3612 = vmatmul.mubr.f32.gmra.mrb[0].mxu0 %v3611
      %v3613 = vpop.f32.mrb[0].mxu0
      %v3614 = vadd.f32 %v3343, %v3613
      %v3615 = vpop.f32.mrb[0].mxu0
      %3616 = vmatprep.mubr.f32.mxu0 0.0
      %v3617 = vand.u32 %v1681, 4294901760
      %3618 = vmatmul.mubr.f32.gmra.mrb[0].mxu0 %v3617
      %v3619 = vpop.f32.mrb[0].mxu0
      %v3620 = vadd.f32 %v3349, %v3619
      %v3621 = vpop.f32.mrb[0].mxu0
      %3622 = vmatprep.mubr.f32.mxu0 0.0
      %v3623 = vand.u32 %v1684, 4294901760
      %3624 = vmatmul.mubr.f32.gmra.mrb[0].mxu0 %v3623
      %v3625 = vpop.f32.mrb[0].mxu0
      %v3626 = vadd.f32 %v3355, %v3625
      %v3627 = vpop.f32.mrb[0].mxu0
      %3628 = vmatprep.mubr.f32.mxu0 0.0
      %v3629 = vand.u32 %v1687, 4294901760
      %3630 = vmatmul.mubr.f32.gmra.mrb[0].mxu0 %v3629
      %v3631 = vpop.f32.mrb[0].mxu0
      %v3632 = vadd.f32 %v3361, %v3631
      %v3633 = vpop.f32.mrb[0].mxu0
      %3634 = vmatprep.mubr.f32.mxu0 0.0
      %v3635 = vand.u32 %v1690, 4294901760
      %3636 = vmatmul.mubr.f32.gmra.mrb[0].mxu0 %v3635
      %v3637 = vpop.f32.mrb[0].mxu0
      %v3638 = vadd.f32 %v3367, %v3637
      %v3639 = vpop.f32.mrb[0].mxu0
      %3640 = vmatprep.mubr.f32.mxu0 0.0
      %v3641 = vand.u32 %v1693, 4294901760
      %3642 = vmatmul.mubr.f32.gmra.mrb[0].mxu0 %v3641
      %v3643 = vpop.f32.mrb[0].mxu0
      %v3644 = vadd.f32 %v3373, %v3643
      %v3645 = vpop.f32.mrb[0].mxu0
      %3646 = vdwg.mxu0
      %vm3647 = vcmp.ge.f32.partialorder %v3458, 0.0
      %vm3648 = vcmp.ge.f32.partialorder %v3464, 0.0
      %vm3649 = vcmp.ge.f32.partialorder %v3470, 0.0
      %vm3650 = vcmp.ge.f32.partialorder %v3476, 0.0
      %vm3651 = vcmp.ge.f32.partialorder %v3482, 0.0
      %vm3652 = vcmp.ge.f32.partialorder %v3488, 0.0
      %vm3653 = vcmp.ge.f32.partialorder %v3494, 0.0
      %vm3654 = vcmp.ge.f32.partialorder %v3500, 0.0
      %vm3655 = vcmp.ge.f32.partialorder %v3506, 0.0
      %vm3656 = vcmp.ge.f32.partialorder %v3512, 0.0
      %vm3657 = vcmp.ge.f32.partialorder %v3518, 0.0
      %vm3658 = vcmp.ge.f32.partialorder %v3524, 0.0
      %vm3659 = vcmp.ge.f32.partialorder %v3530, 0.0
      %vm3660 = vcmp.ge.f32.partialorder %v3536, 0.0
      %vm3661 = vcmp.ge.f32.partialorder %v3542, 0.0
      %vm3662 = vcmp.ge.f32.partialorder %v3548, 0.0
      %vm3663 = vcmp.ge.f32.partialorder %v3554, 0.0
      %vm3664 = vcmp.ge.f32.partialorder %v3560, 0.0
      %vm3665 = vcmp.ge.f32.partialorder %v3566, 0.0
      %vm3666 = vcmp.ge.f32.partialorder %v3572, 0.0
      %vm3667 = vcmp.ge.f32.partialorder %v3578, 0.0
      %vm3668 = vcmp.ge.f32.partialorder %v3584, 0.0
      %vm3669 = vcmp.ge.f32.partialorder %v3590, 0.0
      %vm3670 = vcmp.ge.f32.partialorder %v3596, 0.0
      %vm3671 = vcmp.ge.f32.partialorder %v3602, 0.0
      %vm3672 = vcmp.ge.f32.partialorder %v3608, 0.0
      %vm3673 = vcmp.ge.f32.partialorder %v3614, 0.0
      %vm3674 = vcmp.ge.f32.partialorder %v3620, 0.0
      %vm3675 = vcmp.ge.f32.partialorder %v3626, 0.0
      %vm3676 = vcmp.ge.f32.partialorder %v3632, 0.0
      %vm3677 = vcmp.ge.f32.partialorder %v3638, 0.0
      %vm3678 = vcmp.ge.f32.partialorder %v3644, 0.0
      %v3679 = vmul.f32 %v3458, 0.1
      %v3680 = vmul.f32 %v3464, 0.1
      %v3681 = vmul.f32 %v3470, 0.1
      %v3682 = vmul.f32 %v3476, 0.1
      %v3683 = vmul.f32 %v3482, 0.1
      %v3684 = vmul.f32 %v3488, 0.1
      %v3685 = vmul.f32 %v3494, 0.1
      %v3686 = vmul.f32 %v3500, 0.1
      %v3687 = vmul.f32 %v3506, 0.1
      %v3688 = vmul.f32 %v3512, 0.1
      %v3689 = vmul.f32 %v3518, 0.1
      %v3690 = vmul.f32 %v3524, 0.1
      %v3691 = vmul.f32 %v3530, 0.1
      %v3692 = vmul.f32 %v3536, 0.1
      %v3693 = vmul.f32 %v3542, 0.1
      %v3694 = vmul.f32 %v3548, 0.1
      %v3695 = vmul.f32 %v3554, 0.1
      %v3696 = vmul.f32 %v3560, 0.1
      %v3697 = vmul.f32 %v3566, 0.1
      %v3698 = vmul.f32 %v3572, 0.1
      %v3699 = vmul.f32 %v3578, 0.1
      %v3700 = vmul.f32 %v3584, 0.1
      %v3701 = vmul.f32 %v3590, 0.1
      %v3702 = vmul.f32 %v3596, 0.1
      %v3703 = vmul.f32 %v3602, 0.1
      %v3704 = vmul.f32 %v3608, 0.1
      %v3705 = vmul.f32 %v3614, 0.1
      %v3706 = vmul.f32 %v3620, 0.1
      %v3707 = vmul.f32 %v3626, 0.1
      %v3708 = vmul.f32 %v3632, 0.1
      %v3709 = vmul.f32 %v3638, 0.1
      %v3710 = vmul.f32 %v3644, 0.1
      %v3711 = vsel %vm3647, %v3458, %v3679
      %v3712 = vsel %vm3648, %v3464, %v3680
      %v3713 = vsel %vm3649, %v3470, %v3681
      %v3714 = vsel %vm3650, %v3476, %v3682
      %v3715 = vsel %vm3651, %v3482, %v3683
      %v3716 = vsel %vm3652, %v3488, %v3684
      %v3717 = vsel %vm3653, %v3494, %v3685
      %v3718 = vsel %vm3654, %v3500, %v3686
      %v3719 = vsel %vm3655, %v3506, %v3687
      %v3720 = vsel %vm3656, %v3512, %v3688
      %v3721 = vsel %vm3657, %v3518, %v3689
      %v3722 = vsel %vm3658, %v3524, %v3690
      %v3723 = vsel %vm3659, %v3530, %v3691
      %v3724 = vsel %vm3660, %v3536, %v3692
      %v3725 = vsel %vm3661, %v3542, %v3693
      %v3726 = vsel %vm3662, %v3548, %v3694
      %v3727 = vsel %vm3663, %v3554, %v3695
      %v3728 = vsel %vm3664, %v3560, %v3696
      %v3729 = vsel %vm3665, %v3566, %v3697
      %v3730 = vsel %vm3666, %v3572, %v3698
      %v3731 = vsel %vm3667, %v3578, %v3699
      %v3732 = vsel %vm3668, %v3584, %v3700
      %v3733 = vsel %vm3669, %v3590, %v3701
      %v3734 = vsel %vm3670, %v3596, %v3702
      %v3735 = vsel %vm3671, %v3602, %v3703
      %v3736 = vsel %vm3672, %v3608, %v3704
      %v3737 = vsel %vm3673, %v3614, %v3705
      %v3738 = vsel %vm3674, %v3620, %v3706
      %v3739 = vsel %vm3675, %v3626, %v3707
      %v3740 = vsel %vm3676, %v3632, %v3708
      %v3741 = vsel %vm3677, %v3638, %v3709
      %v3742 = vsel %vm3678, %v3644, %v3710
      %vm3743 = vcmask 64512
      %3744 = vst.msk [vmem:[%s170] sm:$0xff] %vm3743, %v3711
      %3745 = vst.msk [vmem:[%s170 + $0x8] sm:$0xff] %vm3743, %v3712
      %3746 = vst.msk [vmem:[%s170 + $0x10] sm:$0xff] %vm3743, %v3713
      %3747 = vst.msk [vmem:[%s170 + $0x18] sm:$0xff] %vm3743, %v3714
      %3748 = vst.msk [vmem:[%s170 + $0x20] sm:$0xff] %vm3743, %v3715
      %3749 = vst.msk [vmem:[%s170 + $0x28] sm:$0xff] %vm3743, %v3716
      %3750 = vst.msk [vmem:[%s170 + $0x30] sm:$0xff] %vm3743, %v3717
      %3751 = vst.msk [vmem:[%s170 + $0x38] sm:$0xff] %vm3743, %v3718
      %3752 = vst.msk [vmem:[%s170 + $0x40] sm:$0xff] %vm3743, %v3719
      %3753 = vst.msk [vmem:[%s170 + $0x48] sm:$0xff] %vm3743, %v3720
      %3754 = vst.msk [vmem:[%s170 + $0x50] sm:$0xff] %vm3743, %v3721
      %3755 = vst.msk [vmem:[%s170 + $0x58] sm:$0xff] %vm3743, %v3722
      %3756 = vst.msk [vmem:[%s170 + $0x60] sm:$0xff] %vm3743, %v3723
      %3757 = vst.msk [vmem:[%s170 + $0x68] sm:$0xff] %vm3743, %v3724
      %3758 = vst.msk [vmem:[%s170 + $0x70] sm:$0xff] %vm3743, %v3725
      %3759 = vst.msk [vmem:[%s170 + $0x78] sm:$0xff] %vm3743, %v3726
      %3760 = vst.msk [vmem:[%s170 + $0x80] sm:$0xff] %vm3743, %v3727
      %3761 = vst.msk [vmem:[%s170 + $0x88] sm:$0xff] %vm3743, %v3728
      %3762 = vst.msk [vmem:[%s170 + $0x90] sm:$0xff] %vm3743, %v3729
      %3763 = vst.msk [vmem:[%s170 + $0x98] sm:$0xff] %vm3743, %v3730
      %3764 = vst.msk [vmem:[%s170 + $0xa0] sm:$0xff] %vm3743, %v3731
      %3765 = vst.msk [vmem:[%s170 + $0xa8] sm:$0xff] %vm3743, %v3732
      %3766 = vst.msk [vmem:[%s170 + $0xb0] sm:$0xff] %vm3743, %v3733
      %3767 = vst.msk [vmem:[%s170 + $0xb8] sm:$0xff] %vm3743, %v3734
      %3768 = vst.msk [vmem:[%s170 + $0xc0] sm:$0xff] %vm3743, %v3735
      %3769 = vst.msk [vmem:[%s170 + $0xc8] sm:$0xff] %vm3743, %v3736
      %3770 = vst.msk [vmem:[%s170 + $0xd0] sm:$0xff] %vm3743, %v3737
      %3771 = vst.msk [vmem:[%s170 + $0xd8] sm:$0xff] %vm3743, %v3738
      %3772 = vst.msk [vmem:[%s170 + $0xe0] sm:$0xff] %vm3743, %v3739
      %3773 = vst.msk [vmem:[%s170 + $0xe8] sm:$0xff] %vm3743, %v3740
      %3774 = vst.msk [vmem:[%s170 + $0xf0] sm:$0xff] %vm3743, %v3741
      %3775 = vst.msk [vmem:[%s170 + $0xf8] sm:$0xff] %vm3743, %v3742
      %p3776 = scmp.lt.s32.totalorder %s14, 1
      %s3777 = scalar_select %p3776, %s14, 1
      %s3778 = smul.addr %s3777, 32
      %s3779 = smul.addr %s3778, 8
      %s3780 = scalar_lea.vmem %s3, %s3779
      // Predicated region
      $region33: #{tpu_custom_call.1} parent=31 // pred_check
        %p3781 = pneg %p100
      $region34: #{tpu_custom_call.1} parent=31 // pred_check_branch
        %3783 = sbr.rel (%p3781) target = $region36
      $region35: #{tpu_custom_call.1} parent=31 // pred_region
        _
      $region36: #{tpu_custom_call.1} parent=31 // pred_fallthru
        _
    $region32: #{tpu_custom_call.1} parent=5 // pred_fallthru
      _
    %p3784 = scmp.le.s32.totalorder 2, %s9
    // Predicated region
    $region37: #{tpu_custom_call.1} parent=5 // pred_check
      %p3785 = pneg %p3784
    $region38: #{tpu_custom_call.1} parent=5 // pred_check_branch
      %3787 = sbr.rel (%p3785) target = $region40
    $region39: #{tpu_custom_call.1} parent=5 // pred_region
      %s3788 = ssub.s32 %s9, 2
      // Predicated region
      $region41: #{tpu_custom_call.1} parent=39 // pred_check
        %p3789 = pneg %p106
      $region42: #{tpu_custom_call.1} parent=39 // pred_check_branch
        %3791 = sbr.rel (%p3789) target = $region44
      $region43: #{tpu_custom_call.1} parent=39 // pred_region
        %p3792 = scmp.lt.s32.totalorder %s15, 1
        %s3793 = scalar_select %p3792, %s15, 1
        %s3794 = smul.addr %s3793, 32
        %s3795 = smul.addr %s3794, 8
        %s3796 = scalar_lea.vmem %s3, %s3795
      $region44: #{tpu_custom_call.1} parent=39 // pred_fallthru
        _
    $region40: #{tpu_custom_call.1} parent=5 // pred_fallthru
      _
  $region6: #{tpu_custom_call.1} parent=0 // loop_footer
    %s13 = sadd.s32 1, %s9
  $region7: #{tpu_custom_call.1} parent=0 // loop_footer_branch
    %8 = sbr.rel target = $region3
  $region8: #{tpu_custom_call.1} parent=0 // loop_exit
    _

</llo_original>
